<compile_context>
chip_gen: v7x
topology: tpu7x:2x2x1
jax: 0.10.0
libtpu: 0.0.40
codegen_flags: <defaults>
</compile_context>

<pallas_src>
import jax
import jax.numpy as jnp
from jax.experimental import pallas as pl
from jax.experimental.pallas import tpu as pltpu

_LANES = 128
# Target bytes per operand block, per TPU generation (bounded by scoped VMEM:
# 3 arrays x 2 pipeline buffers x block must fit).
_BLOCK_BYTES = {7: 4 << 20, 6: 4 << 20, 5: 2 << 20}


def _add_relu_kernel(a_ref, b_ref, o_ref):
    # Elementwise add + relu in the native input dtype (VPU work only).
    o_ref[...] = jnp.maximum(a_ref[...] + b_ref[...], 0).astype(o_ref.dtype)


def _round_up(x, m):
    return ((x + m - 1) // m) * m


def _min_sublanes(dtype):
    bits = jnp.dtype(dtype).itemsize * 8
    return 8 * max(1, 32 // bits)  # 8 (f32), 16 (bf16/f16), 32 (int8/fp8)


def _tpu_generation():
    try:
        kind = jax.devices()[0].device_kind.lower()
    except Exception:
        return 0
    for g in (7, 6, 5, 4):
        if f"v{g}" in kind:
            return g
    return 0


def _lane_view_shape(shape, n):
    """Pick a free-reshape 2-D lane-dense view (rows, cols) of a contiguous array."""
    if n % _LANES == 0:
        # Widest lane slab that divides numel (128 always works here).
        for cols in (2048, 1024, 512, 256, 128):
            if n % cols == 0:
                return n // cols, cols
    # numel % 128 != 0: collapse trailing contiguous dims until >= 128 lanes
    # (or we run out of dims).  Legal via BlockSpec's "block last dim equals
    # full array dim" exemption -> zero padding, zero extra HBM passes.
    cols = 1
    i = len(shape)
    while i > 0 and cols < _LANES:
        i -= 1
        cols *= shape[i]
    cols = max(cols, 1)
    return max(1, n // cols), cols


def add_relu(a, b):
    """relu(a + b) for contiguous arrays of any shape via a Pallas TPU kernel."""
    assert a.shape == b.shape and a.dtype == b.dtype
    orig_shape = a.shape
    n = a.size
    itemsize = jnp.dtype(a.dtype).itemsize
    min_sub = _min_sublanes(a.dtype)
    gen = _tpu_generation()

    rows, cols = _lane_view_shape(orig_shape, n)
    a2 = a.reshape(rows, cols)
    b2 = b.reshape(rows, cols)

    # Block sizing: biggest block (~2-4 MiB per operand, generation-dependent)
    # that fits scoped VMEM with 3 arrays x 2 pipeline buffers.
    cols_padded = _round_up(cols, _LANES)  # VMEM lane padding of the block
    target = _BLOCK_BYTES.get(gen, 2 << 20)
    rb = max(min_sub, (target // (cols_padded * itemsize)) // min_sub * min_sub)
    rb = min(rb, _round_up(rows, min_sub))
    num_blocks = pl.cdiv(rows, rb)

    vmem_need = 6 * rb * cols_padded * itemsize  # 3 arrays x 2 buffers
    vmem_limit = vmem_need + (4 << 20) if vmem_need > (14 << 20) else None

    if gen >= 7 and num_blocks >= 2:
        # Only v7x-class chips have 2 TensorCores; CORE_PARALLEL actually
        # shards grid steps across them (plain "parallel" is a measured no-op).
        dim_sem = (pltpu.CORE_PARALLEL,)
    else:
        dim_sem = ("parallel",)

    out2 = pl.pallas_call(
        _add_relu_kernel,
        out_shape=jax.ShapeDtypeStruct((rows, cols), a.dtype),
        grid=(num_blocks,),
        in_specs=[
            pl.BlockSpec((rb, cols), lambda i: (i, 0)),
            pl.BlockSpec((rb, cols), lambda i: (i, 0)),
        ],
        out_specs=pl.BlockSpec((rb, cols), lambda i: (i, 0)),
        compiler_params=pltpu.CompilerParams(
            dimension_semantics=dim_sem,
            vmem_limit_bytes=vmem_limit,
        ),
        cost_estimate=pl.CostEstimate(
            flops=2 * n, transcendentals=0, bytes_accessed=3 * n * itemsize),
    )(a2, b2)

    return out2.reshape(orig_shape)


if __name__ == "__main__":
    key = jax.random.PRNGKey(0)
    k1, k2, k3, k4 = jax.random.split(key, 4)

    # The module's actual activation shape (1, 2904, 14, 14) (~2.2 MiB/operand).
    # numel % 128 != 0, so this exercises the pad-free (N*C, H*W) = (2904, 196)
    # full-trailing-dim lane view (single pallas_call, no extra HBM passes).
    shape = (1, 2904, 14, 14)
    x169 = jax.random.normal(k1, shape, dtype=jnp.float32)
    x183 = jax.random.normal(k2, shape, dtype=jnp.float32)
    out = jax.block_until_ready(add_relu(x169, x183))
    ref = jnp.maximum(x169 + x183, 0.0)
    assert out.shape == shape and out.dtype == jnp.float32
    assert jnp.allclose(out, ref, atol=1e-6, rtol=1e-6)

    # Fast path: numel % 128 == 0 -> wide lane-dense slab view.
    shape2 = (2, 64, 16, 16)  # numel = 32768
    a2 = jax.random.normal(k3, shape2, dtype=jnp.float32)
    b2 = jax.random.normal(k4, shape2, dtype=jnp.float32)
    out2 = jax.block_until_ready(add_relu(a2, b2))
    ref2 = jnp.maximum(a2 + b2, 0.0)
    assert out2.shape == shape2
    assert jnp.allclose(out2, ref2, atol=1e-6, rtol=1e-6)

    print("KERNEL_OK")
</pallas_src>

<mosaic_0001>
module attributes {stable_mosaic.version = 11 : i64} {
  func.func @_add_relu_kernel(%arg0: i32, %arg1: memref<2048x196xf32, #tpu.memory_space<vmem>>, %arg2: memref<2048x196xf32, #tpu.memory_space<vmem>>, %arg3: memref<2048x196xf32, #tpu.memory_space<vmem>>) attributes {dimension_semantics = [#tpu.dimension_semantics<parallel>], iteration_bounds = array<i64: 2>, scalar_prefetch = 0 : i64, scratch_operands = 0 : i64, tpu.core_type = #tpu.core_type<tc>, window_params = [{transform_indices = @transform_0, window_bounds = array<i64: 2048, 196>}, {transform_indices = @transform_1, window_bounds = array<i64: 2048, 196>}, {transform_indices = @transform_2, window_bounds = array<i64: 2048, 196>}]} {
    %c0 = arith.constant 0 : index
    %c0_0 = arith.constant 0 : index
    %0 = vector.load %arg1[%c0, %c0_0] : memref<2048x196xf32, #tpu.memory_space<vmem>>, vector<2048x196xf32>
    %c0_1 = arith.constant 0 : index
    %c0_2 = arith.constant 0 : index
    %1 = vector.load %arg2[%c0_1, %c0_2] : memref<2048x196xf32, #tpu.memory_space<vmem>>, vector<2048x196xf32>
    %2 = arith.addf %0, %1 : vector<2048x196xf32>
    %cst = arith.constant 0.000000e+00 : f32
    %3 = vector.broadcast %cst : f32 to vector<2048x196xf32>
    %4 = arith.maximumf %2, %3 : vector<2048x196xf32>
    %c0_3 = arith.constant 0 : index
    %c0_4 = arith.constant 0 : index
    %5 = vector.load %arg3[%c0_3, %c0_4] : memref<2048x196xf32, #tpu.memory_space<vmem>>, vector<2048x196xf32>
    tpu.vector_store %arg3[%c0_3, %c0_4], %4 {strides = array<i32>} : memref<2048x196xf32, #tpu.memory_space<vmem>>, vector<2048x196xf32>,
    return
  }
  func.func @transform_0(%arg0: i32) -> (i32, i32) {
    %c0_i32 = arith.constant 0 : i32
    %c0_i32_0 = arith.constant 0 : i32
    return %arg0, %c0_i32 : i32, i32
  }
  func.func @transform_1(%arg0: i32) -> (i32, i32) {
    %c0_i32 = arith.constant 0 : i32
    %c0_i32_0 = arith.constant 0 : i32
    return %arg0, %c0_i32 : i32, i32
  }
  func.func @transform_2(%arg0: i32) -> (i32, i32) {
    %c0_i32 = arith.constant 0 : i32
    %c0_i32_0 = arith.constant 0 : i32
    return %arg0, %c0_i32 : i32, i32
  }
}

</mosaic_0001>

<llo_original>
// kernel: tpu_custom_call.1
$region0: #{tpu_custom_call.1}
  #allocation0 [shape = 'u32[]', space=smem, size = 0x4, offset = 0x4, fixed_abs, tag = 'smem constant byte address 0x4 - core index']
  #allocation1 [shape = 'u32[144,128]{1,0:T(1,128)}', space=vmem, size = 0x12000, scoped, tag = 'internal scratch']
  %s0 = inlined_call_operand.vmem [shape: f32[2904,196], index: 0, kind: input, shape index: {}]
  %s1 = inlined_call_operand.vmem [shape: f32[2904,196], index: 1, kind: input, shape index: {}]
  %s2 = inlined_call_operand.vmem [shape: f32[2904,196], index: 2, kind: output, shape index: {}]
  %s3 = sld [smem:[#allocation0]]
  $region67: #{tpu_custom_call.1} parent=0
    _
  %s5 = ssub.s32 1, %s3
  %s6 = scalar_select 0, %s5, %s3
  $region1: #{tpu_custom_call.1} parent=0
    #allocation2 [shape = 'u8[4194304]{0}', space=vmem, size = 0x400000, scoped, tag = 'output window, operand 0']
    loop: start=0, step=1, limit=4
    $region2: #{tpu_custom_call.1} parent=1 // loop_pre_header
      _
    $region3: #{tpu_custom_call.1} parent=1 // loop_header
      %s8 = sphi 0, %s12
      %p9 = scmp.ge.s32.totalorder %s8, 4
      %s18 = sphi 0, %s20
      %s21 = sphi 0, %s18
      %s22 = sphi 0, %s21
      %s38 = sphi 0, %s22
      %s44 = sphi 0, %s46
      %s47 = sphi 0, %s44
      %s48 = sphi 0, %s47
      %s64 = sphi 0, %s48
      %s70 = sphi 0, %s72
      %s73 = sphi 0, %s70
      %s74 = sphi 0, %s73
      %s90 = sphi 0, %s74
    $region4: #{tpu_custom_call.1} parent=1 // loop_header_branch
      %11 = sbr.rel (%p9) target = $region8
    $region5: #{tpu_custom_call.1} parent=1 // loop_body
      %s13 = ssub.s32 %s8, 1
      %s14 = ssub.s32 %s8, 2
      %s15 = sadd.s32 %s8, 1
      %s16 = ssub.s32 %s8, %s15
      %p17 = scmp.eq.s32.totalorder %s16, 0
      %s19 = sadd.s32 %s18, 1
      %s20 = scalar_select %p17, %s18, %s19
      %p23 = pneg %p17
      %p24 = scmp.eq.s32.totalorder %s8, 1
      %p25 = por %p23, %p24
      %p26 = scmp.ne.s32.totalorder %s18, %s21
      %p27 = scmp.eq.s32.totalorder %s8, 0
      %p28 = por %p26, %p27
      %p29 = scmp.ne.s32.totalorder %s18, %s21
      %p30 = scmp.eq.s32.totalorder %s13, 1
      %p31 = por %p29, %p30
      %p32 = scmp.ne.s32.totalorder %s21, %s22
      %p33 = scmp.eq.s32.totalorder %s13, 0
      %p34 = por %p32, %p33
      %p35 = scmp.ne.s32.totalorder %s21, %s22
      %p36 = scmp.eq.s32.totalorder %s14, 1
      %p37 = por %p35, %p36
      %p39 = scmp.ne.s32.totalorder %s22, %s38
      %p40 = scmp.eq.s32.totalorder %s14, 0
      %p41 = por %p39, %p40
      %s42 = ssub.s32 %s8, %s15
      %p43 = scmp.eq.s32.totalorder %s42, 0
      %s45 = sadd.s32 %s44, 1
      %s46 = scalar_select %p43, %s44, %s45
      %p49 = pneg %p43
      %p50 = scmp.eq.s32.totalorder %s8, 1
      %p51 = por %p49, %p50
      %p52 = scmp.ne.s32.totalorder %s44, %s47
      %p53 = scmp.eq.s32.totalorder %s8, 0
      %p54 = por %p52, %p53
      %p55 = scmp.ne.s32.totalorder %s44, %s47
      %p56 = scmp.eq.s32.totalorder %s13, 1
      %p57 = por %p55, %p56
      %p58 = scmp.ne.s32.totalorder %s47, %s48
      %p59 = scmp.eq.s32.totalorder %s13, 0
      %p60 = por %p58, %p59
      %p61 = scmp.ne.s32.totalorder %s47, %s48
      %p62 = scmp.eq.s32.totalorder %s14, 1
      %p63 = por %p61, %p62
      %p65 = scmp.ne.s32.totalorder %s48, %s64
      %p66 = scmp.eq.s32.totalorder %s14, 0
      %p67 = por %p65, %p66
      %s68 = ssub.s32 %s8, %s15
      %p69 = scmp.eq.s32.totalorder %s68, 0
      %s71 = sadd.s32 %s70, 1
      %s72 = scalar_select %p69, %s70, %s71
      %p75 = pneg %p69
      %p76 = scmp.eq.s32.totalorder %s8, 1
      %p77 = por %p75, %p76
      %p78 = scmp.ne.s32.totalorder %s70, %s73
      %p79 = scmp.eq.s32.totalorder %s8, 0
      %p80 = por %p78, %p79
      %p81 = scmp.ne.s32.totalorder %s70, %s73
      %p82 = scmp.eq.s32.totalorder %s13, 1
      %p83 = por %p81, %p82
      %p84 = scmp.ne.s32.totalorder %s73, %s74
      %p85 = scmp.eq.s32.totalorder %s13, 0
      %p86 = por %p84, %p85
      %p87 = scmp.ne.s32.totalorder %s73, %s74
      %p88 = scmp.eq.s32.totalorder %s14, 1
      %p89 = por %p87, %p88
      %p91 = scmp.ne.s32.totalorder %s74, %s90
      %p92 = scmp.eq.s32.totalorder %s14, 0
      %p93 = por %p91, %p92
      %p94 = scmp.le.s32.totalorder 1, %s8
      %p95 = scmp.lt.s32.totalorder %s8, 3
      %p96 = pnand %p94, %p95
      %p97 = pneg %p96
      // Predicated region
      $region9: #{tpu_custom_call.1} parent=5 // pred_check
        _
      $region10: #{tpu_custom_call.1} parent=5 // pred_check_branch
        %99 = sbr.rel (%p96) target = $region12
      $region11: #{tpu_custom_call.1} parent=5 // pred_region
        %s100 = ssub.s32 %s8, 1
      $region12: #{tpu_custom_call.1} parent=5 // pred_fallthru
        _
      %p101 = scmp.lt.s32.totalorder %s8, 2
      // Predicated region
      $region13: #{tpu_custom_call.1} parent=5 // pred_check
        %p102 = pneg %p101
      $region14: #{tpu_custom_call.1} parent=5 // pred_check_branch
        %104 = sbr.rel (%p102) target = $region16
      $region15: #{tpu_custom_call.1} parent=5 // pred_region
        // Predicated region
        $region17: #{tpu_custom_call.1} parent=15 // pred_check
          %p105 = pneg %p28
        $region18: #{tpu_custom_call.1} parent=15 // pred_check_branch
          %107 = sbr.rel (%p105) target = $region20
        $region19: #{tpu_custom_call.1} parent=15 // pred_region
          %s108 = smul.u32 256, %s8
          %s109 = ssub.s32 363, %s108
          %p110 = scmp.lt.s32.totalorder %s109, 256
          %s111 = scalar_select %p110, %s109, 256
          %s112 = smul.u32 128, %s111
          %s113 = smul.u32 %s112, 2
          %p114 = scmp.lt.s32.totalorder %s108, 362
          %s115 = scalar_select %p114, %s108, 362
          %s116 = smul.addr %s115, 2
          %s117 = smul.addr %s116, 8
          %s118 = scalar_lea.vmem %s0, %s117
          %s119 = smul.u32 256, %s8
          %s120 = ssub.s32 363, %s119
          %p121 = scmp.lt.s32.totalorder %s120, 256
          %s122 = scalar_select %p121, %s120, 256
          %s123 = smul.u32 128, %s122
          %s124 = smul.u32 %s123, 2
        $region20: #{tpu_custom_call.1} parent=15 // pred_fallthru
          _
        // Predicated region
        $region21: #{tpu_custom_call.1} parent=15 // pred_check
          %p125 = pneg %p54
        $region22: #{tpu_custom_call.1} parent=15 // pred_check_branch
          %127 = sbr.rel (%p125) target = $region24
        $region23: #{tpu_custom_call.1} parent=15 // pred_region
          %s128 = smul.u32 256, %s8
          %s129 = ssub.s32 363, %s128
          %p130 = scmp.lt.s32.totalorder %s129, 256
          %s131 = scalar_select %p130, %s129, 256
          %s132 = smul.u32 128, %s131
          %s133 = smul.u32 %s132, 2
          %p134 = scmp.lt.s32.totalorder %s128, 362
          %s135 = scalar_select %p134, %s128, 362
          %s136 = smul.addr %s135, 2
          %s137 = smul.addr %s136, 8
          %s138 = scalar_lea.vmem %s1, %s137
          %s139 = smul.u32 256, %s8
          %s140 = ssub.s32 363, %s139
          %p141 = scmp.lt.s32.totalorder %s140, 256
          %s142 = scalar_select %p141, %s140, 256
          %s143 = smul.u32 128, %s142
          %s144 = smul.u32 %s143, 2
        $region24: #{tpu_custom_call.1} parent=15 // pred_fallthru
          _
      $region16: #{tpu_custom_call.1} parent=5 // pred_fallthru
        _
      %p145 = scmp.le.s32.totalorder 1, %s8
      %p146 = scmp.lt.s32.totalorder %s8, 3
      %p147 = pnand %p145, %p146
      %p148 = pneg %p147
      // Predicated region
      $region25: #{tpu_custom_call.1} parent=5 // pred_check
        _
      $region26: #{tpu_custom_call.1} parent=5 // pred_check_branch
        %150 = sbr.rel (%p147) target = $region28
      $region27: #{tpu_custom_call.1} parent=5 // pred_region
        %s151 = ssub.s32 %s8, 1
        %s152 = smul.u32 256, %s13
        %s153 = ssub.s32 363, %s152
        %p154 = scmp.lt.s32.totalorder %s153, 256
        %s155 = scalar_select %p154, %s153, 256
        %s156 = smul.u32 128, %s155
        %s157 = smul.u32 %s156, 2
        %p158 = scmp.lt.s32.totalorder %s152, 362
        %s159 = scalar_select %p158, %s152, 362
        %s160 = smul.addr %s159, 2
        %s161 = smul.addr %s160, 8
        %s162 = scalar_lea.vmem %s0, %s161
        %p163 = pneg %p34
        %p164 = pneg %p31
        %s165 = smul.u32 256, %s13
        %s166 = ssub.s32 363, %s165
        %p167 = scmp.lt.s32.totalorder %s166, 256
        %s168 = scalar_select %p167, %s166, 256
        %s169 = smul.u32 128, %s168
        %s170 = smul.u32 %s169, 2
        %p171 = scmp.lt.s32.totalorder %s165, 362
        %s172 = scalar_select %p171, %s165, 362
        %s173 = smul.addr %s172, 2
        %s174 = smul.addr %s173, 8
        %s175 = scalar_lea.vmem %s1, %s174
        %p176 = pneg %p60
        %p177 = pneg %p57
        %p178 = pneg %p86
        %p179 = pneg %p83
        %s180 = sand.u32 %s73, 1
        %s181 = sand.u32 %s73, 1
        %s182 = smul.addr %s181, 4096
        %s183 = scalar_lea.vmem [#allocation2], %s182
        %s184 = smul.u32 256, %s13
        %s185 = ssub.s32 363, %s184
        %p186 = scmp.lt.s32.totalorder %s185, 256
        %s187 = scalar_select %p186, %s185, 256
        %s188 = smul.u32 128, %s187
        %s189 = smul.u32 %s188, 2
        %p190 = scmp.lt.s32.totalorder %s184, 362
        %s191 = scalar_select %p190, %s184, 362
        %s192 = smul.addr %s191, 2
        %s193 = smul.addr %s192, 8
        %s194 = scalar_lea.vmem %s0, %s193
        %s195 = smul.u32 256, %s13
        %s196 = ssub.s32 363, %s195
        %p197 = scmp.lt.s32.totalorder %s196, 256
        %s198 = scalar_select %p197, %s196, 256
        %s199 = smul.u32 128, %s198
        %s200 = smul.u32 %s199, 2
        %s201 = smul.u32 256, %s13
        %s202 = ssub.s32 363, %s201
        %p203 = scmp.lt.s32.totalorder %s202, 256
        %s204 = scalar_select %p203, %s202, 256
        %s205 = smul.u32 128, %s204
        %s206 = smul.u32 %s205, 2
        %p207 = scmp.lt.s32.totalorder %s201, 362
        %s208 = scalar_select %p207, %s201, 362
        %s209 = smul.addr %s208, 2
        %s210 = smul.addr %s209, 8
        %s211 = scalar_lea.vmem %s1, %s210
        %s212 = smul.u32 256, %s13
        %s213 = ssub.s32 363, %s212
        %p214 = scmp.lt.s32.totalorder %s213, 256
        %s215 = scalar_select %p214, %s213, 256
        %s216 = smul.u32 128, %s215
        %s217 = smul.u32 %s216, 2
        %s218 = smul.u32 256, %s13
        %s219 = ssub.s32 363, %s218
        %p220 = scmp.lt.s32.totalorder %s219, 256
        %s221 = scalar_select %p220, %s219, 256
        %s222 = smul.u32 128, %s221
        %s223 = smul.u32 %s222, 2
        %v224 = vld [vmem:[%s194] sm:$0xff]
        %v225 = vld [vmem:[%s194 + $0x8] sm:$0xff]
        %v226 = vld [vmem:[%s194 + $0x10] sm:$0xff]
        %v227 = vld [vmem:[%s194 + $0x18] sm:$0xff]
        %v228 = vld [vmem:[%s194 + $0x20] sm:$0xff]
        %v229 = vld [vmem:[%s194 + $0x28] sm:$0xff]
        %v230 = vld [vmem:[%s194 + $0x30] sm:$0xff]
        %v231 = vld [vmem:[%s194 + $0x38] sm:$0xff]
        %v232 = vld [vmem:[%s194 + $0x40] sm:$0xff]
        %v233 = vld [vmem:[%s194 + $0x48] sm:$0xff]
        %v234 = vld [vmem:[%s194 + $0x50] sm:$0xff]
        %v235 = vld [vmem:[%s194 + $0x58] sm:$0xff]
        %v236 = vld [vmem:[%s194 + $0x60] sm:$0xff]
        %v237 = vld [vmem:[%s194 + $0x68] sm:$0xff]
        %v238 = vld [vmem:[%s194 + $0x70] sm:$0xff]
        %v239 = vld [vmem:[%s194 + $0x78] sm:$0xff]
        %v240 = vld [vmem:[%s194 + $0x80] sm:$0xff]
        %v241 = vld [vmem:[%s194 + $0x88] sm:$0xff]
        %v242 = vld [vmem:[%s194 + $0x90] sm:$0xff]
        %v243 = vld [vmem:[%s194 + $0x98] sm:$0xff]
        %v244 = vld [vmem:[%s194 + $0xa0] sm:$0xff]
        %v245 = vld [vmem:[%s194 + $0xa8] sm:$0xff]
        %v246 = vld [vmem:[%s194 + $0xb0] sm:$0xff]
        %v247 = vld [vmem:[%s194 + $0xb8] sm:$0xff]
        %v248 = vld [vmem:[%s194 + $0xc0] sm:$0xff]
        %v249 = vld [vmem:[%s194 + $0xc8] sm:$0xff]
        %v250 = vld [vmem:[%s194 + $0xd0] sm:$0xff]
        %v251 = vld [vmem:[%s194 + $0xd8] sm:$0xff]
        %v252 = vld [vmem:[%s194 + $0xe0] sm:$0xff]
        %v253 = vld [vmem:[%s194 + $0xe8] sm:$0xff]
        %v254 = vld [vmem:[%s194 + $0xf0] sm:$0xff]
        %v255 = vld [vmem:[%s194 + $0xf8] sm:$0xff]
        %v256 = vld [vmem:[%s194 + $0x100] sm:$0xff]
        %v257 = vld [vmem:[%s194 + $0x108] sm:$0xff]
        %v258 = vld [vmem:[%s194 + $0x110] sm:$0xff]
        %v259 = vld [vmem:[%s194 + $0x118] sm:$0xff]
        %v260 = vld [vmem:[%s194 + $0x120] sm:$0xff]
        %v261 = vld [vmem:[%s194 + $0x128] sm:$0xff]
        %v262 = vld [vmem:[%s194 + $0x130] sm:$0xff]
        %v263 = vld [vmem:[%s194 + $0x138] sm:$0xff]
        %v264 = vld [vmem:[%s194 + $0x140] sm:$0xff]
        %v265 = vld [vmem:[%s194 + $0x148] sm:$0xff]
        %v266 = vld [vmem:[%s194 + $0x150] sm:$0xff]
        %v267 = vld [vmem:[%s194 + $0x158] sm:$0xff]
        %v268 = vld [vmem:[%s194 + $0x160] sm:$0xff]
        %v269 = vld [vmem:[%s194 + $0x168] sm:$0xff]
        %v270 = vld [vmem:[%s194 + $0x170] sm:$0xff]
        %v271 = vld [vmem:[%s194 + $0x178] sm:$0xff]
        %v272 = vld [vmem:[%s194 + $0x180] sm:$0xff]
        %v273 = vld [vmem:[%s194 + $0x188] sm:$0xff]
        %v274 = vld [vmem:[%s194 + $0x190] sm:$0xff]
        %v275 = vld [vmem:[%s194 + $0x198] sm:$0xff]
        %v276 = vld [vmem:[%s194 + $0x1a0] sm:$0xff]
        %v277 = vld [vmem:[%s194 + $0x1a8] sm:$0xff]
        %v278 = vld [vmem:[%s194 + $0x1b0] sm:$0xff]
        %v279 = vld [vmem:[%s194 + $0x1b8] sm:$0xff]
        %v280 = vld [vmem:[%s194 + $0x1c0] sm:$0xff]
        %v281 = vld [vmem:[%s194 + $0x1c8] sm:$0xff]
        %v282 = vld [vmem:[%s194 + $0x1d0] sm:$0xff]
        %v283 = vld [vmem:[%s194 + $0x1d8] sm:$0xff]
        %v284 = vld [vmem:[%s194 + $0x1e0] sm:$0xff]
        %v285 = vld [vmem:[%s194 + $0x1e8] sm:$0xff]
        %v286 = vld [vmem:[%s194 + $0x1f0] sm:$0xff]
        %v287 = vld [vmem:[%s194 + $0x1f8] sm:$0xff]
        %v288 = vld [vmem:[%s194 + $0x200] sm:$0xff]
        %v289 = vld [vmem:[%s194 + $0x208] sm:$0xff]
        %v290 = vld [vmem:[%s194 + $0x210] sm:$0xff]
        %v291 = vld [vmem:[%s194 + $0x218] sm:$0xff]
        %v292 = vld [vmem:[%s194 + $0x220] sm:$0xff]
        %v293 = vld [vmem:[%s194 + $0x228] sm:$0xff]
        %v294 = vld [vmem:[%s194 + $0x230] sm:$0xff]
        %v295 = vld [vmem:[%s194 + $0x238] sm:$0xff]
        %v296 = vld [vmem:[%s194 + $0x240] sm:$0xff]
        %v297 = vld [vmem:[%s194 + $0x248] sm:$0xff]
        %v298 = vld [vmem:[%s194 + $0x250] sm:$0xff]
        %v299 = vld [vmem:[%s194 + $0x258] sm:$0xff]
        %v300 = vld [vmem:[%s194 + $0x260] sm:$0xff]
        %v301 = vld [vmem:[%s194 + $0x268] sm:$0xff]
        %v302 = vld [vmem:[%s194 + $0x270] sm:$0xff]
        %v303 = vld [vmem:[%s194 + $0x278] sm:$0xff]
        %v304 = vld [vmem:[%s194 + $0x280] sm:$0xff]
        %v305 = vld [vmem:[%s194 + $0x288] sm:$0xff]
        %v306 = vld [vmem:[%s194 + $0x290] sm:$0xff]
        %v307 = vld [vmem:[%s194 + $0x298] sm:$0xff]
        %v308 = vld [vmem:[%s194 + $0x2a0] sm:$0xff]
        %v309 = vld [vmem:[%s194 + $0x2a8] sm:$0xff]
        %v310 = vld [vmem:[%s194 + $0x2b0] sm:$0xff]
        %v311 = vld [vmem:[%s194 + $0x2b8] sm:$0xff]
        %v312 = vld [vmem:[%s194 + $0x2c0] sm:$0xff]
        %v313 = vld [vmem:[%s194 + $0x2c8] sm:$0xff]
        %v314 = vld [vmem:[%s194 + $0x2d0] sm:$0xff]
        %v315 = vld [vmem:[%s194 + $0x2d8] sm:$0xff]
        %v316 = vld [vmem:[%s194 + $0x2e0] sm:$0xff]
        %v317 = vld [vmem:[%s194 + $0x2e8] sm:$0xff]
        %v318 = vld [vmem:[%s194 + $0x2f0] sm:$0xff]
        %v319 = vld [vmem:[%s194 + $0x2f8] sm:$0xff]
        %v320 = vld [vmem:[%s194 + $0x300] sm:$0xff]
        %v321 = vld [vmem:[%s194 + $0x308] sm:$0xff]
        %v322 = vld [vmem:[%s194 + $0x310] sm:$0xff]
        %v323 = vld [vmem:[%s194 + $0x318] sm:$0xff]
        %v324 = vld [vmem:[%s194 + $0x320] sm:$0xff]
        %v325 = vld [vmem:[%s194 + $0x328] sm:$0xff]
        %v326 = vld [vmem:[%s194 + $0x330] sm:$0xff]
        %v327 = vld [vmem:[%s194 + $0x338] sm:$0xff]
        %v328 = vld [vmem:[%s194 + $0x340] sm:$0xff]
        %v329 = vld [vmem:[%s194 + $0x348] sm:$0xff]
        %v330 = vld [vmem:[%s194 + $0x350] sm:$0xff]
        %v331 = vld [vmem:[%s194 + $0x358] sm:$0xff]
        %v332 = vld [vmem:[%s194 + $0x360] sm:$0xff]
        %v333 = vld [vmem:[%s194 + $0x368] sm:$0xff]
        %v334 = vld [vmem:[%s194 + $0x370] sm:$0xff]
        %v335 = vld [vmem:[%s194 + $0x378] sm:$0xff]
        %v336 = vld [vmem:[%s194 + $0x380] sm:$0xff]
        %v337 = vld [vmem:[%s194 + $0x388] sm:$0xff]
        %v338 = vld [vmem:[%s194 + $0x390] sm:$0xff]
        %v339 = vld [vmem:[%s194 + $0x398] sm:$0xff]
        %v340 = vld [vmem:[%s194 + $0x3a0] sm:$0xff]
        %v341 = vld [vmem:[%s194 + $0x3a8] sm:$0xff]
        %v342 = vld [vmem:[%s194 + $0x3b0] sm:$0xff]
        %v343 = vld [vmem:[%s194 + $0x3b8] sm:$0xff]
        %v344 = vld [vmem:[%s194 + $0x3c0] sm:$0xff]
        %v345 = vld [vmem:[%s194 + $0x3c8] sm:$0xff]
        %v346 = vld [vmem:[%s194 + $0x3d0] sm:$0xff]
        %v347 = vld [vmem:[%s194 + $0x3d8] sm:$0xff]
        %v348 = vld [vmem:[%s194 + $0x3e0] sm:$0xff]
        %v349 = vld [vmem:[%s194 + $0x3e8] sm:$0xff]
        %v350 = vld [vmem:[%s194 + $0x3f0] sm:$0xff]
        %v351 = vld [vmem:[%s194 + $0x3f8] sm:$0xff]
        %v352 = vld [vmem:[%s194 + $0x400] sm:$0xff]
        %v353 = vld [vmem:[%s194 + $0x408] sm:$0xff]
        %v354 = vld [vmem:[%s194 + $0x410] sm:$0xff]
        %v355 = vld [vmem:[%s194 + $0x418] sm:$0xff]
        %v356 = vld [vmem:[%s194 + $0x420] sm:$0xff]
        %v357 = vld [vmem:[%s194 + $0x428] sm:$0xff]
        %v358 = vld [vmem:[%s194 + $0x430] sm:$0xff]
        %v359 = vld [vmem:[%s194 + $0x438] sm:$0xff]
        %v360 = vld [vmem:[%s194 + $0x440] sm:$0xff]
        %v361 = vld [vmem:[%s194 + $0x448] sm:$0xff]
        %v362 = vld [vmem:[%s194 + $0x450] sm:$0xff]
        %v363 = vld [vmem:[%s194 + $0x458] sm:$0xff]
        %v364 = vld [vmem:[%s194 + $0x460] sm:$0xff]
        %v365 = vld [vmem:[%s194 + $0x468] sm:$0xff]
        %v366 = vld [vmem:[%s194 + $0x470] sm:$0xff]
        %v367 = vld [vmem:[%s194 + $0x478] sm:$0xff]
        %v368 = vld [vmem:[%s194 + $0x480] sm:$0xff]
        %v369 = vld [vmem:[%s194 + $0x488] sm:$0xff]
        %v370 = vld [vmem:[%s194 + $0x490] sm:$0xff]
        %v371 = vld [vmem:[%s194 + $0x498] sm:$0xff]
        %v372 = vld [vmem:[%s194 + $0x4a0] sm:$0xff]
        %v373 = vld [vmem:[%s194 + $0x4a8] sm:$0xff]
        %v374 = vld [vmem:[%s194 + $0x4b0] sm:$0xff]
        %v375 = vld [vmem:[%s194 + $0x4b8] sm:$0xff]
        %v376 = vld [vmem:[%s194 + $0x4c0] sm:$0xff]
        %v377 = vld [vmem:[%s194 + $0x4c8] sm:$0xff]
        %v378 = vld [vmem:[%s194 + $0x4d0] sm:$0xff]
        %v379 = vld [vmem:[%s194 + $0x4d8] sm:$0xff]
        %v380 = vld [vmem:[%s194 + $0x4e0] sm:$0xff]
        %v381 = vld [vmem:[%s194 + $0x4e8] sm:$0xff]
        %v382 = vld [vmem:[%s194 + $0x4f0] sm:$0xff]
        %v383 = vld [vmem:[%s194 + $0x4f8] sm:$0xff]
        %v384 = vld [vmem:[%s194 + $0x500] sm:$0xff]
        %v385 = vld [vmem:[%s194 + $0x508] sm:$0xff]
        %v386 = vld [vmem:[%s194 + $0x510] sm:$0xff]
        %v387 = vld [vmem:[%s194 + $0x518] sm:$0xff]
        %v388 = vld [vmem:[%s194 + $0x520] sm:$0xff]
        %v389 = vld [vmem:[%s194 + $0x528] sm:$0xff]
        %v390 = vld [vmem:[%s194 + $0x530] sm:$0xff]
        %v391 = vld [vmem:[%s194 + $0x538] sm:$0xff]
        %v392 = vld [vmem:[%s194 + $0x540] sm:$0xff]
        %v393 = vld [vmem:[%s194 + $0x548] sm:$0xff]
        %v394 = vld [vmem:[%s194 + $0x550] sm:$0xff]
        %v395 = vld [vmem:[%s194 + $0x558] sm:$0xff]
        %v396 = vld [vmem:[%s194 + $0x560] sm:$0xff]
        %v397 = vld [vmem:[%s194 + $0x568] sm:$0xff]
        %v398 = vld [vmem:[%s194 + $0x570] sm:$0xff]
        %v399 = vld [vmem:[%s194 + $0x578] sm:$0xff]
        %v400 = vld [vmem:[%s194 + $0x580] sm:$0xff]
        %v401 = vld [vmem:[%s194 + $0x588] sm:$0xff]
        %v402 = vld [vmem:[%s194 + $0x590] sm:$0xff]
        %v403 = vld [vmem:[%s194 + $0x598] sm:$0xff]
        %v404 = vld [vmem:[%s194 + $0x5a0] sm:$0xff]
        %v405 = vld [vmem:[%s194 + $0x5a8] sm:$0xff]
        %v406 = vld [vmem:[%s194 + $0x5b0] sm:$0xff]
        %v407 = vld [vmem:[%s194 + $0x5b8] sm:$0xff]
        %v408 = vld [vmem:[%s194 + $0x5c0] sm:$0xff]
        %v409 = vld [vmem:[%s194 + $0x5c8] sm:$0xff]
        %v410 = vld [vmem:[%s194 + $0x5d0] sm:$0xff]
        %v411 = vld [vmem:[%s194 + $0x5d8] sm:$0xff]
        %v412 = vld [vmem:[%s194 + $0x5e0] sm:$0xff]
        %v413 = vld [vmem:[%s194 + $0x5e8] sm:$0xff]
        %v414 = vld [vmem:[%s194 + $0x5f0] sm:$0xff]
        %v415 = vld [vmem:[%s194 + $0x5f8] sm:$0xff]
        %v416 = vld [vmem:[%s194 + $0x600] sm:$0xff]
        %v417 = vld [vmem:[%s194 + $0x608] sm:$0xff]
        %v418 = vld [vmem:[%s194 + $0x610] sm:$0xff]
        %v419 = vld [vmem:[%s194 + $0x618] sm:$0xff]
        %v420 = vld [vmem:[%s194 + $0x620] sm:$0xff]
        %v421 = vld [vmem:[%s194 + $0x628] sm:$0xff]
        %v422 = vld [vmem:[%s194 + $0x630] sm:$0xff]
        %v423 = vld [vmem:[%s194 + $0x638] sm:$0xff]
        %v424 = vld [vmem:[%s194 + $0x640] sm:$0xff]
        %v425 = vld [vmem:[%s194 + $0x648] sm:$0xff]
        %v426 = vld [vmem:[%s194 + $0x650] sm:$0xff]
        %v427 = vld [vmem:[%s194 + $0x658] sm:$0xff]
        %v428 = vld [vmem:[%s194 + $0x660] sm:$0xff]
        %v429 = vld [vmem:[%s194 + $0x668] sm:$0xff]
        %v430 = vld [vmem:[%s194 + $0x670] sm:$0xff]
        %v431 = vld [vmem:[%s194 + $0x678] sm:$0xff]
        %v432 = vld [vmem:[%s194 + $0x680] sm:$0xff]
        %v433 = vld [vmem:[%s194 + $0x688] sm:$0xff]
        %v434 = vld [vmem:[%s194 + $0x690] sm:$0xff]
        %v435 = vld [vmem:[%s194 + $0x698] sm:$0xff]
        %v436 = vld [vmem:[%s194 + $0x6a0] sm:$0xff]
        %v437 = vld [vmem:[%s194 + $0x6a8] sm:$0xff]
        %v438 = vld [vmem:[%s194 + $0x6b0] sm:$0xff]
        %v439 = vld [vmem:[%s194 + $0x6b8] sm:$0xff]
        %v440 = vld [vmem:[%s194 + $0x6c0] sm:$0xff]
        %v441 = vld [vmem:[%s194 + $0x6c8] sm:$0xff]
        %v442 = vld [vmem:[%s194 + $0x6d0] sm:$0xff]
        %v443 = vld [vmem:[%s194 + $0x6d8] sm:$0xff]
        %v444 = vld [vmem:[%s194 + $0x6e0] sm:$0xff]
        %v445 = vld [vmem:[%s194 + $0x6e8] sm:$0xff]
        %v446 = vld [vmem:[%s194 + $0x6f0] sm:$0xff]
        %v447 = vld [vmem:[%s194 + $0x6f8] sm:$0xff]
        %v448 = vld [vmem:[%s194 + $0x700] sm:$0xff]
        %v449 = vld [vmem:[%s194 + $0x708] sm:$0xff]
        %v450 = vld [vmem:[%s194 + $0x710] sm:$0xff]
        %v451 = vld [vmem:[%s194 + $0x718] sm:$0xff]
        %v452 = vld [vmem:[%s194 + $0x720] sm:$0xff]
        %v453 = vld [vmem:[%s194 + $0x728] sm:$0xff]
        %v454 = vld [vmem:[%s194 + $0x730] sm:$0xff]
        %v455 = vld [vmem:[%s194 + $0x738] sm:$0xff]
        %v456 = vld [vmem:[%s194 + $0x740] sm:$0xff]
        %v457 = vld [vmem:[%s194 + $0x748] sm:$0xff]
        %v458 = vld [vmem:[%s194 + $0x750] sm:$0xff]
        %v459 = vld [vmem:[%s194 + $0x758] sm:$0xff]
        %v460 = vld [vmem:[%s194 + $0x760] sm:$0xff]
        %v461 = vld [vmem:[%s194 + $0x768] sm:$0xff]
        %v462 = vld [vmem:[%s194 + $0x770] sm:$0xff]
        %v463 = vld [vmem:[%s194 + $0x778] sm:$0xff]
        %v464 = vld [vmem:[%s194 + $0x780] sm:$0xff]
        %v465 = vld [vmem:[%s194 + $0x788] sm:$0xff]
        %v466 = vld [vmem:[%s194 + $0x790] sm:$0xff]
        %v467 = vld [vmem:[%s194 + $0x798] sm:$0xff]
        %v468 = vld [vmem:[%s194 + $0x7a0] sm:$0xff]
        %v469 = vld [vmem:[%s194 + $0x7a8] sm:$0xff]
        %v470 = vld [vmem:[%s194 + $0x7b0] sm:$0xff]
        %v471 = vld [vmem:[%s194 + $0x7b8] sm:$0xff]
        %v472 = vld [vmem:[%s194 + $0x7c0] sm:$0xff]
        %v473 = vld [vmem:[%s194 + $0x7c8] sm:$0xff]
        %v474 = vld [vmem:[%s194 + $0x7d0] sm:$0xff]
        %v475 = vld [vmem:[%s194 + $0x7d8] sm:$0xff]
        %v476 = vld [vmem:[%s194 + $0x7e0] sm:$0xff]
        %v477 = vld [vmem:[%s194 + $0x7e8] sm:$0xff]
        %v478 = vld [vmem:[%s194 + $0x7f0] sm:$0xff]
        %v479 = vld [vmem:[%s194 + $0x7f8] sm:$0xff]
        %v480 = vld [vmem:[%s194 + $0x800] sm:$0xff]
        %v481 = vld [vmem:[%s194 + $0x808] sm:$0xff]
        %v482 = vld [vmem:[%s194 + $0x810] sm:$0xff]
        %v483 = vld [vmem:[%s194 + $0x818] sm:$0xff]
        %v484 = vld [vmem:[%s194 + $0x820] sm:$0xff]
        %v485 = vld [vmem:[%s194 + $0x828] sm:$0xff]
        %v486 = vld [vmem:[%s194 + $0x830] sm:$0xff]
        %v487 = vld [vmem:[%s194 + $0x838] sm:$0xff]
        %v488 = vld [vmem:[%s194 + $0x840] sm:$0xff]
        %v489 = vld [vmem:[%s194 + $0x848] sm:$0xff]
        %v490 = vld [vmem:[%s194 + $0x850] sm:$0xff]
        %v491 = vld [vmem:[%s194 + $0x858] sm:$0xff]
        %v492 = vld [vmem:[%s194 + $0x860] sm:$0xff]
        %v493 = vld [vmem:[%s194 + $0x868] sm:$0xff]
        %v494 = vld [vmem:[%s194 + $0x870] sm:$0xff]
        %v495 = vld [vmem:[%s194 + $0x878] sm:$0xff]
        %v496 = vld [vmem:[%s194 + $0x880] sm:$0xff]
        %v497 = vld [vmem:[%s194 + $0x888] sm:$0xff]
        %v498 = vld [vmem:[%s194 + $0x890] sm:$0xff]
        %v499 = vld [vmem:[%s194 + $0x898] sm:$0xff]
        %v500 = vld [vmem:[%s194 + $0x8a0] sm:$0xff]
        %v501 = vld [vmem:[%s194 + $0x8a8] sm:$0xff]
        %v502 = vld [vmem:[%s194 + $0x8b0] sm:$0xff]
        %v503 = vld [vmem:[%s194 + $0x8b8] sm:$0xff]
        %v504 = vld [vmem:[%s194 + $0x8c0] sm:$0xff]
        %v505 = vld [vmem:[%s194 + $0x8c8] sm:$0xff]
        %v506 = vld [vmem:[%s194 + $0x8d0] sm:$0xff]
        %v507 = vld [vmem:[%s194 + $0x8d8] sm:$0xff]
        %v508 = vld [vmem:[%s194 + $0x8e0] sm:$0xff]
        %v509 = vld [vmem:[%s194 + $0x8e8] sm:$0xff]
        %v510 = vld [vmem:[%s194 + $0x8f0] sm:$0xff]
        %v511 = vld [vmem:[%s194 + $0x8f8] sm:$0xff]
        %v512 = vld [vmem:[%s194 + $0x900] sm:$0xff]
        %v513 = vld [vmem:[%s194 + $0x908] sm:$0xff]
        %v514 = vld [vmem:[%s194 + $0x910] sm:$0xff]
        %v515 = vld [vmem:[%s194 + $0x918] sm:$0xff]
        %v516 = vld [vmem:[%s194 + $0x920] sm:$0xff]
        %v517 = vld [vmem:[%s194 + $0x928] sm:$0xff]
        %v518 = vld [vmem:[%s194 + $0x930] sm:$0xff]
        %v519 = vld [vmem:[%s194 + $0x938] sm:$0xff]
        %v520 = vld [vmem:[%s194 + $0x940] sm:$0xff]
        %v521 = vld [vmem:[%s194 + $0x948] sm:$0xff]
        %v522 = vld [vmem:[%s194 + $0x950] sm:$0xff]
        %v523 = vld [vmem:[%s194 + $0x958] sm:$0xff]
        %v524 = vld [vmem:[%s194 + $0x960] sm:$0xff]
        %v525 = vld [vmem:[%s194 + $0x968] sm:$0xff]
        %v526 = vld [vmem:[%s194 + $0x970] sm:$0xff]
        %v527 = vld [vmem:[%s194 + $0x978] sm:$0xff]
        %v528 = vld [vmem:[%s194 + $0x980] sm:$0xff]
        %v529 = vld [vmem:[%s194 + $0x988] sm:$0xff]
        %v530 = vld [vmem:[%s194 + $0x990] sm:$0xff]
        %v531 = vld [vmem:[%s194 + $0x998] sm:$0xff]
        %v532 = vld [vmem:[%s194 + $0x9a0] sm:$0xff]
        %v533 = vld [vmem:[%s194 + $0x9a8] sm:$0xff]
        %v534 = vld [vmem:[%s194 + $0x9b0] sm:$0xff]
        %v535 = vld [vmem:[%s194 + $0x9b8] sm:$0xff]
        %v536 = vld [vmem:[%s194 + $0x9c0] sm:$0xff]
        %v537 = vld [vmem:[%s194 + $0x9c8] sm:$0xff]
        %v538 = vld [vmem:[%s194 + $0x9d0] sm:$0xff]
        %v539 = vld [vmem:[%s194 + $0x9d8] sm:$0xff]
        %v540 = vld [vmem:[%s194 + $0x9e0] sm:$0xff]
        %v541 = vld [vmem:[%s194 + $0x9e8] sm:$0xff]
        %v542 = vld [vmem:[%s194 + $0x9f0] sm:$0xff]
        %v543 = vld [vmem:[%s194 + $0x9f8] sm:$0xff]
        %v544 = vld [vmem:[%s194 + $0xa00] sm:$0xff]
        %v545 = vld [vmem:[%s194 + $0xa08] sm:$0xff]
        %v546 = vld [vmem:[%s194 + $0xa10] sm:$0xff]
        %v547 = vld [vmem:[%s194 + $0xa18] sm:$0xff]
        %v548 = vld [vmem:[%s194 + $0xa20] sm:$0xff]
        %v549 = vld [vmem:[%s194 + $0xa28] sm:$0xff]
        %v550 = vld [vmem:[%s194 + $0xa30] sm:$0xff]
        %v551 = vld [vmem:[%s194 + $0xa38] sm:$0xff]
        %v552 = vld [vmem:[%s194 + $0xa40] sm:$0xff]
        %v553 = vld [vmem:[%s194 + $0xa48] sm:$0xff]
        %v554 = vld [vmem:[%s194 + $0xa50] sm:$0xff]
        %v555 = vld [vmem:[%s194 + $0xa58] sm:$0xff]
        %v556 = vld [vmem:[%s194 + $0xa60] sm:$0xff]
        %v557 = vld [vmem:[%s194 + $0xa68] sm:$0xff]
        %v558 = vld [vmem:[%s194 + $0xa70] sm:$0xff]
        %v559 = vld [vmem:[%s194 + $0xa78] sm:$0xff]
        %v560 = vld [vmem:[%s194 + $0xa80] sm:$0xff]
        %v561 = vld [vmem:[%s194 + $0xa88] sm:$0xff]
        %v562 = vld [vmem:[%s194 + $0xa90] sm:$0xff]
        %v563 = vld [vmem:[%s194 + $0xa98] sm:$0xff]
        %v564 = vld [vmem:[%s194 + $0xaa0] sm:$0xff]
        %v565 = vld [vmem:[%s194 + $0xaa8] sm:$0xff]
        %v566 = vld [vmem:[%s194 + $0xab0] sm:$0xff]
        %v567 = vld [vmem:[%s194 + $0xab8] sm:$0xff]
        %v568 = vld [vmem:[%s194 + $0xac0] sm:$0xff]
        %v569 = vld [vmem:[%s194 + $0xac8] sm:$0xff]
        %v570 = vld [vmem:[%s194 + $0xad0] sm:$0xff]
        %v571 = vld [vmem:[%s194 + $0xad8] sm:$0xff]
        %v572 = vld [vmem:[%s194 + $0xae0] sm:$0xff]
        %v573 = vld [vmem:[%s194 + $0xae8] sm:$0xff]
        %v574 = vld [vmem:[%s194 + $0xaf0] sm:$0xff]
        %v575 = vld [vmem:[%s194 + $0xaf8] sm:$0xff]
        %v576 = vld [vmem:[%s194 + $0xb00] sm:$0xff]
        %v577 = vld [vmem:[%s194 + $0xb08] sm:$0xff]
        %v578 = vld [vmem:[%s194 + $0xb10] sm:$0xff]
        %v579 = vld [vmem:[%s194 + $0xb18] sm:$0xff]
        %v580 = vld [vmem:[%s194 + $0xb20] sm:$0xff]
        %v581 = vld [vmem:[%s194 + $0xb28] sm:$0xff]
        %v582 = vld [vmem:[%s194 + $0xb30] sm:$0xff]
        %v583 = vld [vmem:[%s194 + $0xb38] sm:$0xff]
        %v584 = vld [vmem:[%s194 + $0xb40] sm:$0xff]
        %v585 = vld [vmem:[%s194 + $0xb48] sm:$0xff]
        %v586 = vld [vmem:[%s194 + $0xb50] sm:$0xff]
        %v587 = vld [vmem:[%s194 + $0xb58] sm:$0xff]
        %v588 = vld [vmem:[%s194 + $0xb60] sm:$0xff]
        %v589 = vld [vmem:[%s194 + $0xb68] sm:$0xff]
        %v590 = vld [vmem:[%s194 + $0xb70] sm:$0xff]
        %v591 = vld [vmem:[%s194 + $0xb78] sm:$0xff]
        %v592 = vld [vmem:[%s194 + $0xb80] sm:$0xff]
        %v593 = vld [vmem:[%s194 + $0xb88] sm:$0xff]
        %v594 = vld [vmem:[%s194 + $0xb90] sm:$0xff]
        %v595 = vld [vmem:[%s194 + $0xb98] sm:$0xff]
        %v596 = vld [vmem:[%s194 + $0xba0] sm:$0xff]
        %v597 = vld [vmem:[%s194 + $0xba8] sm:$0xff]
        %v598 = vld [vmem:[%s194 + $0xbb0] sm:$0xff]
        %v599 = vld [vmem:[%s194 + $0xbb8] sm:$0xff]
        %v600 = vld [vmem:[%s194 + $0xbc0] sm:$0xff]
        %v601 = vld [vmem:[%s194 + $0xbc8] sm:$0xff]
        %v602 = vld [vmem:[%s194 + $0xbd0] sm:$0xff]
        %v603 = vld [vmem:[%s194 + $0xbd8] sm:$0xff]
        %v604 = vld [vmem:[%s194 + $0xbe0] sm:$0xff]
        %v605 = vld [vmem:[%s194 + $0xbe8] sm:$0xff]
        %v606 = vld [vmem:[%s194 + $0xbf0] sm:$0xff]
        %v607 = vld [vmem:[%s194 + $0xbf8] sm:$0xff]
        %v608 = vld [vmem:[%s194 + $0xc00] sm:$0xff]
        %v609 = vld [vmem:[%s194 + $0xc08] sm:$0xff]
        %v610 = vld [vmem:[%s194 + $0xc10] sm:$0xff]
        %v611 = vld [vmem:[%s194 + $0xc18] sm:$0xff]
        %v612 = vld [vmem:[%s194 + $0xc20] sm:$0xff]
        %v613 = vld [vmem:[%s194 + $0xc28] sm:$0xff]
        %v614 = vld [vmem:[%s194 + $0xc30] sm:$0xff]
        %v615 = vld [vmem:[%s194 + $0xc38] sm:$0xff]
        %v616 = vld [vmem:[%s194 + $0xc40] sm:$0xff]
        %v617 = vld [vmem:[%s194 + $0xc48] sm:$0xff]
        %v618 = vld [vmem:[%s194 + $0xc50] sm:$0xff]
        %v619 = vld [vmem:[%s194 + $0xc58] sm:$0xff]
        %v620 = vld [vmem:[%s194 + $0xc60] sm:$0xff]
        %v621 = vld [vmem:[%s194 + $0xc68] sm:$0xff]
        %v622 = vld [vmem:[%s194 + $0xc70] sm:$0xff]
        %v623 = vld [vmem:[%s194 + $0xc78] sm:$0xff]
        %v624 = vld [vmem:[%s194 + $0xc80] sm:$0xff]
        %v625 = vld [vmem:[%s194 + $0xc88] sm:$0xff]
        %v626 = vld [vmem:[%s194 + $0xc90] sm:$0xff]
        %v627 = vld [vmem:[%s194 + $0xc98] sm:$0xff]
        %v628 = vld [vmem:[%s194 + $0xca0] sm:$0xff]
        %v629 = vld [vmem:[%s194 + $0xca8] sm:$0xff]
        %v630 = vld [vmem:[%s194 + $0xcb0] sm:$0xff]
        %v631 = vld [vmem:[%s194 + $0xcb8] sm:$0xff]
        %v632 = vld [vmem:[%s194 + $0xcc0] sm:$0xff]
        %v633 = vld [vmem:[%s194 + $0xcc8] sm:$0xff]
        %v634 = vld [vmem:[%s194 + $0xcd0] sm:$0xff]
        %v635 = vld [vmem:[%s194 + $0xcd8] sm:$0xff]
        %v636 = vld [vmem:[%s194 + $0xce0] sm:$0xff]
        %v637 = vld [vmem:[%s194 + $0xce8] sm:$0xff]
        %v638 = vld [vmem:[%s194 + $0xcf0] sm:$0xff]
        %v639 = vld [vmem:[%s194 + $0xcf8] sm:$0xff]
        %v640 = vld [vmem:[%s194 + $0xd00] sm:$0xff]
        %v641 = vld [vmem:[%s194 + $0xd08] sm:$0xff]
        %v642 = vld [vmem:[%s194 + $0xd10] sm:$0xff]
        %v643 = vld [vmem:[%s194 + $0xd18] sm:$0xff]
        %v644 = vld [vmem:[%s194 + $0xd20] sm:$0xff]
        %v645 = vld [vmem:[%s194 + $0xd28] sm:$0xff]
        %v646 = vld [vmem:[%s194 + $0xd30] sm:$0xff]
        %v647 = vld [vmem:[%s194 + $0xd38] sm:$0xff]
        %v648 = vld [vmem:[%s194 + $0xd40] sm:$0xff]
        %v649 = vld [vmem:[%s194 + $0xd48] sm:$0xff]
        %v650 = vld [vmem:[%s194 + $0xd50] sm:$0xff]
        %v651 = vld [vmem:[%s194 + $0xd58] sm:$0xff]
        %v652 = vld [vmem:[%s194 + $0xd60] sm:$0xff]
        %v653 = vld [vmem:[%s194 + $0xd68] sm:$0xff]
        %v654 = vld [vmem:[%s194 + $0xd70] sm:$0xff]
        %v655 = vld [vmem:[%s194 + $0xd78] sm:$0xff]
        %v656 = vld [vmem:[%s194 + $0xd80] sm:$0xff]
        %v657 = vld [vmem:[%s194 + $0xd88] sm:$0xff]
        %v658 = vld [vmem:[%s194 + $0xd90] sm:$0xff]
        %v659 = vld [vmem:[%s194 + $0xd98] sm:$0xff]
        %v660 = vld [vmem:[%s194 + $0xda0] sm:$0xff]
        %v661 = vld [vmem:[%s194 + $0xda8] sm:$0xff]
        %v662 = vld [vmem:[%s194 + $0xdb0] sm:$0xff]
        %v663 = vld [vmem:[%s194 + $0xdb8] sm:$0xff]
        %v664 = vld [vmem:[%s194 + $0xdc0] sm:$0xff]
        %v665 = vld [vmem:[%s194 + $0xdc8] sm:$0xff]
        %v666 = vld [vmem:[%s194 + $0xdd0] sm:$0xff]
        %v667 = vld [vmem:[%s194 + $0xdd8] sm:$0xff]
        %v668 = vld [vmem:[%s194 + $0xde0] sm:$0xff]
        %v669 = vld [vmem:[%s194 + $0xde8] sm:$0xff]
        %v670 = vld [vmem:[%s194 + $0xdf0] sm:$0xff]
        %v671 = vld [vmem:[%s194 + $0xdf8] sm:$0xff]
        %v672 = vld [vmem:[%s194 + $0xe00] sm:$0xff]
        %v673 = vld [vmem:[%s194 + $0xe08] sm:$0xff]
        %v674 = vld [vmem:[%s194 + $0xe10] sm:$0xff]
        %v675 = vld [vmem:[%s194 + $0xe18] sm:$0xff]
        %v676 = vld [vmem:[%s194 + $0xe20] sm:$0xff]
        %v677 = vld [vmem:[%s194 + $0xe28] sm:$0xff]
        %v678 = vld [vmem:[%s194 + $0xe30] sm:$0xff]
        %v679 = vld [vmem:[%s194 + $0xe38] sm:$0xff]
        %v680 = vld [vmem:[%s194 + $0xe40] sm:$0xff]
        %v681 = vld [vmem:[%s194 + $0xe48] sm:$0xff]
        %v682 = vld [vmem:[%s194 + $0xe50] sm:$0xff]
        %v683 = vld [vmem:[%s194 + $0xe58] sm:$0xff]
        %v684 = vld [vmem:[%s194 + $0xe60] sm:$0xff]
        %v685 = vld [vmem:[%s194 + $0xe68] sm:$0xff]
        %v686 = vld [vmem:[%s194 + $0xe70] sm:$0xff]
        %v687 = vld [vmem:[%s194 + $0xe78] sm:$0xff]
        %v688 = vld [vmem:[%s194 + $0xe80] sm:$0xff]
        %v689 = vld [vmem:[%s194 + $0xe88] sm:$0xff]
        %v690 = vld [vmem:[%s194 + $0xe90] sm:$0xff]
        %v691 = vld [vmem:[%s194 + $0xe98] sm:$0xff]
        %v692 = vld [vmem:[%s194 + $0xea0] sm:$0xff]
        %v693 = vld [vmem:[%s194 + $0xea8] sm:$0xff]
        %v694 = vld [vmem:[%s194 + $0xeb0] sm:$0xff]
        %v695 = vld [vmem:[%s194 + $0xeb8] sm:$0xff]
        %v696 = vld [vmem:[%s194 + $0xec0] sm:$0xff]
        %v697 = vld [vmem:[%s194 + $0xec8] sm:$0xff]
        %v698 = vld [vmem:[%s194 + $0xed0] sm:$0xff]
        %v699 = vld [vmem:[%s194 + $0xed8] sm:$0xff]
        %v700 = vld [vmem:[%s194 + $0xee0] sm:$0xff]
        %v701 = vld [vmem:[%s194 + $0xee8] sm:$0xff]
        %v702 = vld [vmem:[%s194 + $0xef0] sm:$0xff]
        %v703 = vld [vmem:[%s194 + $0xef8] sm:$0xff]
        %v704 = vld [vmem:[%s194 + $0xf00] sm:$0xff]
        %v705 = vld [vmem:[%s194 + $0xf08] sm:$0xff]
        %v706 = vld [vmem:[%s194 + $0xf10] sm:$0xff]
        %v707 = vld [vmem:[%s194 + $0xf18] sm:$0xff]
        %v708 = vld [vmem:[%s194 + $0xf20] sm:$0xff]
        %v709 = vld [vmem:[%s194 + $0xf28] sm:$0xff]
        %v710 = vld [vmem:[%s194 + $0xf30] sm:$0xff]
        %v711 = vld [vmem:[%s194 + $0xf38] sm:$0xff]
        %v712 = vld [vmem:[%s194 + $0xf40] sm:$0xff]
        %v713 = vld [vmem:[%s194 + $0xf48] sm:$0xff]
        %v714 = vld [vmem:[%s194 + $0xf50] sm:$0xff]
        %v715 = vld [vmem:[%s194 + $0xf58] sm:$0xff]
        %v716 = vld [vmem:[%s194 + $0xf60] sm:$0xff]
        %v717 = vld [vmem:[%s194 + $0xf68] sm:$0xff]
        %v718 = vld [vmem:[%s194 + $0xf70] sm:$0xff]
        %v719 = vld [vmem:[%s194 + $0xf78] sm:$0xff]
        %v720 = vld [vmem:[%s194 + $0xf80] sm:$0xff]
        %v721 = vld [vmem:[%s194 + $0xf88] sm:$0xff]
        %v722 = vld [vmem:[%s194 + $0xf90] sm:$0xff]
        %v723 = vld [vmem:[%s194 + $0xf98] sm:$0xff]
        %v724 = vld [vmem:[%s194 + $0xfa0] sm:$0xff]
        %v725 = vld [vmem:[%s194 + $0xfa8] sm:$0xff]
        %v726 = vld [vmem:[%s194 + $0xfb0] sm:$0xff]
        %v727 = vld [vmem:[%s194 + $0xfb8] sm:$0xff]
        %v728 = vld [vmem:[%s194 + $0xfc0] sm:$0xff]
        %v729 = vld [vmem:[%s194 + $0xfc8] sm:$0xff]
        %v730 = vld [vmem:[%s194 + $0xfd0] sm:$0xff]
        %v731 = vld [vmem:[%s194 + $0xfd8] sm:$0xff]
        %v732 = vld [vmem:[%s194 + $0xfe0] sm:$0xff]
        %v733 = vld [vmem:[%s194 + $0xfe8] sm:$0xff]
        %v734 = vld [vmem:[%s194 + $0xff0] sm:$0xff]
        %v735 = vld [vmem:[%s194 + $0xff8] sm:$0xff]
        %v736 = vld [vmem:[%s211] sm:$0xff]
        %v737 = vld [vmem:[%s211 + $0x8] sm:$0xff]
        %v738 = vld [vmem:[%s211 + $0x10] sm:$0xff]
        %v739 = vld [vmem:[%s211 + $0x18] sm:$0xff]
        %v740 = vld [vmem:[%s211 + $0x20] sm:$0xff]
        %v741 = vld [vmem:[%s211 + $0x28] sm:$0xff]
        %v742 = vld [vmem:[%s211 + $0x30] sm:$0xff]
        %v743 = vld [vmem:[%s211 + $0x38] sm:$0xff]
        %v744 = vld [vmem:[%s211 + $0x40] sm:$0xff]
        %v745 = vld [vmem:[%s211 + $0x48] sm:$0xff]
        %v746 = vld [vmem:[%s211 + $0x50] sm:$0xff]
        %v747 = vld [vmem:[%s211 + $0x58] sm:$0xff]
        %v748 = vld [vmem:[%s211 + $0x60] sm:$0xff]
        %v749 = vld [vmem:[%s211 + $0x68] sm:$0xff]
        %v750 = vld [vmem:[%s211 + $0x70] sm:$0xff]
        %v751 = vld [vmem:[%s211 + $0x78] sm:$0xff]
        %v752 = vld [vmem:[%s211 + $0x80] sm:$0xff]
        %v753 = vld [vmem:[%s211 + $0x88] sm:$0xff]
        %v754 = vld [vmem:[%s211 + $0x90] sm:$0xff]
        %v755 = vld [vmem:[%s211 + $0x98] sm:$0xff]
        %v756 = vld [vmem:[%s211 + $0xa0] sm:$0xff]
        %v757 = vld [vmem:[%s211 + $0xa8] sm:$0xff]
        %v758 = vld [vmem:[%s211 + $0xb0] sm:$0xff]
        %v759 = vld [vmem:[%s211 + $0xb8] sm:$0xff]
        %v760 = vld [vmem:[%s211 + $0xc0] sm:$0xff]
        %v761 = vld [vmem:[%s211 + $0xc8] sm:$0xff]
        %v762 = vld [vmem:[%s211 + $0xd0] sm:$0xff]
        %v763 = vld [vmem:[%s211 + $0xd8] sm:$0xff]
        %v764 = vld [vmem:[%s211 + $0xe0] sm:$0xff]
        %v765 = vld [vmem:[%s211 + $0xe8] sm:$0xff]
        %v766 = vld [vmem:[%s211 + $0xf0] sm:$0xff]
        %v767 = vld [vmem:[%s211 + $0xf8] sm:$0xff]
        %v768 = vld [vmem:[%s211 + $0x100] sm:$0xff]
        %v769 = vld [vmem:[%s211 + $0x108] sm:$0xff]
        %v770 = vld [vmem:[%s211 + $0x110] sm:$0xff]
        %v771 = vld [vmem:[%s211 + $0x118] sm:$0xff]
        %v772 = vld [vmem:[%s211 + $0x120] sm:$0xff]
        %v773 = vld [vmem:[%s211 + $0x128] sm:$0xff]
        %v774 = vld [vmem:[%s211 + $0x130] sm:$0xff]
        %v775 = vld [vmem:[%s211 + $0x138] sm:$0xff]
        %v776 = vld [vmem:[%s211 + $0x140] sm:$0xff]
        %v777 = vld [vmem:[%s211 + $0x148] sm:$0xff]
        %v778 = vld [vmem:[%s211 + $0x150] sm:$0xff]
        %v779 = vld [vmem:[%s211 + $0x158] sm:$0xff]
        %v780 = vld [vmem:[%s211 + $0x160] sm:$0xff]
        %v781 = vld [vmem:[%s211 + $0x168] sm:$0xff]
        %v782 = vld [vmem:[%s211 + $0x170] sm:$0xff]
        %v783 = vld [vmem:[%s211 + $0x178] sm:$0xff]
        %v784 = vld [vmem:[%s211 + $0x180] sm:$0xff]
        %v785 = vld [vmem:[%s211 + $0x188] sm:$0xff]
        %v786 = vld [vmem:[%s211 + $0x190] sm:$0xff]
        %v787 = vld [vmem:[%s211 + $0x198] sm:$0xff]
        %v788 = vld [vmem:[%s211 + $0x1a0] sm:$0xff]
        %v789 = vld [vmem:[%s211 + $0x1a8] sm:$0xff]
        %v790 = vld [vmem:[%s211 + $0x1b0] sm:$0xff]
        %v791 = vld [vmem:[%s211 + $0x1b8] sm:$0xff]
        %v792 = vld [vmem:[%s211 + $0x1c0] sm:$0xff]
        %v793 = vld [vmem:[%s211 + $0x1c8] sm:$0xff]
        %v794 = vld [vmem:[%s211 + $0x1d0] sm:$0xff]
        %v795 = vld [vmem:[%s211 + $0x1d8] sm:$0xff]
        %v796 = vld [vmem:[%s211 + $0x1e0] sm:$0xff]
        %v797 = vld [vmem:[%s211 + $0x1e8] sm:$0xff]
        %v798 = vld [vmem:[%s211 + $0x1f0] sm:$0xff]
        %v799 = vld [vmem:[%s211 + $0x1f8] sm:$0xff]
        %v800 = vld [vmem:[%s211 + $0x200] sm:$0xff]
        %v801 = vld [vmem:[%s211 + $0x208] sm:$0xff]
        %v802 = vld [vmem:[%s211 + $0x210] sm:$0xff]
        %v803 = vld [vmem:[%s211 + $0x218] sm:$0xff]
        %v804 = vld [vmem:[%s211 + $0x220] sm:$0xff]
        %v805 = vld [vmem:[%s211 + $0x228] sm:$0xff]
        %v806 = vld [vmem:[%s211 + $0x230] sm:$0xff]
        %v807 = vld [vmem:[%s211 + $0x238] sm:$0xff]
        %v808 = vld [vmem:[%s211 + $0x240] sm:$0xff]
        %v809 = vld [vmem:[%s211 + $0x248] sm:$0xff]
        %v810 = vld [vmem:[%s211 + $0x250] sm:$0xff]
        %v811 = vld [vmem:[%s211 + $0x258] sm:$0xff]
        %v812 = vld [vmem:[%s211 + $0x260] sm:$0xff]
        %v813 = vld [vmem:[%s211 + $0x268] sm:$0xff]
        %v814 = vld [vmem:[%s211 + $0x270] sm:$0xff]
        %v815 = vld [vmem:[%s211 + $0x278] sm:$0xff]
        %v816 = vld [vmem:[%s211 + $0x280] sm:$0xff]
        %v817 = vld [vmem:[%s211 + $0x288] sm:$0xff]
        %v818 = vld [vmem:[%s211 + $0x290] sm:$0xff]
        %v819 = vld [vmem:[%s211 + $0x298] sm:$0xff]
        %v820 = vld [vmem:[%s211 + $0x2a0] sm:$0xff]
        %v821 = vld [vmem:[%s211 + $0x2a8] sm:$0xff]
        %v822 = vld [vmem:[%s211 + $0x2b0] sm:$0xff]
        %v823 = vld [vmem:[%s211 + $0x2b8] sm:$0xff]
        %v824 = vld [vmem:[%s211 + $0x2c0] sm:$0xff]
        %v825 = vld [vmem:[%s211 + $0x2c8] sm:$0xff]
        %v826 = vld [vmem:[%s211 + $0x2d0] sm:$0xff]
        %v827 = vld [vmem:[%s211 + $0x2d8] sm:$0xff]
        %v828 = vld [vmem:[%s211 + $0x2e0] sm:$0xff]
        %v829 = vld [vmem:[%s211 + $0x2e8] sm:$0xff]
        %v830 = vld [vmem:[%s211 + $0x2f0] sm:$0xff]
        %v831 = vld [vmem:[%s211 + $0x2f8] sm:$0xff]
        %v832 = vld [vmem:[%s211 + $0x300] sm:$0xff]
        %v833 = vld [vmem:[%s211 + $0x308] sm:$0xff]
        %v834 = vld [vmem:[%s211 + $0x310] sm:$0xff]
        %v835 = vld [vmem:[%s211 + $0x318] sm:$0xff]
        %v836 = vld [vmem:[%s211 + $0x320] sm:$0xff]
        %v837 = vld [vmem:[%s211 + $0x328] sm:$0xff]
        %v838 = vld [vmem:[%s211 + $0x330] sm:$0xff]
        %v839 = vld [vmem:[%s211 + $0x338] sm:$0xff]
        %v840 = vld [vmem:[%s211 + $0x340] sm:$0xff]
        %v841 = vld [vmem:[%s211 + $0x348] sm:$0xff]
        %v842 = vld [vmem:[%s211 + $0x350] sm:$0xff]
        %v843 = vld [vmem:[%s211 + $0x358] sm:$0xff]
        %v844 = vld [vmem:[%s211 + $0x360] sm:$0xff]
        %v845 = vld [vmem:[%s211 + $0x368] sm:$0xff]
        %v846 = vld [vmem:[%s211 + $0x370] sm:$0xff]
        %v847 = vld [vmem:[%s211 + $0x378] sm:$0xff]
        %v848 = vld [vmem:[%s211 + $0x380] sm:$0xff]
        %v849 = vld [vmem:[%s211 + $0x388] sm:$0xff]
        %v850 = vld [vmem:[%s211 + $0x390] sm:$0xff]
        %v851 = vld [vmem:[%s211 + $0x398] sm:$0xff]
        %v852 = vld [vmem:[%s211 + $0x3a0] sm:$0xff]
        %v853 = vld [vmem:[%s211 + $0x3a8] sm:$0xff]
        %v854 = vld [vmem:[%s211 + $0x3b0] sm:$0xff]
        %v855 = vld [vmem:[%s211 + $0x3b8] sm:$0xff]
        %v856 = vld [vmem:[%s211 + $0x3c0] sm:$0xff]
        %v857 = vld [vmem:[%s211 + $0x3c8] sm:$0xff]
        %v858 = vld [vmem:[%s211 + $0x3d0] sm:$0xff]
        %v859 = vld [vmem:[%s211 + $0x3d8] sm:$0xff]
        %v860 = vld [vmem:[%s211 + $0x3e0] sm:$0xff]
        %v861 = vld [vmem:[%s211 + $0x3e8] sm:$0xff]
        %v862 = vld [vmem:[%s211 + $0x3f0] sm:$0xff]
        %v863 = vld [vmem:[%s211 + $0x3f8] sm:$0xff]
        %v864 = vld [vmem:[%s211 + $0x400] sm:$0xff]
        %v865 = vld [vmem:[%s211 + $0x408] sm:$0xff]
        %v866 = vld [vmem:[%s211 + $0x410] sm:$0xff]
        %v867 = vld [vmem:[%s211 + $0x418] sm:$0xff]
        %v868 = vld [vmem:[%s211 + $0x420] sm:$0xff]
        %v869 = vld [vmem:[%s211 + $0x428] sm:$0xff]
        %v870 = vld [vmem:[%s211 + $0x430] sm:$0xff]
        %v871 = vld [vmem:[%s211 + $0x438] sm:$0xff]
        %v872 = vld [vmem:[%s211 + $0x440] sm:$0xff]
        %v873 = vld [vmem:[%s211 + $0x448] sm:$0xff]
        %v874 = vld [vmem:[%s211 + $0x450] sm:$0xff]
        %v875 = vld [vmem:[%s211 + $0x458] sm:$0xff]
        %v876 = vld [vmem:[%s211 + $0x460] sm:$0xff]
        %v877 = vld [vmem:[%s211 + $0x468] sm:$0xff]
        %v878 = vld [vmem:[%s211 + $0x470] sm:$0xff]
        %v879 = vld [vmem:[%s211 + $0x478] sm:$0xff]
        %v880 = vld [vmem:[%s211 + $0x480] sm:$0xff]
        %v881 = vld [vmem:[%s211 + $0x488] sm:$0xff]
        %v882 = vld [vmem:[%s211 + $0x490] sm:$0xff]
        %v883 = vld [vmem:[%s211 + $0x498] sm:$0xff]
        %v884 = vld [vmem:[%s211 + $0x4a0] sm:$0xff]
        %v885 = vld [vmem:[%s211 + $0x4a8] sm:$0xff]
        %v886 = vld [vmem:[%s211 + $0x4b0] sm:$0xff]
        %v887 = vld [vmem:[%s211 + $0x4b8] sm:$0xff]
        %v888 = vld [vmem:[%s211 + $0x4c0] sm:$0xff]
        %v889 = vld [vmem:[%s211 + $0x4c8] sm:$0xff]
        %v890 = vld [vmem:[%s211 + $0x4d0] sm:$0xff]
        %v891 = vld [vmem:[%s211 + $0x4d8] sm:$0xff]
        %v892 = vld [vmem:[%s211 + $0x4e0] sm:$0xff]
        %v893 = vld [vmem:[%s211 + $0x4e8] sm:$0xff]
        %v894 = vld [vmem:[%s211 + $0x4f0] sm:$0xff]
        %v895 = vld [vmem:[%s211 + $0x4f8] sm:$0xff]
        %v896 = vld [vmem:[%s211 + $0x500] sm:$0xff]
        %v897 = vld [vmem:[%s211 + $0x508] sm:$0xff]
        %v898 = vld [vmem:[%s211 + $0x510] sm:$0xff]
        %v899 = vld [vmem:[%s211 + $0x518] sm:$0xff]
        %v900 = vld [vmem:[%s211 + $0x520] sm:$0xff]
        %v901 = vld [vmem:[%s211 + $0x528] sm:$0xff]
        %v902 = vld [vmem:[%s211 + $0x530] sm:$0xff]
        %v903 = vld [vmem:[%s211 + $0x538] sm:$0xff]
        %v904 = vld [vmem:[%s211 + $0x540] sm:$0xff]
        %v905 = vld [vmem:[%s211 + $0x548] sm:$0xff]
        %v906 = vld [vmem:[%s211 + $0x550] sm:$0xff]
        %v907 = vld [vmem:[%s211 + $0x558] sm:$0xff]
        %v908 = vld [vmem:[%s211 + $0x560] sm:$0xff]
        %v909 = vld [vmem:[%s211 + $0x568] sm:$0xff]
        %v910 = vld [vmem:[%s211 + $0x570] sm:$0xff]
        %v911 = vld [vmem:[%s211 + $0x578] sm:$0xff]
        %v912 = vld [vmem:[%s211 + $0x580] sm:$0xff]
        %v913 = vld [vmem:[%s211 + $0x588] sm:$0xff]
        %v914 = vld [vmem:[%s211 + $0x590] sm:$0xff]
        %v915 = vld [vmem:[%s211 + $0x598] sm:$0xff]
        %v916 = vld [vmem:[%s211 + $0x5a0] sm:$0xff]
        %v917 = vld [vmem:[%s211 + $0x5a8] sm:$0xff]
        %v918 = vld [vmem:[%s211 + $0x5b0] sm:$0xff]
        %v919 = vld [vmem:[%s211 + $0x5b8] sm:$0xff]
        %v920 = vld [vmem:[%s211 + $0x5c0] sm:$0xff]
        %v921 = vld [vmem:[%s211 + $0x5c8] sm:$0xff]
        %v922 = vld [vmem:[%s211 + $0x5d0] sm:$0xff]
        %v923 = vld [vmem:[%s211 + $0x5d8] sm:$0xff]
        %v924 = vld [vmem:[%s211 + $0x5e0] sm:$0xff]
        %v925 = vld [vmem:[%s211 + $0x5e8] sm:$0xff]
        %v926 = vld [vmem:[%s211 + $0x5f0] sm:$0xff]
        %v927 = vld [vmem:[%s211 + $0x5f8] sm:$0xff]
        %v928 = vld [vmem:[%s211 + $0x600] sm:$0xff]
        %v929 = vld [vmem:[%s211 + $0x608] sm:$0xff]
        %v930 = vld [vmem:[%s211 + $0x610] sm:$0xff]
        %v931 = vld [vmem:[%s211 + $0x618] sm:$0xff]
        %v932 = vld [vmem:[%s211 + $0x620] sm:$0xff]
        %v933 = vld [vmem:[%s211 + $0x628] sm:$0xff]
        %v934 = vld [vmem:[%s211 + $0x630] sm:$0xff]
        %v935 = vld [vmem:[%s211 + $0x638] sm:$0xff]
        %v936 = vld [vmem:[%s211 + $0x640] sm:$0xff]
        %v937 = vld [vmem:[%s211 + $0x648] sm:$0xff]
        %v938 = vld [vmem:[%s211 + $0x650] sm:$0xff]
        %v939 = vld [vmem:[%s211 + $0x658] sm:$0xff]
        %v940 = vld [vmem:[%s211 + $0x660] sm:$0xff]
        %v941 = vld [vmem:[%s211 + $0x668] sm:$0xff]
        %v942 = vld [vmem:[%s211 + $0x670] sm:$0xff]
        %v943 = vld [vmem:[%s211 + $0x678] sm:$0xff]
        %v944 = vld [vmem:[%s211 + $0x680] sm:$0xff]
        %v945 = vld [vmem:[%s211 + $0x688] sm:$0xff]
        %v946 = vld [vmem:[%s211 + $0x690] sm:$0xff]
        %v947 = vld [vmem:[%s211 + $0x698] sm:$0xff]
        %v948 = vld [vmem:[%s211 + $0x6a0] sm:$0xff]
        %v949 = vld [vmem:[%s211 + $0x6a8] sm:$0xff]
        %v950 = vld [vmem:[%s211 + $0x6b0] sm:$0xff]
        %v951 = vld [vmem:[%s211 + $0x6b8] sm:$0xff]
        %v952 = vld [vmem:[%s211 + $0x6c0] sm:$0xff]
        %v953 = vld [vmem:[%s211 + $0x6c8] sm:$0xff]
        %v954 = vld [vmem:[%s211 + $0x6d0] sm:$0xff]
        %v955 = vld [vmem:[%s211 + $0x6d8] sm:$0xff]
        %v956 = vld [vmem:[%s211 + $0x6e0] sm:$0xff]
        %v957 = vld [vmem:[%s211 + $0x6e8] sm:$0xff]
        %v958 = vld [vmem:[%s211 + $0x6f0] sm:$0xff]
        %v959 = vld [vmem:[%s211 + $0x6f8] sm:$0xff]
        %v960 = vld [vmem:[%s211 + $0x700] sm:$0xff]
        %v961 = vld [vmem:[%s211 + $0x708] sm:$0xff]
        %v962 = vld [vmem:[%s211 + $0x710] sm:$0xff]
        %v963 = vld [vmem:[%s211 + $0x718] sm:$0xff]
        %v964 = vld [vmem:[%s211 + $0x720] sm:$0xff]
        %v965 = vld [vmem:[%s211 + $0x728] sm:$0xff]
        %v966 = vld [vmem:[%s211 + $0x730] sm:$0xff]
        %v967 = vld [vmem:[%s211 + $0x738] sm:$0xff]
        %v968 = vld [vmem:[%s211 + $0x740] sm:$0xff]
        %v969 = vld [vmem:[%s211 + $0x748] sm:$0xff]
        %v970 = vld [vmem:[%s211 + $0x750] sm:$0xff]
        %v971 = vld [vmem:[%s211 + $0x758] sm:$0xff]
        %v972 = vld [vmem:[%s211 + $0x760] sm:$0xff]
        %v973 = vld [vmem:[%s211 + $0x768] sm:$0xff]
        %v974 = vld [vmem:[%s211 + $0x770] sm:$0xff]
        %v975 = vld [vmem:[%s211 + $0x778] sm:$0xff]
        %v976 = vld [vmem:[%s211 + $0x780] sm:$0xff]
        %v977 = vld [vmem:[%s211 + $0x788] sm:$0xff]
        %v978 = vld [vmem:[%s211 + $0x790] sm:$0xff]
        %v979 = vld [vmem:[%s211 + $0x798] sm:$0xff]
        %v980 = vld [vmem:[%s211 + $0x7a0] sm:$0xff]
        %v981 = vld [vmem:[%s211 + $0x7a8] sm:$0xff]
        %v982 = vld [vmem:[%s211 + $0x7b0] sm:$0xff]
        %v983 = vld [vmem:[%s211 + $0x7b8] sm:$0xff]
        %v984 = vld [vmem:[%s211 + $0x7c0] sm:$0xff]
        %v985 = vld [vmem:[%s211 + $0x7c8] sm:$0xff]
        %v986 = vld [vmem:[%s211 + $0x7d0] sm:$0xff]
        %v987 = vld [vmem:[%s211 + $0x7d8] sm:$0xff]
        %v988 = vld [vmem:[%s211 + $0x7e0] sm:$0xff]
        %v989 = vld [vmem:[%s211 + $0x7e8] sm:$0xff]
        %v990 = vld [vmem:[%s211 + $0x7f0] sm:$0xff]
        %v991 = vld [vmem:[%s211 + $0x7f8] sm:$0xff]
        %v992 = vld [vmem:[%s211 + $0x800] sm:$0xff]
        %v993 = vld [vmem:[%s211 + $0x808] sm:$0xff]
        %v994 = vld [vmem:[%s211 + $0x810] sm:$0xff]
        %v995 = vld [vmem:[%s211 + $0x818] sm:$0xff]
        %v996 = vld [vmem:[%s211 + $0x820] sm:$0xff]
        %v997 = vld [vmem:[%s211 + $0x828] sm:$0xff]
        %v998 = vld [vmem:[%s211 + $0x830] sm:$0xff]
        %v999 = vld [vmem:[%s211 + $0x838] sm:$0xff]
        %v1000 = vld [vmem:[%s211 + $0x840] sm:$0xff]
        %v1001 = vld [vmem:[%s211 + $0x848] sm:$0xff]
        %v1002 = vld [vmem:[%s211 + $0x850] sm:$0xff]
        %v1003 = vld [vmem:[%s211 + $0x858] sm:$0xff]
        %v1004 = vld [vmem:[%s211 + $0x860] sm:$0xff]
        %v1005 = vld [vmem:[%s211 + $0x868] sm:$0xff]
        %v1006 = vld [vmem:[%s211 + $0x870] sm:$0xff]
        %v1007 = vld [vmem:[%s211 + $0x878] sm:$0xff]
        %v1008 = vld [vmem:[%s211 + $0x880] sm:$0xff]
        %v1009 = vld [vmem:[%s211 + $0x888] sm:$0xff]
        %v1010 = vld [vmem:[%s211 + $0x890] sm:$0xff]
        %v1011 = vld [vmem:[%s211 + $0x898] sm:$0xff]
        %v1012 = vld [vmem:[%s211 + $0x8a0] sm:$0xff]
        %v1013 = vld [vmem:[%s211 + $0x8a8] sm:$0xff]
        %v1014 = vld [vmem:[%s211 + $0x8b0] sm:$0xff]
        %v1015 = vld [vmem:[%s211 + $0x8b8] sm:$0xff]
        %v1016 = vld [vmem:[%s211 + $0x8c0] sm:$0xff]
        %v1017 = vld [vmem:[%s211 + $0x8c8] sm:$0xff]
        %v1018 = vld [vmem:[%s211 + $0x8d0] sm:$0xff]
        %v1019 = vld [vmem:[%s211 + $0x8d8] sm:$0xff]
        %v1020 = vld [vmem:[%s211 + $0x8e0] sm:$0xff]
        %v1021 = vld [vmem:[%s211 + $0x8e8] sm:$0xff]
        %v1022 = vld [vmem:[%s211 + $0x8f0] sm:$0xff]
        %v1023 = vld [vmem:[%s211 + $0x8f8] sm:$0xff]
        %v1024 = vld [vmem:[%s211 + $0x900] sm:$0xff]
        %v1025 = vld [vmem:[%s211 + $0x908] sm:$0xff]
        %v1026 = vld [vmem:[%s211 + $0x910] sm:$0xff]
        %v1027 = vld [vmem:[%s211 + $0x918] sm:$0xff]
        %v1028 = vld [vmem:[%s211 + $0x920] sm:$0xff]
        %v1029 = vld [vmem:[%s211 + $0x928] sm:$0xff]
        %v1030 = vld [vmem:[%s211 + $0x930] sm:$0xff]
        %v1031 = vld [vmem:[%s211 + $0x938] sm:$0xff]
        %v1032 = vld [vmem:[%s211 + $0x940] sm:$0xff]
        %v1033 = vld [vmem:[%s211 + $0x948] sm:$0xff]
        %v1034 = vld [vmem:[%s211 + $0x950] sm:$0xff]
        %v1035 = vld [vmem:[%s211 + $0x958] sm:$0xff]
        %v1036 = vld [vmem:[%s211 + $0x960] sm:$0xff]
        %v1037 = vld [vmem:[%s211 + $0x968] sm:$0xff]
        %v1038 = vld [vmem:[%s211 + $0x970] sm:$0xff]
        %v1039 = vld [vmem:[%s211 + $0x978] sm:$0xff]
        %v1040 = vld [vmem:[%s211 + $0x980] sm:$0xff]
        %v1041 = vld [vmem:[%s211 + $0x988] sm:$0xff]
        %v1042 = vld [vmem:[%s211 + $0x990] sm:$0xff]
        %v1043 = vld [vmem:[%s211 + $0x998] sm:$0xff]
        %v1044 = vld [vmem:[%s211 + $0x9a0] sm:$0xff]
        %v1045 = vld [vmem:[%s211 + $0x9a8] sm:$0xff]
        %v1046 = vld [vmem:[%s211 + $0x9b0] sm:$0xff]
        %v1047 = vld [vmem:[%s211 + $0x9b8] sm:$0xff]
        %v1048 = vld [vmem:[%s211 + $0x9c0] sm:$0xff]
        %v1049 = vld [vmem:[%s211 + $0x9c8] sm:$0xff]
        %v1050 = vld [vmem:[%s211 + $0x9d0] sm:$0xff]
        %v1051 = vld [vmem:[%s211 + $0x9d8] sm:$0xff]
        %v1052 = vld [vmem:[%s211 + $0x9e0] sm:$0xff]
        %v1053 = vld [vmem:[%s211 + $0x9e8] sm:$0xff]
        %v1054 = vld [vmem:[%s211 + $0x9f0] sm:$0xff]
        %v1055 = vld [vmem:[%s211 + $0x9f8] sm:$0xff]
        %v1056 = vld [vmem:[%s211 + $0xa00] sm:$0xff]
        %v1057 = vld [vmem:[%s211 + $0xa08] sm:$0xff]
        %v1058 = vld [vmem:[%s211 + $0xa10] sm:$0xff]
        %v1059 = vld [vmem:[%s211 + $0xa18] sm:$0xff]
        %v1060 = vld [vmem:[%s211 + $0xa20] sm:$0xff]
        %v1061 = vld [vmem:[%s211 + $0xa28] sm:$0xff]
        %v1062 = vld [vmem:[%s211 + $0xa30] sm:$0xff]
        %v1063 = vld [vmem:[%s211 + $0xa38] sm:$0xff]
        %v1064 = vld [vmem:[%s211 + $0xa40] sm:$0xff]
        %v1065 = vld [vmem:[%s211 + $0xa48] sm:$0xff]
        %v1066 = vld [vmem:[%s211 + $0xa50] sm:$0xff]
        %v1067 = vld [vmem:[%s211 + $0xa58] sm:$0xff]
        %v1068 = vld [vmem:[%s211 + $0xa60] sm:$0xff]
        %v1069 = vld [vmem:[%s211 + $0xa68] sm:$0xff]
        %v1070 = vld [vmem:[%s211 + $0xa70] sm:$0xff]
        %v1071 = vld [vmem:[%s211 + $0xa78] sm:$0xff]
        %v1072 = vld [vmem:[%s211 + $0xa80] sm:$0xff]
        %v1073 = vld [vmem:[%s211 + $0xa88] sm:$0xff]
        %v1074 = vld [vmem:[%s211 + $0xa90] sm:$0xff]
        %v1075 = vld [vmem:[%s211 + $0xa98] sm:$0xff]
        %v1076 = vld [vmem:[%s211 + $0xaa0] sm:$0xff]
        %v1077 = vld [vmem:[%s211 + $0xaa8] sm:$0xff]
        %v1078 = vld [vmem:[%s211 + $0xab0] sm:$0xff]
        %v1079 = vld [vmem:[%s211 + $0xab8] sm:$0xff]
        %v1080 = vld [vmem:[%s211 + $0xac0] sm:$0xff]
        %v1081 = vld [vmem:[%s211 + $0xac8] sm:$0xff]
        %v1082 = vld [vmem:[%s211 + $0xad0] sm:$0xff]
        %v1083 = vld [vmem:[%s211 + $0xad8] sm:$0xff]
        %v1084 = vld [vmem:[%s211 + $0xae0] sm:$0xff]
        %v1085 = vld [vmem:[%s211 + $0xae8] sm:$0xff]
        %v1086 = vld [vmem:[%s211 + $0xaf0] sm:$0xff]
        %v1087 = vld [vmem:[%s211 + $0xaf8] sm:$0xff]
        %v1088 = vld [vmem:[%s211 + $0xb00] sm:$0xff]
        %v1089 = vld [vmem:[%s211 + $0xb08] sm:$0xff]
        %v1090 = vld [vmem:[%s211 + $0xb10] sm:$0xff]
        %v1091 = vld [vmem:[%s211 + $0xb18] sm:$0xff]
        %v1092 = vld [vmem:[%s211 + $0xb20] sm:$0xff]
        %v1093 = vld [vmem:[%s211 + $0xb28] sm:$0xff]
        %v1094 = vld [vmem:[%s211 + $0xb30] sm:$0xff]
        %v1095 = vld [vmem:[%s211 + $0xb38] sm:$0xff]
        %v1096 = vld [vmem:[%s211 + $0xb40] sm:$0xff]
        %v1097 = vld [vmem:[%s211 + $0xb48] sm:$0xff]
        %v1098 = vld [vmem:[%s211 + $0xb50] sm:$0xff]
        %v1099 = vld [vmem:[%s211 + $0xb58] sm:$0xff]
        %v1100 = vld [vmem:[%s211 + $0xb60] sm:$0xff]
        %v1101 = vld [vmem:[%s211 + $0xb68] sm:$0xff]
        %v1102 = vld [vmem:[%s211 + $0xb70] sm:$0xff]
        %v1103 = vld [vmem:[%s211 + $0xb78] sm:$0xff]
        %v1104 = vld [vmem:[%s211 + $0xb80] sm:$0xff]
        %v1105 = vld [vmem:[%s211 + $0xb88] sm:$0xff]
        %v1106 = vld [vmem:[%s211 + $0xb90] sm:$0xff]
        %v1107 = vld [vmem:[%s211 + $0xb98] sm:$0xff]
        %v1108 = vld [vmem:[%s211 + $0xba0] sm:$0xff]
        %v1109 = vld [vmem:[%s211 + $0xba8] sm:$0xff]
        %v1110 = vld [vmem:[%s211 + $0xbb0] sm:$0xff]
        %v1111 = vld [vmem:[%s211 + $0xbb8] sm:$0xff]
        %v1112 = vld [vmem:[%s211 + $0xbc0] sm:$0xff]
        %v1113 = vld [vmem:[%s211 + $0xbc8] sm:$0xff]
        %v1114 = vld [vmem:[%s211 + $0xbd0] sm:$0xff]
        %v1115 = vld [vmem:[%s211 + $0xbd8] sm:$0xff]
        %v1116 = vld [vmem:[%s211 + $0xbe0] sm:$0xff]
        %v1117 = vld [vmem:[%s211 + $0xbe8] sm:$0xff]
        %v1118 = vld [vmem:[%s211 + $0xbf0] sm:$0xff]
        %v1119 = vld [vmem:[%s211 + $0xbf8] sm:$0xff]
        %v1120 = vld [vmem:[%s211 + $0xc00] sm:$0xff]
        %v1121 = vld [vmem:[%s211 + $0xc08] sm:$0xff]
        %v1122 = vld [vmem:[%s211 + $0xc10] sm:$0xff]
        %v1123 = vld [vmem:[%s211 + $0xc18] sm:$0xff]
        %v1124 = vld [vmem:[%s211 + $0xc20] sm:$0xff]
        %v1125 = vld [vmem:[%s211 + $0xc28] sm:$0xff]
        %v1126 = vld [vmem:[%s211 + $0xc30] sm:$0xff]
        %v1127 = vld [vmem:[%s211 + $0xc38] sm:$0xff]
        %v1128 = vld [vmem:[%s211 + $0xc40] sm:$0xff]
        %v1129 = vld [vmem:[%s211 + $0xc48] sm:$0xff]
        %v1130 = vld [vmem:[%s211 + $0xc50] sm:$0xff]
        %v1131 = vld [vmem:[%s211 + $0xc58] sm:$0xff]
        %v1132 = vld [vmem:[%s211 + $0xc60] sm:$0xff]
        %v1133 = vld [vmem:[%s211 + $0xc68] sm:$0xff]
        %v1134 = vld [vmem:[%s211 + $0xc70] sm:$0xff]
        %v1135 = vld [vmem:[%s211 + $0xc78] sm:$0xff]
        %v1136 = vld [vmem:[%s211 + $0xc80] sm:$0xff]
        %v1137 = vld [vmem:[%s211 + $0xc88] sm:$0xff]
        %v1138 = vld [vmem:[%s211 + $0xc90] sm:$0xff]
        %v1139 = vld [vmem:[%s211 + $0xc98] sm:$0xff]
        %v1140 = vld [vmem:[%s211 + $0xca0] sm:$0xff]
        %v1141 = vld [vmem:[%s211 + $0xca8] sm:$0xff]
        %v1142 = vld [vmem:[%s211 + $0xcb0] sm:$0xff]
        %v1143 = vld [vmem:[%s211 + $0xcb8] sm:$0xff]
        %v1144 = vld [vmem:[%s211 + $0xcc0] sm:$0xff]
        %v1145 = vld [vmem:[%s211 + $0xcc8] sm:$0xff]
        %v1146 = vld [vmem:[%s211 + $0xcd0] sm:$0xff]
        %v1147 = vld [vmem:[%s211 + $0xcd8] sm:$0xff]
        %v1148 = vld [vmem:[%s211 + $0xce0] sm:$0xff]
        %v1149 = vld [vmem:[%s211 + $0xce8] sm:$0xff]
        %v1150 = vld [vmem:[%s211 + $0xcf0] sm:$0xff]
        %v1151 = vld [vmem:[%s211 + $0xcf8] sm:$0xff]
        %v1152 = vld [vmem:[%s211 + $0xd00] sm:$0xff]
        %v1153 = vld [vmem:[%s211 + $0xd08] sm:$0xff]
        %v1154 = vld [vmem:[%s211 + $0xd10] sm:$0xff]
        %v1155 = vld [vmem:[%s211 + $0xd18] sm:$0xff]
        %v1156 = vld [vmem:[%s211 + $0xd20] sm:$0xff]
        %v1157 = vld [vmem:[%s211 + $0xd28] sm:$0xff]
        %v1158 = vld [vmem:[%s211 + $0xd30] sm:$0xff]
        %v1159 = vld [vmem:[%s211 + $0xd38] sm:$0xff]
        %v1160 = vld [vmem:[%s211 + $0xd40] sm:$0xff]
        %v1161 = vld [vmem:[%s211 + $0xd48] sm:$0xff]
        %v1162 = vld [vmem:[%s211 + $0xd50] sm:$0xff]
        %v1163 = vld [vmem:[%s211 + $0xd58] sm:$0xff]
        %v1164 = vld [vmem:[%s211 + $0xd60] sm:$0xff]
        %v1165 = vld [vmem:[%s211 + $0xd68] sm:$0xff]
        %v1166 = vld [vmem:[%s211 + $0xd70] sm:$0xff]
        %v1167 = vld [vmem:[%s211 + $0xd78] sm:$0xff]
        %v1168 = vld [vmem:[%s211 + $0xd80] sm:$0xff]
        %v1169 = vld [vmem:[%s211 + $0xd88] sm:$0xff]
        %v1170 = vld [vmem:[%s211 + $0xd90] sm:$0xff]
        %v1171 = vld [vmem:[%s211 + $0xd98] sm:$0xff]
        %v1172 = vld [vmem:[%s211 + $0xda0] sm:$0xff]
        %v1173 = vld [vmem:[%s211 + $0xda8] sm:$0xff]
        %v1174 = vld [vmem:[%s211 + $0xdb0] sm:$0xff]
        %v1175 = vld [vmem:[%s211 + $0xdb8] sm:$0xff]
        %v1176 = vld [vmem:[%s211 + $0xdc0] sm:$0xff]
        %v1177 = vld [vmem:[%s211 + $0xdc8] sm:$0xff]
        %v1178 = vld [vmem:[%s211 + $0xdd0] sm:$0xff]
        %v1179 = vld [vmem:[%s211 + $0xdd8] sm:$0xff]
        %v1180 = vld [vmem:[%s211 + $0xde0] sm:$0xff]
        %v1181 = vld [vmem:[%s211 + $0xde8] sm:$0xff]
        %v1182 = vld [vmem:[%s211 + $0xdf0] sm:$0xff]
        %v1183 = vld [vmem:[%s211 + $0xdf8] sm:$0xff]
        %v1184 = vld [vmem:[%s211 + $0xe00] sm:$0xff]
        %v1185 = vld [vmem:[%s211 + $0xe08] sm:$0xff]
        %v1186 = vld [vmem:[%s211 + $0xe10] sm:$0xff]
        %v1187 = vld [vmem:[%s211 + $0xe18] sm:$0xff]
        %v1188 = vld [vmem:[%s211 + $0xe20] sm:$0xff]
        %v1189 = vld [vmem:[%s211 + $0xe28] sm:$0xff]
        %v1190 = vld [vmem:[%s211 + $0xe30] sm:$0xff]
        %v1191 = vld [vmem:[%s211 + $0xe38] sm:$0xff]
        %v1192 = vld [vmem:[%s211 + $0xe40] sm:$0xff]
        %v1193 = vld [vmem:[%s211 + $0xe48] sm:$0xff]
        %v1194 = vld [vmem:[%s211 + $0xe50] sm:$0xff]
        %v1195 = vld [vmem:[%s211 + $0xe58] sm:$0xff]
        %v1196 = vld [vmem:[%s211 + $0xe60] sm:$0xff]
        %v1197 = vld [vmem:[%s211 + $0xe68] sm:$0xff]
        %v1198 = vld [vmem:[%s211 + $0xe70] sm:$0xff]
        %v1199 = vld [vmem:[%s211 + $0xe78] sm:$0xff]
        %v1200 = vld [vmem:[%s211 + $0xe80] sm:$0xff]
        %v1201 = vld [vmem:[%s211 + $0xe88] sm:$0xff]
        %v1202 = vld [vmem:[%s211 + $0xe90] sm:$0xff]
        %v1203 = vld [vmem:[%s211 + $0xe98] sm:$0xff]
        %v1204 = vld [vmem:[%s211 + $0xea0] sm:$0xff]
        %v1205 = vld [vmem:[%s211 + $0xea8] sm:$0xff]
        %v1206 = vld [vmem:[%s211 + $0xeb0] sm:$0xff]
        %v1207 = vld [vmem:[%s211 + $0xeb8] sm:$0xff]
        %v1208 = vld [vmem:[%s211 + $0xec0] sm:$0xff]
        %v1209 = vld [vmem:[%s211 + $0xec8] sm:$0xff]
        %v1210 = vld [vmem:[%s211 + $0xed0] sm:$0xff]
        %v1211 = vld [vmem:[%s211 + $0xed8] sm:$0xff]
        %v1212 = vld [vmem:[%s211 + $0xee0] sm:$0xff]
        %v1213 = vld [vmem:[%s211 + $0xee8] sm:$0xff]
        %v1214 = vld [vmem:[%s211 + $0xef0] sm:$0xff]
        %v1215 = vld [vmem:[%s211 + $0xef8] sm:$0xff]
        %v1216 = vld [vmem:[%s211 + $0xf00] sm:$0xff]
        %v1217 = vld [vmem:[%s211 + $0xf08] sm:$0xff]
        %v1218 = vld [vmem:[%s211 + $0xf10] sm:$0xff]
        %v1219 = vld [vmem:[%s211 + $0xf18] sm:$0xff]
        %v1220 = vld [vmem:[%s211 + $0xf20] sm:$0xff]
        %v1221 = vld [vmem:[%s211 + $0xf28] sm:$0xff]
        %v1222 = vld [vmem:[%s211 + $0xf30] sm:$0xff]
        %v1223 = vld [vmem:[%s211 + $0xf38] sm:$0xff]
        %v1224 = vld [vmem:[%s211 + $0xf40] sm:$0xff]
        %v1225 = vld [vmem:[%s211 + $0xf48] sm:$0xff]
        %v1226 = vld [vmem:[%s211 + $0xf50] sm:$0xff]
        %v1227 = vld [vmem:[%s211 + $0xf58] sm:$0xff]
        %v1228 = vld [vmem:[%s211 + $0xf60] sm:$0xff]
        %v1229 = vld [vmem:[%s211 + $0xf68] sm:$0xff]
        %v1230 = vld [vmem:[%s211 + $0xf70] sm:$0xff]
        %v1231 = vld [vmem:[%s211 + $0xf78] sm:$0xff]
        %v1232 = vld [vmem:[%s211 + $0xf80] sm:$0xff]
        %v1233 = vld [vmem:[%s211 + $0xf88] sm:$0xff]
        %v1234 = vld [vmem:[%s211 + $0xf90] sm:$0xff]
        %v1235 = vld [vmem:[%s211 + $0xf98] sm:$0xff]
        %v1236 = vld [vmem:[%s211 + $0xfa0] sm:$0xff]
        %v1237 = vld [vmem:[%s211 + $0xfa8] sm:$0xff]
        %v1238 = vld [vmem:[%s211 + $0xfb0] sm:$0xff]
        %v1239 = vld [vmem:[%s211 + $0xfb8] sm:$0xff]
        %v1240 = vld [vmem:[%s211 + $0xfc0] sm:$0xff]
        %v1241 = vld [vmem:[%s211 + $0xfc8] sm:$0xff]
        %v1242 = vld [vmem:[%s211 + $0xfd0] sm:$0xff]
        %v1243 = vld [vmem:[%s211 + $0xfd8] sm:$0xff]
        %v1244 = vld [vmem:[%s211 + $0xfe0] sm:$0xff]
        %v1245 = vld [vmem:[%s211 + $0xfe8] sm:$0xff]
        %v1246 = vld [vmem:[%s211 + $0xff0] sm:$0xff]
        %v1247 = vld [vmem:[%s211 + $0xff8] sm:$0xff]
        %v1248 = vadd.f32 %v224, %v736
        %v1249 = vadd.f32 %v225, %v737
        %v1250 = vadd.f32 %v226, %v738
        %v1251 = vadd.f32 %v227, %v739
        %v1252 = vadd.f32 %v228, %v740
        %v1253 = vadd.f32 %v229, %v741
        %v1254 = vadd.f32 %v230, %v742
        %v1255 = vadd.f32 %v231, %v743
        %v1256 = vadd.f32 %v232, %v744
        %v1257 = vadd.f32 %v233, %v745
        %v1258 = vadd.f32 %v234, %v746
        %v1259 = vadd.f32 %v235, %v747
        %v1260 = vadd.f32 %v236, %v748
        %v1261 = vadd.f32 %v237, %v749
        %v1262 = vadd.f32 %v238, %v750
        %v1263 = vadd.f32 %v239, %v751
        %v1264 = vadd.f32 %v240, %v752
        %v1265 = vadd.f32 %v241, %v753
        %v1266 = vadd.f32 %v242, %v754
        %v1267 = vadd.f32 %v243, %v755
        %v1268 = vadd.f32 %v244, %v756
        %v1269 = vadd.f32 %v245, %v757
        %v1270 = vadd.f32 %v246, %v758
        %v1271 = vadd.f32 %v247, %v759
        %v1272 = vadd.f32 %v248, %v760
        %v1273 = vadd.f32 %v249, %v761
        %v1274 = vadd.f32 %v250, %v762
        %v1275 = vadd.f32 %v251, %v763
        %v1276 = vadd.f32 %v252, %v764
        %v1277 = vadd.f32 %v253, %v765
        %v1278 = vadd.f32 %v254, %v766
        %v1279 = vadd.f32 %v255, %v767
        %v1280 = vadd.f32 %v256, %v768
        %v1281 = vadd.f32 %v257, %v769
        %v1282 = vadd.f32 %v258, %v770
        %v1283 = vadd.f32 %v259, %v771
        %v1284 = vadd.f32 %v260, %v772
        %v1285 = vadd.f32 %v261, %v773
        %v1286 = vadd.f32 %v262, %v774
        %v1287 = vadd.f32 %v263, %v775
        %v1288 = vadd.f32 %v264, %v776
        %v1289 = vadd.f32 %v265, %v777
        %v1290 = vadd.f32 %v266, %v778
        %v1291 = vadd.f32 %v267, %v779
        %v1292 = vadd.f32 %v268, %v780
        %v1293 = vadd.f32 %v269, %v781
        %v1294 = vadd.f32 %v270, %v782
        %v1295 = vadd.f32 %v271, %v783
        %v1296 = vadd.f32 %v272, %v784
        %v1297 = vadd.f32 %v273, %v785
        %v1298 = vadd.f32 %v274, %v786
        %v1299 = vadd.f32 %v275, %v787
        %v1300 = vadd.f32 %v276, %v788
        %v1301 = vadd.f32 %v277, %v789
        %v1302 = vadd.f32 %v278, %v790
        %v1303 = vadd.f32 %v279, %v791
        %v1304 = vadd.f32 %v280, %v792
        %v1305 = vadd.f32 %v281, %v793
        %v1306 = vadd.f32 %v282, %v794
        %v1307 = vadd.f32 %v283, %v795
        %v1308 = vadd.f32 %v284, %v796
        %v1309 = vadd.f32 %v285, %v797
        %v1310 = vadd.f32 %v286, %v798
        %v1311 = vadd.f32 %v287, %v799
        %v1312 = vadd.f32 %v288, %v800
        %v1313 = vadd.f32 %v289, %v801
        %v1314 = vadd.f32 %v290, %v802
        %v1315 = vadd.f32 %v291, %v803
        %v1316 = vadd.f32 %v292, %v804
        %v1317 = vadd.f32 %v293, %v805
        %v1318 = vadd.f32 %v294, %v806
        %v1319 = vadd.f32 %v295, %v807
        %v1320 = vadd.f32 %v296, %v808
        %v1321 = vadd.f32 %v297, %v809
        %v1322 = vadd.f32 %v298, %v810
        %v1323 = vadd.f32 %v299, %v811
        %v1324 = vadd.f32 %v300, %v812
        %v1325 = vadd.f32 %v301, %v813
        %v1326 = vadd.f32 %v302, %v814
        %v1327 = vadd.f32 %v303, %v815
        %v1328 = vadd.f32 %v304, %v816
        %v1329 = vadd.f32 %v305, %v817
        %v1330 = vadd.f32 %v306, %v818
        %v1331 = vadd.f32 %v307, %v819
        %v1332 = vadd.f32 %v308, %v820
        %v1333 = vadd.f32 %v309, %v821
        %v1334 = vadd.f32 %v310, %v822
        %v1335 = vadd.f32 %v311, %v823
        %v1336 = vadd.f32 %v312, %v824
        %v1337 = vadd.f32 %v313, %v825
        %v1338 = vadd.f32 %v314, %v826
        %v1339 = vadd.f32 %v315, %v827
        %v1340 = vadd.f32 %v316, %v828
        %v1341 = vadd.f32 %v317, %v829
        %v1342 = vadd.f32 %v318, %v830
        %v1343 = vadd.f32 %v319, %v831
        %v1344 = vadd.f32 %v320, %v832
        %v1345 = vadd.f32 %v321, %v833
        %v1346 = vadd.f32 %v322, %v834
        %v1347 = vadd.f32 %v323, %v835
        %v1348 = vadd.f32 %v324, %v836
        %v1349 = vadd.f32 %v325, %v837
        %v1350 = vadd.f32 %v326, %v838
        %v1351 = vadd.f32 %v327, %v839
        %v1352 = vadd.f32 %v328, %v840
        %v1353 = vadd.f32 %v329, %v841
        %v1354 = vadd.f32 %v330, %v842
        %v1355 = vadd.f32 %v331, %v843
        %v1356 = vadd.f32 %v332, %v844
        %v1357 = vadd.f32 %v333, %v845
        %v1358 = vadd.f32 %v334, %v846
        %v1359 = vadd.f32 %v335, %v847
        %v1360 = vadd.f32 %v336, %v848
        %v1361 = vadd.f32 %v337, %v849
        %v1362 = vadd.f32 %v338, %v850
        %v1363 = vadd.f32 %v339, %v851
        %v1364 = vadd.f32 %v340, %v852
        %v1365 = vadd.f32 %v341, %v853
        %v1366 = vadd.f32 %v342, %v854
        %v1367 = vadd.f32 %v343, %v855
        %v1368 = vadd.f32 %v344, %v856
        %v1369 = vadd.f32 %v345, %v857
        %v1370 = vadd.f32 %v346, %v858
        %v1371 = vadd.f32 %v347, %v859
        %v1372 = vadd.f32 %v348, %v860
        %v1373 = vadd.f32 %v349, %v861
        %v1374 = vadd.f32 %v350, %v862
        %v1375 = vadd.f32 %v351, %v863
        %v1376 = vadd.f32 %v352, %v864
        %v1377 = vadd.f32 %v353, %v865
        %v1378 = vadd.f32 %v354, %v866
        %v1379 = vadd.f32 %v355, %v867
        %v1380 = vadd.f32 %v356, %v868
        %v1381 = vadd.f32 %v357, %v869
        %v1382 = vadd.f32 %v358, %v870
        %v1383 = vadd.f32 %v359, %v871
        %v1384 = vadd.f32 %v360, %v872
        %v1385 = vadd.f32 %v361, %v873
        %v1386 = vadd.f32 %v362, %v874
        %v1387 = vadd.f32 %v363, %v875
        %v1388 = vadd.f32 %v364, %v876
        %v1389 = vadd.f32 %v365, %v877
        %v1390 = vadd.f32 %v366, %v878
        %v1391 = vadd.f32 %v367, %v879
        %v1392 = vadd.f32 %v368, %v880
        %v1393 = vadd.f32 %v369, %v881
        %v1394 = vadd.f32 %v370, %v882
        %v1395 = vadd.f32 %v371, %v883
        %v1396 = vadd.f32 %v372, %v884
        %v1397 = vadd.f32 %v373, %v885
        %v1398 = vadd.f32 %v374, %v886
        %v1399 = vadd.f32 %v375, %v887
        %v1400 = vadd.f32 %v376, %v888
        %v1401 = vadd.f32 %v377, %v889
        %v1402 = vadd.f32 %v378, %v890
        %v1403 = vadd.f32 %v379, %v891
        %v1404 = vadd.f32 %v380, %v892
        %v1405 = vadd.f32 %v381, %v893
        %v1406 = vadd.f32 %v382, %v894
        %v1407 = vadd.f32 %v383, %v895
        %v1408 = vadd.f32 %v384, %v896
        %v1409 = vadd.f32 %v385, %v897
        %v1410 = vadd.f32 %v386, %v898
        %v1411 = vadd.f32 %v387, %v899
        %v1412 = vadd.f32 %v388, %v900
        %v1413 = vadd.f32 %v389, %v901
        %v1414 = vadd.f32 %v390, %v902
        %v1415 = vadd.f32 %v391, %v903
        %v1416 = vadd.f32 %v392, %v904
        %v1417 = vadd.f32 %v393, %v905
        %v1418 = vadd.f32 %v394, %v906
        %v1419 = vadd.f32 %v395, %v907
        %v1420 = vadd.f32 %v396, %v908
        %v1421 = vadd.f32 %v397, %v909
        %v1422 = vadd.f32 %v398, %v910
        %v1423 = vadd.f32 %v399, %v911
        %v1424 = vadd.f32 %v400, %v912
        %v1425 = vadd.f32 %v401, %v913
        %v1426 = vadd.f32 %v402, %v914
        %v1427 = vadd.f32 %v403, %v915
        %v1428 = vadd.f32 %v404, %v916
        %v1429 = vadd.f32 %v405, %v917
        %v1430 = vadd.f32 %v406, %v918
        %v1431 = vadd.f32 %v407, %v919
        %v1432 = vadd.f32 %v408, %v920
        %v1433 = vadd.f32 %v409, %v921
        %v1434 = vadd.f32 %v410, %v922
        %v1435 = vadd.f32 %v411, %v923
        %v1436 = vadd.f32 %v412, %v924
        %v1437 = vadd.f32 %v413, %v925
        %v1438 = vadd.f32 %v414, %v926
        %v1439 = vadd.f32 %v415, %v927
        %v1440 = vadd.f32 %v416, %v928
        %v1441 = vadd.f32 %v417, %v929
        %v1442 = vadd.f32 %v418, %v930
        %v1443 = vadd.f32 %v419, %v931
        %v1444 = vadd.f32 %v420, %v932
        %v1445 = vadd.f32 %v421, %v933
        %v1446 = vadd.f32 %v422, %v934
        %v1447 = vadd.f32 %v423, %v935
        %v1448 = vadd.f32 %v424, %v936
        %v1449 = vadd.f32 %v425, %v937
        %v1450 = vadd.f32 %v426, %v938
        %v1451 = vadd.f32 %v427, %v939
        %v1452 = vadd.f32 %v428, %v940
        %v1453 = vadd.f32 %v429, %v941
        %v1454 = vadd.f32 %v430, %v942
        %v1455 = vadd.f32 %v431, %v943
        %v1456 = vadd.f32 %v432, %v944
        %v1457 = vadd.f32 %v433, %v945
        %v1458 = vadd.f32 %v434, %v946
        %v1459 = vadd.f32 %v435, %v947
        %v1460 = vadd.f32 %v436, %v948
        %v1461 = vadd.f32 %v437, %v949
        %v1462 = vadd.f32 %v438, %v950
        %v1463 = vadd.f32 %v439, %v951
        %v1464 = vadd.f32 %v440, %v952
        %v1465 = vadd.f32 %v441, %v953
        %v1466 = vadd.f32 %v442, %v954
        %v1467 = vadd.f32 %v443, %v955
        %v1468 = vadd.f32 %v444, %v956
        %v1469 = vadd.f32 %v445, %v957
        %v1470 = vadd.f32 %v446, %v958
        %v1471 = vadd.f32 %v447, %v959
        %v1472 = vadd.f32 %v448, %v960
        %v1473 = vadd.f32 %v449, %v961
        %v1474 = vadd.f32 %v450, %v962
        %v1475 = vadd.f32 %v451, %v963
        %v1476 = vadd.f32 %v452, %v964
        %v1477 = vadd.f32 %v453, %v965
        %v1478 = vadd.f32 %v454, %v966
        %v1479 = vadd.f32 %v455, %v967
        %v1480 = vadd.f32 %v456, %v968
        %v1481 = vadd.f32 %v457, %v969
        %v1482 = vadd.f32 %v458, %v970
        %v1483 = vadd.f32 %v459, %v971
        %v1484 = vadd.f32 %v460, %v972
        %v1485 = vadd.f32 %v461, %v973
        %v1486 = vadd.f32 %v462, %v974
        %v1487 = vadd.f32 %v463, %v975
        %v1488 = vadd.f32 %v464, %v976
        %v1489 = vadd.f32 %v465, %v977
        %v1490 = vadd.f32 %v466, %v978
        %v1491 = vadd.f32 %v467, %v979
        %v1492 = vadd.f32 %v468, %v980
        %v1493 = vadd.f32 %v469, %v981
        %v1494 = vadd.f32 %v470, %v982
        %v1495 = vadd.f32 %v471, %v983
        %v1496 = vadd.f32 %v472, %v984
        %v1497 = vadd.f32 %v473, %v985
        %v1498 = vadd.f32 %v474, %v986
        %v1499 = vadd.f32 %v475, %v987
        %v1500 = vadd.f32 %v476, %v988
        %v1501 = vadd.f32 %v477, %v989
        %v1502 = vadd.f32 %v478, %v990
        %v1503 = vadd.f32 %v479, %v991
        %v1504 = vadd.f32 %v480, %v992
        %v1505 = vadd.f32 %v481, %v993
        %v1506 = vadd.f32 %v482, %v994
        %v1507 = vadd.f32 %v483, %v995
        %v1508 = vadd.f32 %v484, %v996
        %v1509 = vadd.f32 %v485, %v997
        %v1510 = vadd.f32 %v486, %v998
        %v1511 = vadd.f32 %v487, %v999
        %v1512 = vadd.f32 %v488, %v1000
        %v1513 = vadd.f32 %v489, %v1001
        %v1514 = vadd.f32 %v490, %v1002
        %v1515 = vadd.f32 %v491, %v1003
        %v1516 = vadd.f32 %v492, %v1004
        %v1517 = vadd.f32 %v493, %v1005
        %v1518 = vadd.f32 %v494, %v1006
        %v1519 = vadd.f32 %v495, %v1007
        %v1520 = vadd.f32 %v496, %v1008
        %v1521 = vadd.f32 %v497, %v1009
        %v1522 = vadd.f32 %v498, %v1010
        %v1523 = vadd.f32 %v499, %v1011
        %v1524 = vadd.f32 %v500, %v1012
        %v1525 = vadd.f32 %v501, %v1013
        %v1526 = vadd.f32 %v502, %v1014
        %v1527 = vadd.f32 %v503, %v1015
        %v1528 = vadd.f32 %v504, %v1016
        %v1529 = vadd.f32 %v505, %v1017
        %v1530 = vadd.f32 %v506, %v1018
        %v1531 = vadd.f32 %v507, %v1019
        %v1532 = vadd.f32 %v508, %v1020
        %v1533 = vadd.f32 %v509, %v1021
        %v1534 = vadd.f32 %v510, %v1022
        %v1535 = vadd.f32 %v511, %v1023
        %v1536 = vadd.f32 %v512, %v1024
        %v1537 = vadd.f32 %v513, %v1025
        %v1538 = vadd.f32 %v514, %v1026
        %v1539 = vadd.f32 %v515, %v1027
        %v1540 = vadd.f32 %v516, %v1028
        %v1541 = vadd.f32 %v517, %v1029
        %v1542 = vadd.f32 %v518, %v1030
        %v1543 = vadd.f32 %v519, %v1031
        %v1544 = vadd.f32 %v520, %v1032
        %v1545 = vadd.f32 %v521, %v1033
        %v1546 = vadd.f32 %v522, %v1034
        %v1547 = vadd.f32 %v523, %v1035
        %v1548 = vadd.f32 %v524, %v1036
        %v1549 = vadd.f32 %v525, %v1037
        %v1550 = vadd.f32 %v526, %v1038
        %v1551 = vadd.f32 %v527, %v1039
        %v1552 = vadd.f32 %v528, %v1040
        %v1553 = vadd.f32 %v529, %v1041
        %v1554 = vadd.f32 %v530, %v1042
        %v1555 = vadd.f32 %v531, %v1043
        %v1556 = vadd.f32 %v532, %v1044
        %v1557 = vadd.f32 %v533, %v1045
        %v1558 = vadd.f32 %v534, %v1046
        %v1559 = vadd.f32 %v535, %v1047
        %v1560 = vadd.f32 %v536, %v1048
        %v1561 = vadd.f32 %v537, %v1049
        %v1562 = vadd.f32 %v538, %v1050
        %v1563 = vadd.f32 %v539, %v1051
        %v1564 = vadd.f32 %v540, %v1052
        %v1565 = vadd.f32 %v541, %v1053
        %v1566 = vadd.f32 %v542, %v1054
        %v1567 = vadd.f32 %v543, %v1055
        %v1568 = vadd.f32 %v544, %v1056
        %v1569 = vadd.f32 %v545, %v1057
        %v1570 = vadd.f32 %v546, %v1058
        %v1571 = vadd.f32 %v547, %v1059
        %v1572 = vadd.f32 %v548, %v1060
        %v1573 = vadd.f32 %v549, %v1061
        %v1574 = vadd.f32 %v550, %v1062
        %v1575 = vadd.f32 %v551, %v1063
        %v1576 = vadd.f32 %v552, %v1064
        %v1577 = vadd.f32 %v553, %v1065
        %v1578 = vadd.f32 %v554, %v1066
        %v1579 = vadd.f32 %v555, %v1067
        %v1580 = vadd.f32 %v556, %v1068
        %v1581 = vadd.f32 %v557, %v1069
        %v1582 = vadd.f32 %v558, %v1070
        %v1583 = vadd.f32 %v559, %v1071
        %v1584 = vadd.f32 %v560, %v1072
        %v1585 = vadd.f32 %v561, %v1073
        %v1586 = vadd.f32 %v562, %v1074
        %v1587 = vadd.f32 %v563, %v1075
        %v1588 = vadd.f32 %v564, %v1076
        %v1589 = vadd.f32 %v565, %v1077
        %v1590 = vadd.f32 %v566, %v1078
        %v1591 = vadd.f32 %v567, %v1079
        %v1592 = vadd.f32 %v568, %v1080
        %v1593 = vadd.f32 %v569, %v1081
        %v1594 = vadd.f32 %v570, %v1082
        %v1595 = vadd.f32 %v571, %v1083
        %v1596 = vadd.f32 %v572, %v1084
        %v1597 = vadd.f32 %v573, %v1085
        %v1598 = vadd.f32 %v574, %v1086
        %v1599 = vadd.f32 %v575, %v1087
        %v1600 = vadd.f32 %v576, %v1088
        %v1601 = vadd.f32 %v577, %v1089
        %v1602 = vadd.f32 %v578, %v1090
        %v1603 = vadd.f32 %v579, %v1091
        %v1604 = vadd.f32 %v580, %v1092
        %v1605 = vadd.f32 %v581, %v1093
        %v1606 = vadd.f32 %v582, %v1094
        %v1607 = vadd.f32 %v583, %v1095
        %v1608 = vadd.f32 %v584, %v1096
        %v1609 = vadd.f32 %v585, %v1097
        %v1610 = vadd.f32 %v586, %v1098
        %v1611 = vadd.f32 %v587, %v1099
        %v1612 = vadd.f32 %v588, %v1100
        %v1613 = vadd.f32 %v589, %v1101
        %v1614 = vadd.f32 %v590, %v1102
        %v1615 = vadd.f32 %v591, %v1103
        %v1616 = vadd.f32 %v592, %v1104
        %v1617 = vadd.f32 %v593, %v1105
        %v1618 = vadd.f32 %v594, %v1106
        %v1619 = vadd.f32 %v595, %v1107
        %v1620 = vadd.f32 %v596, %v1108
        %v1621 = vadd.f32 %v597, %v1109
        %v1622 = vadd.f32 %v598, %v1110
        %v1623 = vadd.f32 %v599, %v1111
        %v1624 = vadd.f32 %v600, %v1112
        %v1625 = vadd.f32 %v601, %v1113
        %v1626 = vadd.f32 %v602, %v1114
        %v1627 = vadd.f32 %v603, %v1115
        %v1628 = vadd.f32 %v604, %v1116
        %v1629 = vadd.f32 %v605, %v1117
        %v1630 = vadd.f32 %v606, %v1118
        %v1631 = vadd.f32 %v607, %v1119
        %v1632 = vadd.f32 %v608, %v1120
        %v1633 = vadd.f32 %v609, %v1121
        %v1634 = vadd.f32 %v610, %v1122
        %v1635 = vadd.f32 %v611, %v1123
        %v1636 = vadd.f32 %v612, %v1124
        %v1637 = vadd.f32 %v613, %v1125
        %v1638 = vadd.f32 %v614, %v1126
        %v1639 = vadd.f32 %v615, %v1127
        %v1640 = vadd.f32 %v616, %v1128
        %v1641 = vadd.f32 %v617, %v1129
        %v1642 = vadd.f32 %v618, %v1130
        %v1643 = vadd.f32 %v619, %v1131
        %v1644 = vadd.f32 %v620, %v1132
        %v1645 = vadd.f32 %v621, %v1133
        %v1646 = vadd.f32 %v622, %v1134
        %v1647 = vadd.f32 %v623, %v1135
        %v1648 = vadd.f32 %v624, %v1136
        %v1649 = vadd.f32 %v625, %v1137
        %v1650 = vadd.f32 %v626, %v1138
        %v1651 = vadd.f32 %v627, %v1139
        %v1652 = vadd.f32 %v628, %v1140
        %v1653 = vadd.f32 %v629, %v1141
        %v1654 = vadd.f32 %v630, %v1142
        %v1655 = vadd.f32 %v631, %v1143
        %v1656 = vadd.f32 %v632, %v1144
        %v1657 = vadd.f32 %v633, %v1145
        %v1658 = vadd.f32 %v634, %v1146
        %v1659 = vadd.f32 %v635, %v1147
        %v1660 = vadd.f32 %v636, %v1148
        %v1661 = vadd.f32 %v637, %v1149
        %v1662 = vadd.f32 %v638, %v1150
        %v1663 = vadd.f32 %v639, %v1151
        %v1664 = vadd.f32 %v640, %v1152
        %v1665 = vadd.f32 %v641, %v1153
        %v1666 = vadd.f32 %v642, %v1154
        %v1667 = vadd.f32 %v643, %v1155
        %v1668 = vadd.f32 %v644, %v1156
        %v1669 = vadd.f32 %v645, %v1157
        %v1670 = vadd.f32 %v646, %v1158
        %v1671 = vadd.f32 %v647, %v1159
        %v1672 = vadd.f32 %v648, %v1160
        %v1673 = vadd.f32 %v649, %v1161
        %v1674 = vadd.f32 %v650, %v1162
        %v1675 = vadd.f32 %v651, %v1163
        %v1676 = vadd.f32 %v652, %v1164
        %v1677 = vadd.f32 %v653, %v1165
        %v1678 = vadd.f32 %v654, %v1166
        %v1679 = vadd.f32 %v655, %v1167
        %v1680 = vadd.f32 %v656, %v1168
        %v1681 = vadd.f32 %v657, %v1169
        %v1682 = vadd.f32 %v658, %v1170
        %v1683 = vadd.f32 %v659, %v1171
        %v1684 = vadd.f32 %v660, %v1172
        %v1685 = vadd.f32 %v661, %v1173
        %v1686 = vadd.f32 %v662, %v1174
        %v1687 = vadd.f32 %v663, %v1175
        %v1688 = vadd.f32 %v664, %v1176
        %v1689 = vadd.f32 %v665, %v1177
        %v1690 = vadd.f32 %v666, %v1178
        %v1691 = vadd.f32 %v667, %v1179
        %v1692 = vadd.f32 %v668, %v1180
        %v1693 = vadd.f32 %v669, %v1181
        %v1694 = vadd.f32 %v670, %v1182
        %v1695 = vadd.f32 %v671, %v1183
        %v1696 = vadd.f32 %v672, %v1184
        %v1697 = vadd.f32 %v673, %v1185
        %v1698 = vadd.f32 %v674, %v1186
        %v1699 = vadd.f32 %v675, %v1187
        %v1700 = vadd.f32 %v676, %v1188
        %v1701 = vadd.f32 %v677, %v1189
        %v1702 = vadd.f32 %v678, %v1190
        %v1703 = vadd.f32 %v679, %v1191
        %v1704 = vadd.f32 %v680, %v1192
        %v1705 = vadd.f32 %v681, %v1193
        %v1706 = vadd.f32 %v682, %v1194
        %v1707 = vadd.f32 %v683, %v1195
        %v1708 = vadd.f32 %v684, %v1196
        %v1709 = vadd.f32 %v685, %v1197
        %v1710 = vadd.f32 %v686, %v1198
        %v1711 = vadd.f32 %v687, %v1199
        %v1712 = vadd.f32 %v688, %v1200
        %v1713 = vadd.f32 %v689, %v1201
        %v1714 = vadd.f32 %v690, %v1202
        %v1715 = vadd.f32 %v691, %v1203
        %v1716 = vadd.f32 %v692, %v1204
        %v1717 = vadd.f32 %v693, %v1205
        %v1718 = vadd.f32 %v694, %v1206
        %v1719 = vadd.f32 %v695, %v1207
        %v1720 = vadd.f32 %v696, %v1208
        %v1721 = vadd.f32 %v697, %v1209
        %v1722 = vadd.f32 %v698, %v1210
        %v1723 = vadd.f32 %v699, %v1211
        %v1724 = vadd.f32 %v700, %v1212
        %v1725 = vadd.f32 %v701, %v1213
        %v1726 = vadd.f32 %v702, %v1214
        %v1727 = vadd.f32 %v703, %v1215
        %v1728 = vadd.f32 %v704, %v1216
        %v1729 = vadd.f32 %v705, %v1217
        %v1730 = vadd.f32 %v706, %v1218
        %v1731 = vadd.f32 %v707, %v1219
        %v1732 = vadd.f32 %v708, %v1220
        %v1733 = vadd.f32 %v709, %v1221
        %v1734 = vadd.f32 %v710, %v1222
        %v1735 = vadd.f32 %v711, %v1223
        %v1736 = vadd.f32 %v712, %v1224
        %v1737 = vadd.f32 %v713, %v1225
        %v1738 = vadd.f32 %v714, %v1226
        %v1739 = vadd.f32 %v715, %v1227
        %v1740 = vadd.f32 %v716, %v1228
        %v1741 = vadd.f32 %v717, %v1229
        %v1742 = vadd.f32 %v718, %v1230
        %v1743 = vadd.f32 %v719, %v1231
        %v1744 = vadd.f32 %v720, %v1232
        %v1745 = vadd.f32 %v721, %v1233
        %v1746 = vadd.f32 %v722, %v1234
        %v1747 = vadd.f32 %v723, %v1235
        %v1748 = vadd.f32 %v724, %v1236
        %v1749 = vadd.f32 %v725, %v1237
        %v1750 = vadd.f32 %v726, %v1238
        %v1751 = vadd.f32 %v727, %v1239
        %v1752 = vadd.f32 %v728, %v1240
        %v1753 = vadd.f32 %v729, %v1241
        %v1754 = vadd.f32 %v730, %v1242
        %v1755 = vadd.f32 %v731, %v1243
        %v1756 = vadd.f32 %v732, %v1244
        %v1757 = vadd.f32 %v733, %v1245
        %v1758 = vadd.f32 %v734, %v1246
        %v1759 = vadd.f32 %v735, %v1247
        %v1760 = vmax.f32 %v1248, 0.0
        %v1761 = vmax.f32 %v1249, 0.0
        %v1762 = vmax.f32 %v1250, 0.0
        %v1763 = vmax.f32 %v1251, 0.0
        %v1764 = vmax.f32 %v1252, 0.0
        %v1765 = vmax.f32 %v1253, 0.0
        %v1766 = vmax.f32 %v1254, 0.0
        %v1767 = vmax.f32 %v1255, 0.0
        %v1768 = vmax.f32 %v1256, 0.0
        %v1769 = vmax.f32 %v1257, 0.0
        %v1770 = vmax.f32 %v1258, 0.0
        %v1771 = vmax.f32 %v1259, 0.0
        %v1772 = vmax.f32 %v1260, 0.0
        %v1773 = vmax.f32 %v1261, 0.0
        %v1774 = vmax.f32 %v1262, 0.0
        %v1775 = vmax.f32 %v1263, 0.0
        %v1776 = vmax.f32 %v1264, 0.0
        %v1777 = vmax.f32 %v1265, 0.0
        %v1778 = vmax.f32 %v1266, 0.0
        %v1779 = vmax.f32 %v1267, 0.0
        %v1780 = vmax.f32 %v1268, 0.0
        %v1781 = vmax.f32 %v1269, 0.0
        %v1782 = vmax.f32 %v1270, 0.0
        %v1783 = vmax.f32 %v1271, 0.0
        %v1784 = vmax.f32 %v1272, 0.0
        %v1785 = vmax.f32 %v1273, 0.0
        %v1786 = vmax.f32 %v1274, 0.0
        %v1787 = vmax.f32 %v1275, 0.0
        %v1788 = vmax.f32 %v1276, 0.0
        %v1789 = vmax.f32 %v1277, 0.0
        %v1790 = vmax.f32 %v1278, 0.0
        %v1791 = vmax.f32 %v1279, 0.0
        %v1792 = vmax.f32 %v1280, 0.0
        %v1793 = vmax.f32 %v1281, 0.0
        %v1794 = vmax.f32 %v1282, 0.0
        %v1795 = vmax.f32 %v1283, 0.0
        %v1796 = vmax.f32 %v1284, 0.0
        %v1797 = vmax.f32 %v1285, 0.0
        %v1798 = vmax.f32 %v1286, 0.0
        %v1799 = vmax.f32 %v1287, 0.0
        %v1800 = vmax.f32 %v1288, 0.0
        %v1801 = vmax.f32 %v1289, 0.0
        %v1802 = vmax.f32 %v1290, 0.0
        %v1803 = vmax.f32 %v1291, 0.0
        %v1804 = vmax.f32 %v1292, 0.0
        %v1805 = vmax.f32 %v1293, 0.0
        %v1806 = vmax.f32 %v1294, 0.0
        %v1807 = vmax.f32 %v1295, 0.0
        %v1808 = vmax.f32 %v1296, 0.0
        %v1809 = vmax.f32 %v1297, 0.0
        %v1810 = vmax.f32 %v1298, 0.0
        %v1811 = vmax.f32 %v1299, 0.0
        %v1812 = vmax.f32 %v1300, 0.0
        %v1813 = vmax.f32 %v1301, 0.0
        %v1814 = vmax.f32 %v1302, 0.0
        %v1815 = vmax.f32 %v1303, 0.0
        %v1816 = vmax.f32 %v1304, 0.0
        %v1817 = vmax.f32 %v1305, 0.0
        %v1818 = vmax.f32 %v1306, 0.0
        %v1819 = vmax.f32 %v1307, 0.0
        %v1820 = vmax.f32 %v1308, 0.0
        %v1821 = vmax.f32 %v1309, 0.0
        %v1822 = vmax.f32 %v1310, 0.0
        %v1823 = vmax.f32 %v1311, 0.0
        %v1824 = vmax.f32 %v1312, 0.0
        %v1825 = vmax.f32 %v1313, 0.0
        %v1826 = vmax.f32 %v1314, 0.0
        %v1827 = vmax.f32 %v1315, 0.0
        %v1828 = vmax.f32 %v1316, 0.0
        %v1829 = vmax.f32 %v1317, 0.0
        %v1830 = vmax.f32 %v1318, 0.0
        %v1831 = vmax.f32 %v1319, 0.0
        %v1832 = vmax.f32 %v1320, 0.0
        %v1833 = vmax.f32 %v1321, 0.0
        %v1834 = vmax.f32 %v1322, 0.0
        %v1835 = vmax.f32 %v1323, 0.0
        %v1836 = vmax.f32 %v1324, 0.0
        %v1837 = vmax.f32 %v1325, 0.0
        %v1838 = vmax.f32 %v1326, 0.0
        %v1839 = vmax.f32 %v1327, 0.0
        %v1840 = vmax.f32 %v1328, 0.0
        %v1841 = vmax.f32 %v1329, 0.0
        %v1842 = vmax.f32 %v1330, 0.0
        %v1843 = vmax.f32 %v1331, 0.0
        %v1844 = vmax.f32 %v1332, 0.0
        %v1845 = vmax.f32 %v1333, 0.0
        %v1846 = vmax.f32 %v1334, 0.0
        %v1847 = vmax.f32 %v1335, 0.0
        %v1848 = vmax.f32 %v1336, 0.0
        %v1849 = vmax.f32 %v1337, 0.0
        %v1850 = vmax.f32 %v1338, 0.0
        %v1851 = vmax.f32 %v1339, 0.0
        %v1852 = vmax.f32 %v1340, 0.0
        %v1853 = vmax.f32 %v1341, 0.0
        %v1854 = vmax.f32 %v1342, 0.0
        %v1855 = vmax.f32 %v1343, 0.0
        %v1856 = vmax.f32 %v1344, 0.0
        %v1857 = vmax.f32 %v1345, 0.0
        %v1858 = vmax.f32 %v1346, 0.0
        %v1859 = vmax.f32 %v1347, 0.0
        %v1860 = vmax.f32 %v1348, 0.0
        %v1861 = vmax.f32 %v1349, 0.0
        %v1862 = vmax.f32 %v1350, 0.0
        %v1863 = vmax.f32 %v1351, 0.0
        %v1864 = vmax.f32 %v1352, 0.0
        %v1865 = vmax.f32 %v1353, 0.0
        %v1866 = vmax.f32 %v1354, 0.0
        %v1867 = vmax.f32 %v1355, 0.0
        %v1868 = vmax.f32 %v1356, 0.0
        %v1869 = vmax.f32 %v1357, 0.0
        %v1870 = vmax.f32 %v1358, 0.0
        %v1871 = vmax.f32 %v1359, 0.0
        %v1872 = vmax.f32 %v1360, 0.0
        %v1873 = vmax.f32 %v1361, 0.0
        %v1874 = vmax.f32 %v1362, 0.0
        %v1875 = vmax.f32 %v1363, 0.0
        %v1876 = vmax.f32 %v1364, 0.0
        %v1877 = vmax.f32 %v1365, 0.0
        %v1878 = vmax.f32 %v1366, 0.0
        %v1879 = vmax.f32 %v1367, 0.0
        %v1880 = vmax.f32 %v1368, 0.0
        %v1881 = vmax.f32 %v1369, 0.0
        %v1882 = vmax.f32 %v1370, 0.0
        %v1883 = vmax.f32 %v1371, 0.0
        %v1884 = vmax.f32 %v1372, 0.0
        %v1885 = vmax.f32 %v1373, 0.0
        %v1886 = vmax.f32 %v1374, 0.0
        %v1887 = vmax.f32 %v1375, 0.0
        %v1888 = vmax.f32 %v1376, 0.0
        %v1889 = vmax.f32 %v1377, 0.0
        %v1890 = vmax.f32 %v1378, 0.0
        %v1891 = vmax.f32 %v1379, 0.0
        %v1892 = vmax.f32 %v1380, 0.0
        %v1893 = vmax.f32 %v1381, 0.0
        %v1894 = vmax.f32 %v1382, 0.0
        %v1895 = vmax.f32 %v1383, 0.0
        %v1896 = vmax.f32 %v1384, 0.0
        %v1897 = vmax.f32 %v1385, 0.0
        %v1898 = vmax.f32 %v1386, 0.0
        %v1899 = vmax.f32 %v1387, 0.0
        %v1900 = vmax.f32 %v1388, 0.0
        %v1901 = vmax.f32 %v1389, 0.0
        %v1902 = vmax.f32 %v1390, 0.0
        %v1903 = vmax.f32 %v1391, 0.0
        %v1904 = vmax.f32 %v1392, 0.0
        %v1905 = vmax.f32 %v1393, 0.0
        %v1906 = vmax.f32 %v1394, 0.0
        %v1907 = vmax.f32 %v1395, 0.0
        %v1908 = vmax.f32 %v1396, 0.0
        %v1909 = vmax.f32 %v1397, 0.0
        %v1910 = vmax.f32 %v1398, 0.0
        %v1911 = vmax.f32 %v1399, 0.0
        %v1912 = vmax.f32 %v1400, 0.0
        %v1913 = vmax.f32 %v1401, 0.0
        %v1914 = vmax.f32 %v1402, 0.0
        %v1915 = vmax.f32 %v1403, 0.0
        %v1916 = vmax.f32 %v1404, 0.0
        %v1917 = vmax.f32 %v1405, 0.0
        %v1918 = vmax.f32 %v1406, 0.0
        %v1919 = vmax.f32 %v1407, 0.0
        %v1920 = vmax.f32 %v1408, 0.0
        %v1921 = vmax.f32 %v1409, 0.0
        %v1922 = vmax.f32 %v1410, 0.0
        %v1923 = vmax.f32 %v1411, 0.0
        %v1924 = vmax.f32 %v1412, 0.0
        %v1925 = vmax.f32 %v1413, 0.0
        %v1926 = vmax.f32 %v1414, 0.0
        %v1927 = vmax.f32 %v1415, 0.0
        %v1928 = vmax.f32 %v1416, 0.0
        %v1929 = vmax.f32 %v1417, 0.0
        %v1930 = vmax.f32 %v1418, 0.0
        %v1931 = vmax.f32 %v1419, 0.0
        %v1932 = vmax.f32 %v1420, 0.0
        %v1933 = vmax.f32 %v1421, 0.0
        %v1934 = vmax.f32 %v1422, 0.0
        %v1935 = vmax.f32 %v1423, 0.0
        %v1936 = vmax.f32 %v1424, 0.0
        %v1937 = vmax.f32 %v1425, 0.0
        %v1938 = vmax.f32 %v1426, 0.0
        %v1939 = vmax.f32 %v1427, 0.0
        %v1940 = vmax.f32 %v1428, 0.0
        %v1941 = vmax.f32 %v1429, 0.0
        %v1942 = vmax.f32 %v1430, 0.0
        %v1943 = vmax.f32 %v1431, 0.0
        %v1944 = vmax.f32 %v1432, 0.0
        %v1945 = vmax.f32 %v1433, 0.0
        %v1946 = vmax.f32 %v1434, 0.0
        %v1947 = vmax.f32 %v1435, 0.0
        %v1948 = vmax.f32 %v1436, 0.0
        %v1949 = vmax.f32 %v1437, 0.0
        %v1950 = vmax.f32 %v1438, 0.0
        %v1951 = vmax.f32 %v1439, 0.0
        %v1952 = vmax.f32 %v1440, 0.0
        %v1953 = vmax.f32 %v1441, 0.0
        %v1954 = vmax.f32 %v1442, 0.0
        %v1955 = vmax.f32 %v1443, 0.0
        %v1956 = vmax.f32 %v1444, 0.0
        %v1957 = vmax.f32 %v1445, 0.0
        %v1958 = vmax.f32 %v1446, 0.0
        %v1959 = vmax.f32 %v1447, 0.0
        %v1960 = vmax.f32 %v1448, 0.0
        %v1961 = vmax.f32 %v1449, 0.0
        %v1962 = vmax.f32 %v1450, 0.0
        %v1963 = vmax.f32 %v1451, 0.0
        %v1964 = vmax.f32 %v1452, 0.0
        %v1965 = vmax.f32 %v1453, 0.0
        %v1966 = vmax.f32 %v1454, 0.0
        %v1967 = vmax.f32 %v1455, 0.0
        %v1968 = vmax.f32 %v1456, 0.0
        %v1969 = vmax.f32 %v1457, 0.0
        %v1970 = vmax.f32 %v1458, 0.0
        %v1971 = vmax.f32 %v1459, 0.0
        %v1972 = vmax.f32 %v1460, 0.0
        %v1973 = vmax.f32 %v1461, 0.0
        %v1974 = vmax.f32 %v1462, 0.0
        %v1975 = vmax.f32 %v1463, 0.0
        %v1976 = vmax.f32 %v1464, 0.0
        %v1977 = vmax.f32 %v1465, 0.0
        %v1978 = vmax.f32 %v1466, 0.0
        %v1979 = vmax.f32 %v1467, 0.0
        %v1980 = vmax.f32 %v1468, 0.0
        %v1981 = vmax.f32 %v1469, 0.0
        %v1982 = vmax.f32 %v1470, 0.0
        %v1983 = vmax.f32 %v1471, 0.0
        %v1984 = vmax.f32 %v1472, 0.0
        %v1985 = vmax.f32 %v1473, 0.0
        %v1986 = vmax.f32 %v1474, 0.0
        %v1987 = vmax.f32 %v1475, 0.0
        %v1988 = vmax.f32 %v1476, 0.0
        %v1989 = vmax.f32 %v1477, 0.0
        %v1990 = vmax.f32 %v1478, 0.0
        %v1991 = vmax.f32 %v1479, 0.0
        %v1992 = vmax.f32 %v1480, 0.0
        %v1993 = vmax.f32 %v1481, 0.0
        %v1994 = vmax.f32 %v1482, 0.0
        %v1995 = vmax.f32 %v1483, 0.0
        %v1996 = vmax.f32 %v1484, 0.0
        %v1997 = vmax.f32 %v1485, 0.0
        %v1998 = vmax.f32 %v1486, 0.0
        %v1999 = vmax.f32 %v1487, 0.0
        %v2000 = vmax.f32 %v1488, 0.0
        %v2001 = vmax.f32 %v1489, 0.0
        %v2002 = vmax.f32 %v1490, 0.0
        %v2003 = vmax.f32 %v1491, 0.0
        %v2004 = vmax.f32 %v1492, 0.0
        %v2005 = vmax.f32 %v1493, 0.0
        %v2006 = vmax.f32 %v1494, 0.0
        %v2007 = vmax.f32 %v1495, 0.0
        %v2008 = vmax.f32 %v1496, 0.0
        %v2009 = vmax.f32 %v1497, 0.0
        %v2010 = vmax.f32 %v1498, 0.0
        %v2011 = vmax.f32 %v1499, 0.0
        %v2012 = vmax.f32 %v1500, 0.0
        %v2013 = vmax.f32 %v1501, 0.0
        %v2014 = vmax.f32 %v1502, 0.0
        %v2015 = vmax.f32 %v1503, 0.0
        %v2016 = vmax.f32 %v1504, 0.0
        %v2017 = vmax.f32 %v1505, 0.0
        %v2018 = vmax.f32 %v1506, 0.0
        %v2019 = vmax.f32 %v1507, 0.0
        %v2020 = vmax.f32 %v1508, 0.0
        %v2021 = vmax.f32 %v1509, 0.0
        %v2022 = vmax.f32 %v1510, 0.0
        %v2023 = vmax.f32 %v1511, 0.0
        %v2024 = vmax.f32 %v1512, 0.0
        %v2025 = vmax.f32 %v1513, 0.0
        %v2026 = vmax.f32 %v1514, 0.0
        %v2027 = vmax.f32 %v1515, 0.0
        %v2028 = vmax.f32 %v1516, 0.0
        %v2029 = vmax.f32 %v1517, 0.0
        %v2030 = vmax.f32 %v1518, 0.0
        %v2031 = vmax.f32 %v1519, 0.0
        %v2032 = vmax.f32 %v1520, 0.0
        %v2033 = vmax.f32 %v1521, 0.0
        %v2034 = vmax.f32 %v1522, 0.0
        %v2035 = vmax.f32 %v1523, 0.0
        %v2036 = vmax.f32 %v1524, 0.0
        %v2037 = vmax.f32 %v1525, 0.0
        %v2038 = vmax.f32 %v1526, 0.0
        %v2039 = vmax.f32 %v1527, 0.0
        %v2040 = vmax.f32 %v1528, 0.0
        %v2041 = vmax.f32 %v1529, 0.0
        %v2042 = vmax.f32 %v1530, 0.0
        %v2043 = vmax.f32 %v1531, 0.0
        %v2044 = vmax.f32 %v1532, 0.0
        %v2045 = vmax.f32 %v1533, 0.0
        %v2046 = vmax.f32 %v1534, 0.0
        %v2047 = vmax.f32 %v1535, 0.0
        %v2048 = vmax.f32 %v1536, 0.0
        %v2049 = vmax.f32 %v1537, 0.0
        %v2050 = vmax.f32 %v1538, 0.0
        %v2051 = vmax.f32 %v1539, 0.0
        %v2052 = vmax.f32 %v1540, 0.0
        %v2053 = vmax.f32 %v1541, 0.0
        %v2054 = vmax.f32 %v1542, 0.0
        %v2055 = vmax.f32 %v1543, 0.0
        %v2056 = vmax.f32 %v1544, 0.0
        %v2057 = vmax.f32 %v1545, 0.0
        %v2058 = vmax.f32 %v1546, 0.0
        %v2059 = vmax.f32 %v1547, 0.0
        %v2060 = vmax.f32 %v1548, 0.0
        %v2061 = vmax.f32 %v1549, 0.0
        %v2062 = vmax.f32 %v1550, 0.0
        %v2063 = vmax.f32 %v1551, 0.0
        %v2064 = vmax.f32 %v1552, 0.0
        %v2065 = vmax.f32 %v1553, 0.0
        %v2066 = vmax.f32 %v1554, 0.0
        %v2067 = vmax.f32 %v1555, 0.0
        %v2068 = vmax.f32 %v1556, 0.0
        %v2069 = vmax.f32 %v1557, 0.0
        %v2070 = vmax.f32 %v1558, 0.0
        %v2071 = vmax.f32 %v1559, 0.0
        %v2072 = vmax.f32 %v1560, 0.0
        %v2073 = vmax.f32 %v1561, 0.0
        %v2074 = vmax.f32 %v1562, 0.0
        %v2075 = vmax.f32 %v1563, 0.0
        %v2076 = vmax.f32 %v1564, 0.0
        %v2077 = vmax.f32 %v1565, 0.0
        %v2078 = vmax.f32 %v1566, 0.0
        %v2079 = vmax.f32 %v1567, 0.0
        %v2080 = vmax.f32 %v1568, 0.0
        %v2081 = vmax.f32 %v1569, 0.0
        %v2082 = vmax.f32 %v1570, 0.0
        %v2083 = vmax.f32 %v1571, 0.0
        %v2084 = vmax.f32 %v1572, 0.0
        %v2085 = vmax.f32 %v1573, 0.0
        %v2086 = vmax.f32 %v1574, 0.0
        %v2087 = vmax.f32 %v1575, 0.0
        %v2088 = vmax.f32 %v1576, 0.0
        %v2089 = vmax.f32 %v1577, 0.0
        %v2090 = vmax.f32 %v1578, 0.0
        %v2091 = vmax.f32 %v1579, 0.0
        %v2092 = vmax.f32 %v1580, 0.0
        %v2093 = vmax.f32 %v1581, 0.0
        %v2094 = vmax.f32 %v1582, 0.0
        %v2095 = vmax.f32 %v1583, 0.0
        %v2096 = vmax.f32 %v1584, 0.0
        %v2097 = vmax.f32 %v1585, 0.0
        %v2098 = vmax.f32 %v1586, 0.0
        %v2099 = vmax.f32 %v1587, 0.0
        %v2100 = vmax.f32 %v1588, 0.0
        %v2101 = vmax.f32 %v1589, 0.0
        %v2102 = vmax.f32 %v1590, 0.0
        %v2103 = vmax.f32 %v1591, 0.0
        %v2104 = vmax.f32 %v1592, 0.0
        %v2105 = vmax.f32 %v1593, 0.0
        %v2106 = vmax.f32 %v1594, 0.0
        %v2107 = vmax.f32 %v1595, 0.0
        %v2108 = vmax.f32 %v1596, 0.0
        %v2109 = vmax.f32 %v1597, 0.0
        %v2110 = vmax.f32 %v1598, 0.0
        %v2111 = vmax.f32 %v1599, 0.0
        %v2112 = vmax.f32 %v1600, 0.0
        %v2113 = vmax.f32 %v1601, 0.0
        %v2114 = vmax.f32 %v1602, 0.0
        %v2115 = vmax.f32 %v1603, 0.0
        %v2116 = vmax.f32 %v1604, 0.0
        %v2117 = vmax.f32 %v1605, 0.0
        %v2118 = vmax.f32 %v1606, 0.0
        %v2119 = vmax.f32 %v1607, 0.0
        %v2120 = vmax.f32 %v1608, 0.0
        %v2121 = vmax.f32 %v1609, 0.0
        %v2122 = vmax.f32 %v1610, 0.0
        %v2123 = vmax.f32 %v1611, 0.0
        %v2124 = vmax.f32 %v1612, 0.0
        %v2125 = vmax.f32 %v1613, 0.0
        %v2126 = vmax.f32 %v1614, 0.0
        %v2127 = vmax.f32 %v1615, 0.0
        %v2128 = vmax.f32 %v1616, 0.0
        %v2129 = vmax.f32 %v1617, 0.0
        %v2130 = vmax.f32 %v1618, 0.0
        %v2131 = vmax.f32 %v1619, 0.0
        %v2132 = vmax.f32 %v1620, 0.0
        %v2133 = vmax.f32 %v1621, 0.0
        %v2134 = vmax.f32 %v1622, 0.0
        %v2135 = vmax.f32 %v1623, 0.0
        %v2136 = vmax.f32 %v1624, 0.0
        %v2137 = vmax.f32 %v1625, 0.0
        %v2138 = vmax.f32 %v1626, 0.0
        %v2139 = vmax.f32 %v1627, 0.0
        %v2140 = vmax.f32 %v1628, 0.0
        %v2141 = vmax.f32 %v1629, 0.0
        %v2142 = vmax.f32 %v1630, 0.0
        %v2143 = vmax.f32 %v1631, 0.0
        %v2144 = vmax.f32 %v1632, 0.0
        %v2145 = vmax.f32 %v1633, 0.0
        %v2146 = vmax.f32 %v1634, 0.0
        %v2147 = vmax.f32 %v1635, 0.0
        %v2148 = vmax.f32 %v1636, 0.0
        %v2149 = vmax.f32 %v1637, 0.0
        %v2150 = vmax.f32 %v1638, 0.0
        %v2151 = vmax.f32 %v1639, 0.0
        %v2152 = vmax.f32 %v1640, 0.0
        %v2153 = vmax.f32 %v1641, 0.0
        %v2154 = vmax.f32 %v1642, 0.0
        %v2155 = vmax.f32 %v1643, 0.0
        %v2156 = vmax.f32 %v1644, 0.0
        %v2157 = vmax.f32 %v1645, 0.0
        %v2158 = vmax.f32 %v1646, 0.0
        %v2159 = vmax.f32 %v1647, 0.0
        %v2160 = vmax.f32 %v1648, 0.0
        %v2161 = vmax.f32 %v1649, 0.0
        %v2162 = vmax.f32 %v1650, 0.0
        %v2163 = vmax.f32 %v1651, 0.0
        %v2164 = vmax.f32 %v1652, 0.0
        %v2165 = vmax.f32 %v1653, 0.0
        %v2166 = vmax.f32 %v1654, 0.0
        %v2167 = vmax.f32 %v1655, 0.0
        %v2168 = vmax.f32 %v1656, 0.0
        %v2169 = vmax.f32 %v1657, 0.0
        %v2170 = vmax.f32 %v1658, 0.0
        %v2171 = vmax.f32 %v1659, 0.0
        %v2172 = vmax.f32 %v1660, 0.0
        %v2173 = vmax.f32 %v1661, 0.0
        %v2174 = vmax.f32 %v1662, 0.0
        %v2175 = vmax.f32 %v1663, 0.0
        %v2176 = vmax.f32 %v1664, 0.0
        %v2177 = vmax.f32 %v1665, 0.0
        %v2178 = vmax.f32 %v1666, 0.0
        %v2179 = vmax.f32 %v1667, 0.0
        %v2180 = vmax.f32 %v1668, 0.0
        %v2181 = vmax.f32 %v1669, 0.0
        %v2182 = vmax.f32 %v1670, 0.0
        %v2183 = vmax.f32 %v1671, 0.0
        %v2184 = vmax.f32 %v1672, 0.0
        %v2185 = vmax.f32 %v1673, 0.0
        %v2186 = vmax.f32 %v1674, 0.0
        %v2187 = vmax.f32 %v1675, 0.0
        %v2188 = vmax.f32 %v1676, 0.0
        %v2189 = vmax.f32 %v1677, 0.0
        %v2190 = vmax.f32 %v1678, 0.0
        %v2191 = vmax.f32 %v1679, 0.0
        %v2192 = vmax.f32 %v1680, 0.0
        %v2193 = vmax.f32 %v1681, 0.0
        %v2194 = vmax.f32 %v1682, 0.0
        %v2195 = vmax.f32 %v1683, 0.0
        %v2196 = vmax.f32 %v1684, 0.0
        %v2197 = vmax.f32 %v1685, 0.0
        %v2198 = vmax.f32 %v1686, 0.0
        %v2199 = vmax.f32 %v1687, 0.0
        %v2200 = vmax.f32 %v1688, 0.0
        %v2201 = vmax.f32 %v1689, 0.0
        %v2202 = vmax.f32 %v1690, 0.0
        %v2203 = vmax.f32 %v1691, 0.0
        %v2204 = vmax.f32 %v1692, 0.0
        %v2205 = vmax.f32 %v1693, 0.0
        %v2206 = vmax.f32 %v1694, 0.0
        %v2207 = vmax.f32 %v1695, 0.0
        %v2208 = vmax.f32 %v1696, 0.0
        %v2209 = vmax.f32 %v1697, 0.0
        %v2210 = vmax.f32 %v1698, 0.0
        %v2211 = vmax.f32 %v1699, 0.0
        %v2212 = vmax.f32 %v1700, 0.0
        %v2213 = vmax.f32 %v1701, 0.0
        %v2214 = vmax.f32 %v1702, 0.0
        %v2215 = vmax.f32 %v1703, 0.0
        %v2216 = vmax.f32 %v1704, 0.0
        %v2217 = vmax.f32 %v1705, 0.0
        %v2218 = vmax.f32 %v1706, 0.0
        %v2219 = vmax.f32 %v1707, 0.0
        %v2220 = vmax.f32 %v1708, 0.0
        %v2221 = vmax.f32 %v1709, 0.0
        %v2222 = vmax.f32 %v1710, 0.0
        %v2223 = vmax.f32 %v1711, 0.0
        %v2224 = vmax.f32 %v1712, 0.0
        %v2225 = vmax.f32 %v1713, 0.0
        %v2226 = vmax.f32 %v1714, 0.0
        %v2227 = vmax.f32 %v1715, 0.0
        %v2228 = vmax.f32 %v1716, 0.0
        %v2229 = vmax.f32 %v1717, 0.0
        %v2230 = vmax.f32 %v1718, 0.0
        %v2231 = vmax.f32 %v1719, 0.0
        %v2232 = vmax.f32 %v1720, 0.0
        %v2233 = vmax.f32 %v1721, 0.0
        %v2234 = vmax.f32 %v1722, 0.0
        %v2235 = vmax.f32 %v1723, 0.0
        %v2236 = vmax.f32 %v1724, 0.0
        %v2237 = vmax.f32 %v1725, 0.0
        %v2238 = vmax.f32 %v1726, 0.0
        %v2239 = vmax.f32 %v1727, 0.0
        %v2240 = vmax.f32 %v1728, 0.0
        %v2241 = vmax.f32 %v1729, 0.0
        %v2242 = vmax.f32 %v1730, 0.0
        %v2243 = vmax.f32 %v1731, 0.0
        %v2244 = vmax.f32 %v1732, 0.0
        %v2245 = vmax.f32 %v1733, 0.0
        %v2246 = vmax.f32 %v1734, 0.0
        %v2247 = vmax.f32 %v1735, 0.0
        %v2248 = vmax.f32 %v1736, 0.0
        %v2249 = vmax.f32 %v1737, 0.0
        %v2250 = vmax.f32 %v1738, 0.0
        %v2251 = vmax.f32 %v1739, 0.0
        %v2252 = vmax.f32 %v1740, 0.0
        %v2253 = vmax.f32 %v1741, 0.0
        %v2254 = vmax.f32 %v1742, 0.0
        %v2255 = vmax.f32 %v1743, 0.0
        %v2256 = vmax.f32 %v1744, 0.0
        %v2257 = vmax.f32 %v1745, 0.0
        %v2258 = vmax.f32 %v1746, 0.0
        %v2259 = vmax.f32 %v1747, 0.0
        %v2260 = vmax.f32 %v1748, 0.0
        %v2261 = vmax.f32 %v1749, 0.0
        %v2262 = vmax.f32 %v1750, 0.0
        %v2263 = vmax.f32 %v1751, 0.0
        %v2264 = vmax.f32 %v1752, 0.0
        %v2265 = vmax.f32 %v1753, 0.0
        %v2266 = vmax.f32 %v1754, 0.0
        %v2267 = vmax.f32 %v1755, 0.0
        %v2268 = vmax.f32 %v1756, 0.0
        %v2269 = vmax.f32 %v1757, 0.0
        %v2270 = vmax.f32 %v1758, 0.0
        %v2271 = vmax.f32 %v1759, 0.0
        %2272 = vst [vmem:[%s183] sm:$0xff] %v1760
        %vm2273 = vcmask 556032
        %2274 = vst.msk [vmem:[%s183 + $0x8] sm:$0xff] %vm2273, %v1761
        %2275 = vst [vmem:[%s183 + $0x10] sm:$0xff] %v1762
        %2276 = vst.msk [vmem:[%s183 + $0x18] sm:$0xff] %vm2273, %v1763
        %2277 = vst [vmem:[%s183 + $0x20] sm:$0xff] %v1764
        %2278 = vst.msk [vmem:[%s183 + $0x28] sm:$0xff] %vm2273, %v1765
        %2279 = vst [vmem:[%s183 + $0x30] sm:$0xff] %v1766
        %2280 = vst.msk [vmem:[%s183 + $0x38] sm:$0xff] %vm2273, %v1767
        %2281 = vst [vmem:[%s183 + $0x40] sm:$0xff] %v1768
        %2282 = vst.msk [vmem:[%s183 + $0x48] sm:$0xff] %vm2273, %v1769
        %2283 = vst [vmem:[%s183 + $0x50] sm:$0xff] %v1770
        %2284 = vst.msk [vmem:[%s183 + $0x58] sm:$0xff] %vm2273, %v1771
        %2285 = vst [vmem:[%s183 + $0x60] sm:$0xff] %v1772
        %2286 = vst.msk [vmem:[%s183 + $0x68] sm:$0xff] %vm2273, %v1773
        %2287 = vst [vmem:[%s183 + $0x70] sm:$0xff] %v1774
        %2288 = vst.msk [vmem:[%s183 + $0x78] sm:$0xff] %vm2273, %v1775
        %2289 = vst [vmem:[%s183 + $0x80] sm:$0xff] %v1776
        %2290 = vst.msk [vmem:[%s183 + $0x88] sm:$0xff] %vm2273, %v1777
        %2291 = vst [vmem:[%s183 + $0x90] sm:$0xff] %v1778
        %2292 = vst.msk [vmem:[%s183 + $0x98] sm:$0xff] %vm2273, %v1779
        %2293 = vst [vmem:[%s183 + $0xa0] sm:$0xff] %v1780
        %2294 = vst.msk [vmem:[%s183 + $0xa8] sm:$0xff] %vm2273, %v1781
        %2295 = vst [vmem:[%s183 + $0xb0] sm:$0xff] %v1782
        %2296 = vst.msk [vmem:[%s183 + $0xb8] sm:$0xff] %vm2273, %v1783
        %2297 = vst [vmem:[%s183 + $0xc0] sm:$0xff] %v1784
        %2298 = vst.msk [vmem:[%s183 + $0xc8] sm:$0xff] %vm2273, %v1785
        %2299 = vst [vmem:[%s183 + $0xd0] sm:$0xff] %v1786
        %2300 = vst.msk [vmem:[%s183 + $0xd8] sm:$0xff] %vm2273, %v1787
        %2301 = vst [vmem:[%s183 + $0xe0] sm:$0xff] %v1788
        %2302 = vst.msk [vmem:[%s183 + $0xe8] sm:$0xff] %vm2273, %v1789
        %2303 = vst [vmem:[%s183 + $0xf0] sm:$0xff] %v1790
        %2304 = vst.msk [vmem:[%s183 + $0xf8] sm:$0xff] %vm2273, %v1791
        %2305 = vst [vmem:[%s183 + $0x100] sm:$0xff] %v1792
        %2306 = vst.msk [vmem:[%s183 + $0x108] sm:$0xff] %vm2273, %v1793
        %2307 = vst [vmem:[%s183 + $0x110] sm:$0xff] %v1794
        %2308 = vst.msk [vmem:[%s183 + $0x118] sm:$0xff] %vm2273, %v1795
        %2309 = vst [vmem:[%s183 + $0x120] sm:$0xff] %v1796
        %2310 = vst.msk [vmem:[%s183 + $0x128] sm:$0xff] %vm2273, %v1797
        %2311 = vst [vmem:[%s183 + $0x130] sm:$0xff] %v1798
        %2312 = vst.msk [vmem:[%s183 + $0x138] sm:$0xff] %vm2273, %v1799
        %2313 = vst [vmem:[%s183 + $0x140] sm:$0xff] %v1800
        %2314 = vst.msk [vmem:[%s183 + $0x148] sm:$0xff] %vm2273, %v1801
        %2315 = vst [vmem:[%s183 + $0x150] sm:$0xff] %v1802
        %2316 = vst.msk [vmem:[%s183 + $0x158] sm:$0xff] %vm2273, %v1803
        %2317 = vst [vmem:[%s183 + $0x160] sm:$0xff] %v1804
        %2318 = vst.msk [vmem:[%s183 + $0x168] sm:$0xff] %vm2273, %v1805
        %2319 = vst [vmem:[%s183 + $0x170] sm:$0xff] %v1806
        %2320 = vst.msk [vmem:[%s183 + $0x178] sm:$0xff] %vm2273, %v1807
        %2321 = vst [vmem:[%s183 + $0x180] sm:$0xff] %v1808
        %2322 = vst.msk [vmem:[%s183 + $0x188] sm:$0xff] %vm2273, %v1809
        %2323 = vst [vmem:[%s183 + $0x190] sm:$0xff] %v1810
        %2324 = vst.msk [vmem:[%s183 + $0x198] sm:$0xff] %vm2273, %v1811
        %2325 = vst [vmem:[%s183 + $0x1a0] sm:$0xff] %v1812
        %2326 = vst.msk [vmem:[%s183 + $0x1a8] sm:$0xff] %vm2273, %v1813
        %2327 = vst [vmem:[%s183 + $0x1b0] sm:$0xff] %v1814
        %2328 = vst.msk [vmem:[%s183 + $0x1b8] sm:$0xff] %vm2273, %v1815
        %2329 = vst [vmem:[%s183 + $0x1c0] sm:$0xff] %v1816
        %2330 = vst.msk [vmem:[%s183 + $0x1c8] sm:$0xff] %vm2273, %v1817
        %2331 = vst [vmem:[%s183 + $0x1d0] sm:$0xff] %v1818
        %2332 = vst.msk [vmem:[%s183 + $0x1d8] sm:$0xff] %vm2273, %v1819
        %2333 = vst [vmem:[%s183 + $0x1e0] sm:$0xff] %v1820
        %2334 = vst.msk [vmem:[%s183 + $0x1e8] sm:$0xff] %vm2273, %v1821
        %2335 = vst [vmem:[%s183 + $0x1f0] sm:$0xff] %v1822
        %2336 = vst.msk [vmem:[%s183 + $0x1f8] sm:$0xff] %vm2273, %v1823
        %2337 = vst [vmem:[%s183 + $0x200] sm:$0xff] %v1824
        %2338 = vst.msk [vmem:[%s183 + $0x208] sm:$0xff] %vm2273, %v1825
        %2339 = vst [vmem:[%s183 + $0x210] sm:$0xff] %v1826
        %2340 = vst.msk [vmem:[%s183 + $0x218] sm:$0xff] %vm2273, %v1827
        %2341 = vst [vmem:[%s183 + $0x220] sm:$0xff] %v1828
        %2342 = vst.msk [vmem:[%s183 + $0x228] sm:$0xff] %vm2273, %v1829
        %2343 = vst [vmem:[%s183 + $0x230] sm:$0xff] %v1830
        %2344 = vst.msk [vmem:[%s183 + $0x238] sm:$0xff] %vm2273, %v1831
        %2345 = vst [vmem:[%s183 + $0x240] sm:$0xff] %v1832
        %2346 = vst.msk [vmem:[%s183 + $0x248] sm:$0xff] %vm2273, %v1833
        %2347 = vst [vmem:[%s183 + $0x250] sm:$0xff] %v1834
        %2348 = vst.msk [vmem:[%s183 + $0x258] sm:$0xff] %vm2273, %v1835
        %2349 = vst [vmem:[%s183 + $0x260] sm:$0xff] %v1836
        %2350 = vst.msk [vmem:[%s183 + $0x268] sm:$0xff] %vm2273, %v1837
        %2351 = vst [vmem:[%s183 + $0x270] sm:$0xff] %v1838
        %2352 = vst.msk [vmem:[%s183 + $0x278] sm:$0xff] %vm2273, %v1839
        %2353 = vst [vmem:[%s183 + $0x280] sm:$0xff] %v1840
        %2354 = vst.msk [vmem:[%s183 + $0x288] sm:$0xff] %vm2273, %v1841
        %2355 = vst [vmem:[%s183 + $0x290] sm:$0xff] %v1842
        %2356 = vst.msk [vmem:[%s183 + $0x298] sm:$0xff] %vm2273, %v1843
        %2357 = vst [vmem:[%s183 + $0x2a0] sm:$0xff] %v1844
        %2358 = vst.msk [vmem:[%s183 + $0x2a8] sm:$0xff] %vm2273, %v1845
        %2359 = vst [vmem:[%s183 + $0x2b0] sm:$0xff] %v1846
        %2360 = vst.msk [vmem:[%s183 + $0x2b8] sm:$0xff] %vm2273, %v1847
        %2361 = vst [vmem:[%s183 + $0x2c0] sm:$0xff] %v1848
        %2362 = vst.msk [vmem:[%s183 + $0x2c8] sm:$0xff] %vm2273, %v1849
        %2363 = vst [vmem:[%s183 + $0x2d0] sm:$0xff] %v1850
        %2364 = vst.msk [vmem:[%s183 + $0x2d8] sm:$0xff] %vm2273, %v1851
        %2365 = vst [vmem:[%s183 + $0x2e0] sm:$0xff] %v1852
        %2366 = vst.msk [vmem:[%s183 + $0x2e8] sm:$0xff] %vm2273, %v1853
        %2367 = vst [vmem:[%s183 + $0x2f0] sm:$0xff] %v1854
        %2368 = vst.msk [vmem:[%s183 + $0x2f8] sm:$0xff] %vm2273, %v1855
        %2369 = vst [vmem:[%s183 + $0x300] sm:$0xff] %v1856
        %2370 = vst.msk [vmem:[%s183 + $0x308] sm:$0xff] %vm2273, %v1857
        %2371 = vst [vmem:[%s183 + $0x310] sm:$0xff] %v1858
        %2372 = vst.msk [vmem:[%s183 + $0x318] sm:$0xff] %vm2273, %v1859
        %2373 = vst [vmem:[%s183 + $0x320] sm:$0xff] %v1860
        %2374 = vst.msk [vmem:[%s183 + $0x328] sm:$0xff] %vm2273, %v1861
        %2375 = vst [vmem:[%s183 + $0x330] sm:$0xff] %v1862
        %2376 = vst.msk [vmem:[%s183 + $0x338] sm:$0xff] %vm2273, %v1863
        %2377 = vst [vmem:[%s183 + $0x340] sm:$0xff] %v1864
        %2378 = vst.msk [vmem:[%s183 + $0x348] sm:$0xff] %vm2273, %v1865
        %2379 = vst [vmem:[%s183 + $0x350] sm:$0xff] %v1866
        %2380 = vst.msk [vmem:[%s183 + $0x358] sm:$0xff] %vm2273, %v1867
        %2381 = vst [vmem:[%s183 + $0x360] sm:$0xff] %v1868
        %2382 = vst.msk [vmem:[%s183 + $0x368] sm:$0xff] %vm2273, %v1869
        %2383 = vst [vmem:[%s183 + $0x370] sm:$0xff] %v1870
        %2384 = vst.msk [vmem:[%s183 + $0x378] sm:$0xff] %vm2273, %v1871
        %2385 = vst [vmem:[%s183 + $0x380] sm:$0xff] %v1872
        %2386 = vst.msk [vmem:[%s183 + $0x388] sm:$0xff] %vm2273, %v1873
        %2387 = vst [vmem:[%s183 + $0x390] sm:$0xff] %v1874
        %2388 = vst.msk [vmem:[%s183 + $0x398] sm:$0xff] %vm2273, %v1875
        %2389 = vst [vmem:[%s183 + $0x3a0] sm:$0xff] %v1876
        %2390 = vst.msk [vmem:[%s183 + $0x3a8] sm:$0xff] %vm2273, %v1877
        %2391 = vst [vmem:[%s183 + $0x3b0] sm:$0xff] %v1878
        %2392 = vst.msk [vmem:[%s183 + $0x3b8] sm:$0xff] %vm2273, %v1879
        %2393 = vst [vmem:[%s183 + $0x3c0] sm:$0xff] %v1880
        %2394 = vst.msk [vmem:[%s183 + $0x3c8] sm:$0xff] %vm2273, %v1881
        %2395 = vst [vmem:[%s183 + $0x3d0] sm:$0xff] %v1882
        %2396 = vst.msk [vmem:[%s183 + $0x3d8] sm:$0xff] %vm2273, %v1883
        %2397 = vst [vmem:[%s183 + $0x3e0] sm:$0xff] %v1884
        %2398 = vst.msk [vmem:[%s183 + $0x3e8] sm:$0xff] %vm2273, %v1885
        %2399 = vst [vmem:[%s183 + $0x3f0] sm:$0xff] %v1886
        %2400 = vst.msk [vmem:[%s183 + $0x3f8] sm:$0xff] %vm2273, %v1887
        %2401 = vst [vmem:[%s183 + $0x400] sm:$0xff] %v1888
        %2402 = vst.msk [vmem:[%s183 + $0x408] sm:$0xff] %vm2273, %v1889
        %2403 = vst [vmem:[%s183 + $0x410] sm:$0xff] %v1890
        %2404 = vst.msk [vmem:[%s183 + $0x418] sm:$0xff] %vm2273, %v1891
        %2405 = vst [vmem:[%s183 + $0x420] sm:$0xff] %v1892
        %2406 = vst.msk [vmem:[%s183 + $0x428] sm:$0xff] %vm2273, %v1893
        %2407 = vst [vmem:[%s183 + $0x430] sm:$0xff] %v1894
        %2408 = vst.msk [vmem:[%s183 + $0x438] sm:$0xff] %vm2273, %v1895
        %2409 = vst [vmem:[%s183 + $0x440] sm:$0xff] %v1896
        %2410 = vst.msk [vmem:[%s183 + $0x448] sm:$0xff] %vm2273, %v1897
        %2411 = vst [vmem:[%s183 + $0x450] sm:$0xff] %v1898
        %2412 = vst.msk [vmem:[%s183 + $0x458] sm:$0xff] %vm2273, %v1899
        %2413 = vst [vmem:[%s183 + $0x460] sm:$0xff] %v1900
        %2414 = vst.msk [vmem:[%s183 + $0x468] sm:$0xff] %vm2273, %v1901
        %2415 = vst [vmem:[%s183 + $0x470] sm:$0xff] %v1902
        %2416 = vst.msk [vmem:[%s183 + $0x478] sm:$0xff] %vm2273, %v1903
        %2417 = vst [vmem:[%s183 + $0x480] sm:$0xff] %v1904
        %2418 = vst.msk [vmem:[%s183 + $0x488] sm:$0xff] %vm2273, %v1905
        %2419 = vst [vmem:[%s183 + $0x490] sm:$0xff] %v1906
        %2420 = vst.msk [vmem:[%s183 + $0x498] sm:$0xff] %vm2273, %v1907
        %2421 = vst [vmem:[%s183 + $0x4a0] sm:$0xff] %v1908
        %2422 = vst.msk [vmem:[%s183 + $0x4a8] sm:$0xff] %vm2273, %v1909
        %2423 = vst [vmem:[%s183 + $0x4b0] sm:$0xff] %v1910
        %2424 = vst.msk [vmem:[%s183 + $0x4b8] sm:$0xff] %vm2273, %v1911
        %2425 = vst [vmem:[%s183 + $0x4c0] sm:$0xff] %v1912
        %2426 = vst.msk [vmem:[%s183 + $0x4c8] sm:$0xff] %vm2273, %v1913
        %2427 = vst [vmem:[%s183 + $0x4d0] sm:$0xff] %v1914
        %2428 = vst.msk [vmem:[%s183 + $0x4d8] sm:$0xff] %vm2273, %v1915
        %2429 = vst [vmem:[%s183 + $0x4e0] sm:$0xff] %v1916
        %2430 = vst.msk [vmem:[%s183 + $0x4e8] sm:$0xff] %vm2273, %v1917
        %2431 = vst [vmem:[%s183 + $0x4f0] sm:$0xff] %v1918
        %2432 = vst.msk [vmem:[%s183 + $0x4f8] sm:$0xff] %vm2273, %v1919
        %2433 = vst [vmem:[%s183 + $0x500] sm:$0xff] %v1920
        %2434 = vst.msk [vmem:[%s183 + $0x508] sm:$0xff] %vm2273, %v1921
        %2435 = vst [vmem:[%s183 + $0x510] sm:$0xff] %v1922
        %2436 = vst.msk [vmem:[%s183 + $0x518] sm:$0xff] %vm2273, %v1923
        %2437 = vst [vmem:[%s183 + $0x520] sm:$0xff] %v1924
        %2438 = vst.msk [vmem:[%s183 + $0x528] sm:$0xff] %vm2273, %v1925
        %2439 = vst [vmem:[%s183 + $0x530] sm:$0xff] %v1926
        %2440 = vst.msk [vmem:[%s183 + $0x538] sm:$0xff] %vm2273, %v1927
        %2441 = vst [vmem:[%s183 + $0x540] sm:$0xff] %v1928
        %2442 = vst.msk [vmem:[%s183 + $0x548] sm:$0xff] %vm2273, %v1929
        %2443 = vst [vmem:[%s183 + $0x550] sm:$0xff] %v1930
        %2444 = vst.msk [vmem:[%s183 + $0x558] sm:$0xff] %vm2273, %v1931
        %2445 = vst [vmem:[%s183 + $0x560] sm:$0xff] %v1932
        %2446 = vst.msk [vmem:[%s183 + $0x568] sm:$0xff] %vm2273, %v1933
        %2447 = vst [vmem:[%s183 + $0x570] sm:$0xff] %v1934
        %2448 = vst.msk [vmem:[%s183 + $0x578] sm:$0xff] %vm2273, %v1935
        %2449 = vst [vmem:[%s183 + $0x580] sm:$0xff] %v1936
        %2450 = vst.msk [vmem:[%s183 + $0x588] sm:$0xff] %vm2273, %v1937
        %2451 = vst [vmem:[%s183 + $0x590] sm:$0xff] %v1938
        %2452 = vst.msk [vmem:[%s183 + $0x598] sm:$0xff] %vm2273, %v1939
        %2453 = vst [vmem:[%s183 + $0x5a0] sm:$0xff] %v1940
        %2454 = vst.msk [vmem:[%s183 + $0x5a8] sm:$0xff] %vm2273, %v1941
        %2455 = vst [vmem:[%s183 + $0x5b0] sm:$0xff] %v1942
        %2456 = vst.msk [vmem:[%s183 + $0x5b8] sm:$0xff] %vm2273, %v1943
        %2457 = vst [vmem:[%s183 + $0x5c0] sm:$0xff] %v1944
        %2458 = vst.msk [vmem:[%s183 + $0x5c8] sm:$0xff] %vm2273, %v1945
        %2459 = vst [vmem:[%s183 + $0x5d0] sm:$0xff] %v1946
        %2460 = vst.msk [vmem:[%s183 + $0x5d8] sm:$0xff] %vm2273, %v1947
        %2461 = vst [vmem:[%s183 + $0x5e0] sm:$0xff] %v1948
        %2462 = vst.msk [vmem:[%s183 + $0x5e8] sm:$0xff] %vm2273, %v1949
        %2463 = vst [vmem:[%s183 + $0x5f0] sm:$0xff] %v1950
        %2464 = vst.msk [vmem:[%s183 + $0x5f8] sm:$0xff] %vm2273, %v1951
        %2465 = vst [vmem:[%s183 + $0x600] sm:$0xff] %v1952
        %2466 = vst.msk [vmem:[%s183 + $0x608] sm:$0xff] %vm2273, %v1953
        %2467 = vst [vmem:[%s183 + $0x610] sm:$0xff] %v1954
        %2468 = vst.msk [vmem:[%s183 + $0x618] sm:$0xff] %vm2273, %v1955
        %2469 = vst [vmem:[%s183 + $0x620] sm:$0xff] %v1956
        %2470 = vst.msk [vmem:[%s183 + $0x628] sm:$0xff] %vm2273, %v1957
        %2471 = vst [vmem:[%s183 + $0x630] sm:$0xff] %v1958
        %2472 = vst.msk [vmem:[%s183 + $0x638] sm:$0xff] %vm2273, %v1959
        %2473 = vst [vmem:[%s183 + $0x640] sm:$0xff] %v1960
        %2474 = vst.msk [vmem:[%s183 + $0x648] sm:$0xff] %vm2273, %v1961
        %2475 = vst [vmem:[%s183 + $0x650] sm:$0xff] %v1962
        %2476 = vst.msk [vmem:[%s183 + $0x658] sm:$0xff] %vm2273, %v1963
        %2477 = vst [vmem:[%s183 + $0x660] sm:$0xff] %v1964
        %2478 = vst.msk [vmem:[%s183 + $0x668] sm:$0xff] %vm2273, %v1965
        %2479 = vst [vmem:[%s183 + $0x670] sm:$0xff] %v1966
        %2480 = vst.msk [vmem:[%s183 + $0x678] sm:$0xff] %vm2273, %v1967
        %2481 = vst [vmem:[%s183 + $0x680] sm:$0xff] %v1968
        %2482 = vst.msk [vmem:[%s183 + $0x688] sm:$0xff] %vm2273, %v1969
        %2483 = vst [vmem:[%s183 + $0x690] sm:$0xff] %v1970
        %2484 = vst.msk [vmem:[%s183 + $0x698] sm:$0xff] %vm2273, %v1971
        %2485 = vst [vmem:[%s183 + $0x6a0] sm:$0xff] %v1972
        %2486 = vst.msk [vmem:[%s183 + $0x6a8] sm:$0xff] %vm2273, %v1973
        %2487 = vst [vmem:[%s183 + $0x6b0] sm:$0xff] %v1974
        %2488 = vst.msk [vmem:[%s183 + $0x6b8] sm:$0xff] %vm2273, %v1975
        %2489 = vst [vmem:[%s183 + $0x6c0] sm:$0xff] %v1976
        %2490 = vst.msk [vmem:[%s183 + $0x6c8] sm:$0xff] %vm2273, %v1977
        %2491 = vst [vmem:[%s183 + $0x6d0] sm:$0xff] %v1978
        %2492 = vst.msk [vmem:[%s183 + $0x6d8] sm:$0xff] %vm2273, %v1979
        %2493 = vst [vmem:[%s183 + $0x6e0] sm:$0xff] %v1980
        %2494 = vst.msk [vmem:[%s183 + $0x6e8] sm:$0xff] %vm2273, %v1981
        %2495 = vst [vmem:[%s183 + $0x6f0] sm:$0xff] %v1982
        %2496 = vst.msk [vmem:[%s183 + $0x6f8] sm:$0xff] %vm2273, %v1983
        %2497 = vst [vmem:[%s183 + $0x700] sm:$0xff] %v1984
        %2498 = vst.msk [vmem:[%s183 + $0x708] sm:$0xff] %vm2273, %v1985
        %2499 = vst [vmem:[%s183 + $0x710] sm:$0xff] %v1986
        %2500 = vst.msk [vmem:[%s183 + $0x718] sm:$0xff] %vm2273, %v1987
        %2501 = vst [vmem:[%s183 + $0x720] sm:$0xff] %v1988
        %2502 = vst.msk [vmem:[%s183 + $0x728] sm:$0xff] %vm2273, %v1989
        %2503 = vst [vmem:[%s183 + $0x730] sm:$0xff] %v1990
        %2504 = vst.msk [vmem:[%s183 + $0x738] sm:$0xff] %vm2273, %v1991
        %2505 = vst [vmem:[%s183 + $0x740] sm:$0xff] %v1992
        %2506 = vst.msk [vmem:[%s183 + $0x748] sm:$0xff] %vm2273, %v1993
        %2507 = vst [vmem:[%s183 + $0x750] sm:$0xff] %v1994
        %2508 = vst.msk [vmem:[%s183 + $0x758] sm:$0xff] %vm2273, %v1995
        %2509 = vst [vmem:[%s183 + $0x760] sm:$0xff] %v1996
        %2510 = vst.msk [vmem:[%s183 + $0x768] sm:$0xff] %vm2273, %v1997
        %2511 = vst [vmem:[%s183 + $0x770] sm:$0xff] %v1998
        %2512 = vst.msk [vmem:[%s183 + $0x778] sm:$0xff] %vm2273, %v1999
        %2513 = vst [vmem:[%s183 + $0x780] sm:$0xff] %v2000
        %2514 = vst.msk [vmem:[%s183 + $0x788] sm:$0xff] %vm2273, %v2001
        %2515 = vst [vmem:[%s183 + $0x790] sm:$0xff] %v2002
        %2516 = vst.msk [vmem:[%s183 + $0x798] sm:$0xff] %vm2273, %v2003
        %2517 = vst [vmem:[%s183 + $0x7a0] sm:$0xff] %v2004
        %2518 = vst.msk [vmem:[%s183 + $0x7a8] sm:$0xff] %vm2273, %v2005
        %2519 = vst [vmem:[%s183 + $0x7b0] sm:$0xff] %v2006
        %2520 = vst.msk [vmem:[%s183 + $0x7b8] sm:$0xff] %vm2273, %v2007
        %2521 = vst [vmem:[%s183 + $0x7c0] sm:$0xff] %v2008
        %2522 = vst.msk [vmem:[%s183 + $0x7c8] sm:$0xff] %vm2273, %v2009
        %2523 = vst [vmem:[%s183 + $0x7d0] sm:$0xff] %v2010
        %2524 = vst.msk [vmem:[%s183 + $0x7d8] sm:$0xff] %vm2273, %v2011
        %2525 = vst [vmem:[%s183 + $0x7e0] sm:$0xff] %v2012
        %2526 = vst.msk [vmem:[%s183 + $0x7e8] sm:$0xff] %vm2273, %v2013
        %2527 = vst [vmem:[%s183 + $0x7f0] sm:$0xff] %v2014
        %2528 = vst.msk [vmem:[%s183 + $0x7f8] sm:$0xff] %vm2273, %v2015
        %2529 = vst [vmem:[%s183 + $0x800] sm:$0xff] %v2016
        %2530 = vst.msk [vmem:[%s183 + $0x808] sm:$0xff] %vm2273, %v2017
        %2531 = vst [vmem:[%s183 + $0x810] sm:$0xff] %v2018
        %2532 = vst.msk [vmem:[%s183 + $0x818] sm:$0xff] %vm2273, %v2019
        %2533 = vst [vmem:[%s183 + $0x820] sm:$0xff] %v2020
        %2534 = vst.msk [vmem:[%s183 + $0x828] sm:$0xff] %vm2273, %v2021
        %2535 = vst [vmem:[%s183 + $0x830] sm:$0xff] %v2022
        %2536 = vst.msk [vmem:[%s183 + $0x838] sm:$0xff] %vm2273, %v2023
        %2537 = vst [vmem:[%s183 + $0x840] sm:$0xff] %v2024
        %2538 = vst.msk [vmem:[%s183 + $0x848] sm:$0xff] %vm2273, %v2025
        %2539 = vst [vmem:[%s183 + $0x850] sm:$0xff] %v2026
        %2540 = vst.msk [vmem:[%s183 + $0x858] sm:$0xff] %vm2273, %v2027
        %2541 = vst [vmem:[%s183 + $0x860] sm:$0xff] %v2028
        %2542 = vst.msk [vmem:[%s183 + $0x868] sm:$0xff] %vm2273, %v2029
        %2543 = vst [vmem:[%s183 + $0x870] sm:$0xff] %v2030
        %2544 = vst.msk [vmem:[%s183 + $0x878] sm:$0xff] %vm2273, %v2031
        %2545 = vst [vmem:[%s183 + $0x880] sm:$0xff] %v2032
        %2546 = vst.msk [vmem:[%s183 + $0x888] sm:$0xff] %vm2273, %v2033
        %2547 = vst [vmem:[%s183 + $0x890] sm:$0xff] %v2034
        %2548 = vst.msk [vmem:[%s183 + $0x898] sm:$0xff] %vm2273, %v2035
        %2549 = vst [vmem:[%s183 + $0x8a0] sm:$0xff] %v2036
        %2550 = vst.msk [vmem:[%s183 + $0x8a8] sm:$0xff] %vm2273, %v2037
        %2551 = vst [vmem:[%s183 + $0x8b0] sm:$0xff] %v2038
        %2552 = vst.msk [vmem:[%s183 + $0x8b8] sm:$0xff] %vm2273, %v2039
        %2553 = vst [vmem:[%s183 + $0x8c0] sm:$0xff] %v2040
        %2554 = vst.msk [vmem:[%s183 + $0x8c8] sm:$0xff] %vm2273, %v2041
        %2555 = vst [vmem:[%s183 + $0x8d0] sm:$0xff] %v2042
        %2556 = vst.msk [vmem:[%s183 + $0x8d8] sm:$0xff] %vm2273, %v2043
        %2557 = vst [vmem:[%s183 + $0x8e0] sm:$0xff] %v2044
        %2558 = vst.msk [vmem:[%s183 + $0x8e8] sm:$0xff] %vm2273, %v2045
        %2559 = vst [vmem:[%s183 + $0x8f0] sm:$0xff] %v2046
        %2560 = vst.msk [vmem:[%s183 + $0x8f8] sm:$0xff] %vm2273, %v2047
        %2561 = vst [vmem:[%s183 + $0x900] sm:$0xff] %v2048
        %2562 = vst.msk [vmem:[%s183 + $0x908] sm:$0xff] %vm2273, %v2049
        %2563 = vst [vmem:[%s183 + $0x910] sm:$0xff] %v2050
        %2564 = vst.msk [vmem:[%s183 + $0x918] sm:$0xff] %vm2273, %v2051
        %2565 = vst [vmem:[%s183 + $0x920] sm:$0xff] %v2052
        %2566 = vst.msk [vmem:[%s183 + $0x928] sm:$0xff] %vm2273, %v2053
        %2567 = vst [vmem:[%s183 + $0x930] sm:$0xff] %v2054
        %2568 = vst.msk [vmem:[%s183 + $0x938] sm:$0xff] %vm2273, %v2055
        %2569 = vst [vmem:[%s183 + $0x940] sm:$0xff] %v2056
        %2570 = vst.msk [vmem:[%s183 + $0x948] sm:$0xff] %vm2273, %v2057
        %2571 = vst [vmem:[%s183 + $0x950] sm:$0xff] %v2058
        %2572 = vst.msk [vmem:[%s183 + $0x958] sm:$0xff] %vm2273, %v2059
        %2573 = vst [vmem:[%s183 + $0x960] sm:$0xff] %v2060
        %2574 = vst.msk [vmem:[%s183 + $0x968] sm:$0xff] %vm2273, %v2061
        %2575 = vst [vmem:[%s183 + $0x970] sm:$0xff] %v2062
        %2576 = vst.msk [vmem:[%s183 + $0x978] sm:$0xff] %vm2273, %v2063
        %2577 = vst [vmem:[%s183 + $0x980] sm:$0xff] %v2064
        %2578 = vst.msk [vmem:[%s183 + $0x988] sm:$0xff] %vm2273, %v2065
        %2579 = vst [vmem:[%s183 + $0x990] sm:$0xff] %v2066
        %2580 = vst.msk [vmem:[%s183 + $0x998] sm:$0xff] %vm2273, %v2067
        %2581 = vst [vmem:[%s183 + $0x9a0] sm:$0xff] %v2068
        %2582 = vst.msk [vmem:[%s183 + $0x9a8] sm:$0xff] %vm2273, %v2069
        %2583 = vst [vmem:[%s183 + $0x9b0] sm:$0xff] %v2070
        %2584 = vst.msk [vmem:[%s183 + $0x9b8] sm:$0xff] %vm2273, %v2071
        %2585 = vst [vmem:[%s183 + $0x9c0] sm:$0xff] %v2072
        %2586 = vst.msk [vmem:[%s183 + $0x9c8] sm:$0xff] %vm2273, %v2073
        %2587 = vst [vmem:[%s183 + $0x9d0] sm:$0xff] %v2074
        %2588 = vst.msk [vmem:[%s183 + $0x9d8] sm:$0xff] %vm2273, %v2075
        %2589 = vst [vmem:[%s183 + $0x9e0] sm:$0xff] %v2076
        %2590 = vst.msk [vmem:[%s183 + $0x9e8] sm:$0xff] %vm2273, %v2077
        %2591 = vst [vmem:[%s183 + $0x9f0] sm:$0xff] %v2078
        %2592 = vst.msk [vmem:[%s183 + $0x9f8] sm:$0xff] %vm2273, %v2079
        %2593 = vst [vmem:[%s183 + $0xa00] sm:$0xff] %v2080
        %2594 = vst.msk [vmem:[%s183 + $0xa08] sm:$0xff] %vm2273, %v2081
        %2595 = vst [vmem:[%s183 + $0xa10] sm:$0xff] %v2082
        %2596 = vst.msk [vmem:[%s183 + $0xa18] sm:$0xff] %vm2273, %v2083
        %2597 = vst [vmem:[%s183 + $0xa20] sm:$0xff] %v2084
        %2598 = vst.msk [vmem:[%s183 + $0xa28] sm:$0xff] %vm2273, %v2085
        %2599 = vst [vmem:[%s183 + $0xa30] sm:$0xff] %v2086
        %2600 = vst.msk [vmem:[%s183 + $0xa38] sm:$0xff] %vm2273, %v2087
        %2601 = vst [vmem:[%s183 + $0xa40] sm:$0xff] %v2088
        %2602 = vst.msk [vmem:[%s183 + $0xa48] sm:$0xff] %vm2273, %v2089
        %2603 = vst [vmem:[%s183 + $0xa50] sm:$0xff] %v2090
        %2604 = vst.msk [vmem:[%s183 + $0xa58] sm:$0xff] %vm2273, %v2091
        %2605 = vst [vmem:[%s183 + $0xa60] sm:$0xff] %v2092
        %2606 = vst.msk [vmem:[%s183 + $0xa68] sm:$0xff] %vm2273, %v2093
        %2607 = vst [vmem:[%s183 + $0xa70] sm:$0xff] %v2094
        %2608 = vst.msk [vmem:[%s183 + $0xa78] sm:$0xff] %vm2273, %v2095
        %2609 = vst [vmem:[%s183 + $0xa80] sm:$0xff] %v2096
        %2610 = vst.msk [vmem:[%s183 + $0xa88] sm:$0xff] %vm2273, %v2097
        %2611 = vst [vmem:[%s183 + $0xa90] sm:$0xff] %v2098
        %2612 = vst.msk [vmem:[%s183 + $0xa98] sm:$0xff] %vm2273, %v2099
        %2613 = vst [vmem:[%s183 + $0xaa0] sm:$0xff] %v2100
        %2614 = vst.msk [vmem:[%s183 + $0xaa8] sm:$0xff] %vm2273, %v2101
        %2615 = vst [vmem:[%s183 + $0xab0] sm:$0xff] %v2102
        %2616 = vst.msk [vmem:[%s183 + $0xab8] sm:$0xff] %vm2273, %v2103
        %2617 = vst [vmem:[%s183 + $0xac0] sm:$0xff] %v2104
        %2618 = vst.msk [vmem:[%s183 + $0xac8] sm:$0xff] %vm2273, %v2105
        %2619 = vst [vmem:[%s183 + $0xad0] sm:$0xff] %v2106
        %2620 = vst.msk [vmem:[%s183 + $0xad8] sm:$0xff] %vm2273, %v2107
        %2621 = vst [vmem:[%s183 + $0xae0] sm:$0xff] %v2108
        %2622 = vst.msk [vmem:[%s183 + $0xae8] sm:$0xff] %vm2273, %v2109
        %2623 = vst [vmem:[%s183 + $0xaf0] sm:$0xff] %v2110
        %2624 = vst.msk [vmem:[%s183 + $0xaf8] sm:$0xff] %vm2273, %v2111
        %2625 = vst [vmem:[%s183 + $0xb00] sm:$0xff] %v2112
        %2626 = vst.msk [vmem:[%s183 + $0xb08] sm:$0xff] %vm2273, %v2113
        %2627 = vst [vmem:[%s183 + $0xb10] sm:$0xff] %v2114
        %2628 = vst.msk [vmem:[%s183 + $0xb18] sm:$0xff] %vm2273, %v2115
        %2629 = vst [vmem:[%s183 + $0xb20] sm:$0xff] %v2116
        %2630 = vst.msk [vmem:[%s183 + $0xb28] sm:$0xff] %vm2273, %v2117
        %2631 = vst [vmem:[%s183 + $0xb30] sm:$0xff] %v2118
        %2632 = vst.msk [vmem:[%s183 + $0xb38] sm:$0xff] %vm2273, %v2119
        %2633 = vst [vmem:[%s183 + $0xb40] sm:$0xff] %v2120
        %2634 = vst.msk [vmem:[%s183 + $0xb48] sm:$0xff] %vm2273, %v2121
        %2635 = vst [vmem:[%s183 + $0xb50] sm:$0xff] %v2122
        %2636 = vst.msk [vmem:[%s183 + $0xb58] sm:$0xff] %vm2273, %v2123
        %2637 = vst [vmem:[%s183 + $0xb60] sm:$0xff] %v2124
        %2638 = vst.msk [vmem:[%s183 + $0xb68] sm:$0xff] %vm2273, %v2125
        %2639 = vst [vmem:[%s183 + $0xb70] sm:$0xff] %v2126
        %2640 = vst.msk [vmem:[%s183 + $0xb78] sm:$0xff] %vm2273, %v2127
        %2641 = vst [vmem:[%s183 + $0xb80] sm:$0xff] %v2128
        %2642 = vst.msk [vmem:[%s183 + $0xb88] sm:$0xff] %vm2273, %v2129
        %2643 = vst [vmem:[%s183 + $0xb90] sm:$0xff] %v2130
        %2644 = vst.msk [vmem:[%s183 + $0xb98] sm:$0xff] %vm2273, %v2131
        %2645 = vst [vmem:[%s183 + $0xba0] sm:$0xff] %v2132
        %2646 = vst.msk [vmem:[%s183 + $0xba8] sm:$0xff] %vm2273, %v2133
        %2647 = vst [vmem:[%s183 + $0xbb0] sm:$0xff] %v2134
        %2648 = vst.msk [vmem:[%s183 + $0xbb8] sm:$0xff] %vm2273, %v2135
        %2649 = vst [vmem:[%s183 + $0xbc0] sm:$0xff] %v2136
        %2650 = vst.msk [vmem:[%s183 + $0xbc8] sm:$0xff] %vm2273, %v2137
        %2651 = vst [vmem:[%s183 + $0xbd0] sm:$0xff] %v2138
        %2652 = vst.msk [vmem:[%s183 + $0xbd8] sm:$0xff] %vm2273, %v2139
        %2653 = vst [vmem:[%s183 + $0xbe0] sm:$0xff] %v2140
        %2654 = vst.msk [vmem:[%s183 + $0xbe8] sm:$0xff] %vm2273, %v2141
        %2655 = vst [vmem:[%s183 + $0xbf0] sm:$0xff] %v2142
        %2656 = vst.msk [vmem:[%s183 + $0xbf8] sm:$0xff] %vm2273, %v2143
        %2657 = vst [vmem:[%s183 + $0xc00] sm:$0xff] %v2144
        %2658 = vst.msk [vmem:[%s183 + $0xc08] sm:$0xff] %vm2273, %v2145
        %2659 = vst [vmem:[%s183 + $0xc10] sm:$0xff] %v2146
        %2660 = vst.msk [vmem:[%s183 + $0xc18] sm:$0xff] %vm2273, %v2147
        %2661 = vst [vmem:[%s183 + $0xc20] sm:$0xff] %v2148
        %2662 = vst.msk [vmem:[%s183 + $0xc28] sm:$0xff] %vm2273, %v2149
        %2663 = vst [vmem:[%s183 + $0xc30] sm:$0xff] %v2150
        %2664 = vst.msk [vmem:[%s183 + $0xc38] sm:$0xff] %vm2273, %v2151
        %2665 = vst [vmem:[%s183 + $0xc40] sm:$0xff] %v2152
        %2666 = vst.msk [vmem:[%s183 + $0xc48] sm:$0xff] %vm2273, %v2153
        %2667 = vst [vmem:[%s183 + $0xc50] sm:$0xff] %v2154
        %2668 = vst.msk [vmem:[%s183 + $0xc58] sm:$0xff] %vm2273, %v2155
        %2669 = vst [vmem:[%s183 + $0xc60] sm:$0xff] %v2156
        %2670 = vst.msk [vmem:[%s183 + $0xc68] sm:$0xff] %vm2273, %v2157
        %2671 = vst [vmem:[%s183 + $0xc70] sm:$0xff] %v2158
        %2672 = vst.msk [vmem:[%s183 + $0xc78] sm:$0xff] %vm2273, %v2159
        %2673 = vst [vmem:[%s183 + $0xc80] sm:$0xff] %v2160
        %2674 = vst.msk [vmem:[%s183 + $0xc88] sm:$0xff] %vm2273, %v2161
        %2675 = vst [vmem:[%s183 + $0xc90] sm:$0xff] %v2162
        %2676 = vst.msk [vmem:[%s183 + $0xc98] sm:$0xff] %vm2273, %v2163
        %2677 = vst [vmem:[%s183 + $0xca0] sm:$0xff] %v2164
        %2678 = vst.msk [vmem:[%s183 + $0xca8] sm:$0xff] %vm2273, %v2165
        %2679 = vst [vmem:[%s183 + $0xcb0] sm:$0xff] %v2166
        %2680 = vst.msk [vmem:[%s183 + $0xcb8] sm:$0xff] %vm2273, %v2167
        %2681 = vst [vmem:[%s183 + $0xcc0] sm:$0xff] %v2168
        %2682 = vst.msk [vmem:[%s183 + $0xcc8] sm:$0xff] %vm2273, %v2169
        %2683 = vst [vmem:[%s183 + $0xcd0] sm:$0xff] %v2170
        %2684 = vst.msk [vmem:[%s183 + $0xcd8] sm:$0xff] %vm2273, %v2171
        %2685 = vst [vmem:[%s183 + $0xce0] sm:$0xff] %v2172
        %2686 = vst.msk [vmem:[%s183 + $0xce8] sm:$0xff] %vm2273, %v2173
        %2687 = vst [vmem:[%s183 + $0xcf0] sm:$0xff] %v2174
        %2688 = vst.msk [vmem:[%s183 + $0xcf8] sm:$0xff] %vm2273, %v2175
        %2689 = vst [vmem:[%s183 + $0xd00] sm:$0xff] %v2176
        %2690 = vst.msk [vmem:[%s183 + $0xd08] sm:$0xff] %vm2273, %v2177
        %2691 = vst [vmem:[%s183 + $0xd10] sm:$0xff] %v2178
        %2692 = vst.msk [vmem:[%s183 + $0xd18] sm:$0xff] %vm2273, %v2179
        %2693 = vst [vmem:[%s183 + $0xd20] sm:$0xff] %v2180
        %2694 = vst.msk [vmem:[%s183 + $0xd28] sm:$0xff] %vm2273, %v2181
        %2695 = vst [vmem:[%s183 + $0xd30] sm:$0xff] %v2182
        %2696 = vst.msk [vmem:[%s183 + $0xd38] sm:$0xff] %vm2273, %v2183
        %2697 = vst [vmem:[%s183 + $0xd40] sm:$0xff] %v2184
        %2698 = vst.msk [vmem:[%s183 + $0xd48] sm:$0xff] %vm2273, %v2185
        %2699 = vst [vmem:[%s183 + $0xd50] sm:$0xff] %v2186
        %2700 = vst.msk [vmem:[%s183 + $0xd58] sm:$0xff] %vm2273, %v2187
        %2701 = vst [vmem:[%s183 + $0xd60] sm:$0xff] %v2188
        %2702 = vst.msk [vmem:[%s183 + $0xd68] sm:$0xff] %vm2273, %v2189
        %2703 = vst [vmem:[%s183 + $0xd70] sm:$0xff] %v2190
        %2704 = vst.msk [vmem:[%s183 + $0xd78] sm:$0xff] %vm2273, %v2191
        %2705 = vst [vmem:[%s183 + $0xd80] sm:$0xff] %v2192
        %2706 = vst.msk [vmem:[%s183 + $0xd88] sm:$0xff] %vm2273, %v2193
        %2707 = vst [vmem:[%s183 + $0xd90] sm:$0xff] %v2194
        %2708 = vst.msk [vmem:[%s183 + $0xd98] sm:$0xff] %vm2273, %v2195
        %2709 = vst [vmem:[%s183 + $0xda0] sm:$0xff] %v2196
        %2710 = vst.msk [vmem:[%s183 + $0xda8] sm:$0xff] %vm2273, %v2197
        %2711 = vst [vmem:[%s183 + $0xdb0] sm:$0xff] %v2198
        %2712 = vst.msk [vmem:[%s183 + $0xdb8] sm:$0xff] %vm2273, %v2199
        %2713 = vst [vmem:[%s183 + $0xdc0] sm:$0xff] %v2200
        %2714 = vst.msk [vmem:[%s183 + $0xdc8] sm:$0xff] %vm2273, %v2201
        %2715 = vst [vmem:[%s183 + $0xdd0] sm:$0xff] %v2202
        %2716 = vst.msk [vmem:[%s183 + $0xdd8] sm:$0xff] %vm2273, %v2203
        %2717 = vst [vmem:[%s183 + $0xde0] sm:$0xff] %v2204
        %2718 = vst.msk [vmem:[%s183 + $0xde8] sm:$0xff] %vm2273, %v2205
        %2719 = vst [vmem:[%s183 + $0xdf0] sm:$0xff] %v2206
        %2720 = vst.msk [vmem:[%s183 + $0xdf8] sm:$0xff] %vm2273, %v2207
        %2721 = vst [vmem:[%s183 + $0xe00] sm:$0xff] %v2208
        %2722 = vst.msk [vmem:[%s183 + $0xe08] sm:$0xff] %vm2273, %v2209
        %2723 = vst [vmem:[%s183 + $0xe10] sm:$0xff] %v2210
        %2724 = vst.msk [vmem:[%s183 + $0xe18] sm:$0xff] %vm2273, %v2211
        %2725 = vst [vmem:[%s183 + $0xe20] sm:$0xff] %v2212
        %2726 = vst.msk [vmem:[%s183 + $0xe28] sm:$0xff] %vm2273, %v2213
        %2727 = vst [vmem:[%s183 + $0xe30] sm:$0xff] %v2214
        %2728 = vst.msk [vmem:[%s183 + $0xe38] sm:$0xff] %vm2273, %v2215
        %2729 = vst [vmem:[%s183 + $0xe40] sm:$0xff] %v2216
        %2730 = vst.msk [vmem:[%s183 + $0xe48] sm:$0xff] %vm2273, %v2217
        %2731 = vst [vmem:[%s183 + $0xe50] sm:$0xff] %v2218
        %2732 = vst.msk [vmem:[%s183 + $0xe58] sm:$0xff] %vm2273, %v2219
        %2733 = vst [vmem:[%s183 + $0xe60] sm:$0xff] %v2220
        %2734 = vst.msk [vmem:[%s183 + $0xe68] sm:$0xff] %vm2273, %v2221
        %2735 = vst [vmem:[%s183 + $0xe70] sm:$0xff] %v2222
        %2736 = vst.msk [vmem:[%s183 + $0xe78] sm:$0xff] %vm2273, %v2223
        %2737 = vst [vmem:[%s183 + $0xe80] sm:$0xff] %v2224
        %2738 = vst.msk [vmem:[%s183 + $0xe88] sm:$0xff] %vm2273, %v2225
        %2739 = vst [vmem:[%s183 + $0xe90] sm:$0xff] %v2226
        %2740 = vst.msk [vmem:[%s183 + $0xe98] sm:$0xff] %vm2273, %v2227
        %2741 = vst [vmem:[%s183 + $0xea0] sm:$0xff] %v2228
        %2742 = vst.msk [vmem:[%s183 + $0xea8] sm:$0xff] %vm2273, %v2229
        %2743 = vst [vmem:[%s183 + $0xeb0] sm:$0xff] %v2230
        %2744 = vst.msk [vmem:[%s183 + $0xeb8] sm:$0xff] %vm2273, %v2231
        %2745 = vst [vmem:[%s183 + $0xec0] sm:$0xff] %v2232
        %2746 = vst.msk [vmem:[%s183 + $0xec8] sm:$0xff] %vm2273, %v2233
        %2747 = vst [vmem:[%s183 + $0xed0] sm:$0xff] %v2234
        %2748 = vst.msk [vmem:[%s183 + $0xed8] sm:$0xff] %vm2273, %v2235
        %2749 = vst [vmem:[%s183 + $0xee0] sm:$0xff] %v2236
        %2750 = vst.msk [vmem:[%s183 + $0xee8] sm:$0xff] %vm2273, %v2237
        %2751 = vst [vmem:[%s183 + $0xef0] sm:$0xff] %v2238
        %2752 = vst.msk [vmem:[%s183 + $0xef8] sm:$0xff] %vm2273, %v2239
        %2753 = vst [vmem:[%s183 + $0xf00] sm:$0xff] %v2240
        %2754 = vst.msk [vmem:[%s183 + $0xf08] sm:$0xff] %vm2273, %v2241
        %2755 = vst [vmem:[%s183 + $0xf10] sm:$0xff] %v2242
        %2756 = vst.msk [vmem:[%s183 + $0xf18] sm:$0xff] %vm2273, %v2243
        %2757 = vst [vmem:[%s183 + $0xf20] sm:$0xff] %v2244
        %2758 = vst.msk [vmem:[%s183 + $0xf28] sm:$0xff] %vm2273, %v2245
        %2759 = vst [vmem:[%s183 + $0xf30] sm:$0xff] %v2246
        %2760 = vst.msk [vmem:[%s183 + $0xf38] sm:$0xff] %vm2273, %v2247
        %2761 = vst [vmem:[%s183 + $0xf40] sm:$0xff] %v2248
        %2762 = vst.msk [vmem:[%s183 + $0xf48] sm:$0xff] %vm2273, %v2249
        %2763 = vst [vmem:[%s183 + $0xf50] sm:$0xff] %v2250
        %2764 = vst.msk [vmem:[%s183 + $0xf58] sm:$0xff] %vm2273, %v2251
        %2765 = vst [vmem:[%s183 + $0xf60] sm:$0xff] %v2252
        %2766 = vst.msk [vmem:[%s183 + $0xf68] sm:$0xff] %vm2273, %v2253
        %2767 = vst [vmem:[%s183 + $0xf70] sm:$0xff] %v2254
        %2768 = vst.msk [vmem:[%s183 + $0xf78] sm:$0xff] %vm2273, %v2255
        %2769 = vst [vmem:[%s183 + $0xf80] sm:$0xff] %v2256
        %2770 = vst.msk [vmem:[%s183 + $0xf88] sm:$0xff] %vm2273, %v2257
        %2771 = vst [vmem:[%s183 + $0xf90] sm:$0xff] %v2258
        %2772 = vst.msk [vmem:[%s183 + $0xf98] sm:$0xff] %vm2273, %v2259
        %2773 = vst [vmem:[%s183 + $0xfa0] sm:$0xff] %v2260
        %2774 = vst.msk [vmem:[%s183 + $0xfa8] sm:$0xff] %vm2273, %v2261
        %2775 = vst [vmem:[%s183 + $0xfb0] sm:$0xff] %v2262
        %2776 = vst.msk [vmem:[%s183 + $0xfb8] sm:$0xff] %vm2273, %v2263
        %2777 = vst [vmem:[%s183 + $0xfc0] sm:$0xff] %v2264
        %2778 = vst.msk [vmem:[%s183 + $0xfc8] sm:$0xff] %vm2273, %v2265
        %2779 = vst [vmem:[%s183 + $0xfd0] sm:$0xff] %v2266
        %2780 = vst.msk [vmem:[%s183 + $0xfd8] sm:$0xff] %vm2273, %v2267
        %2781 = vst [vmem:[%s183 + $0xfe0] sm:$0xff] %v2268
        %2782 = vst.msk [vmem:[%s183 + $0xfe8] sm:$0xff] %vm2273, %v2269
        %2783 = vst [vmem:[%s183 + $0xff0] sm:$0xff] %v2270
        %2784 = vst.msk [vmem:[%s183 + $0xff8] sm:$0xff] %vm2273, %v2271
        %s2785 = sand.u32 %s73, 1
        %s2786 = sand.u32 %s73, 1
        %s2787 = smul.addr %s2786, 4096
        %s2788 = scalar_lea.vmem [#allocation2], %s2787
        // Predicated region
        $region29: #{tpu_custom_call.1} parent=27 // pred_check
          %p2789 = pneg %p83
        $region30: #{tpu_custom_call.1} parent=27 // pred_check_branch
          %2791 = sbr.rel (%p2789) target = $region32
        $region31: #{tpu_custom_call.1} parent=27 // pred_region
          %s2792 = smul.u32 256, %s13
          %s2793 = ssub.s32 363, %s2792
          %p2794 = scmp.lt.s32.totalorder %s2793, 256
          %s2795 = scalar_select %p2794, %s2793, 256
          %s2796 = smul.u32 128, %s2795
          %s2797 = smul.u32 %s2796, 2
          %p2798 = scmp.ne.s32.totalorder 0, %s2797
          %s2799 = smul.addr %s2792, 2
          %s2800 = smul.addr %s2799, 8
          %s2801 = scalar_lea.vmem %s2, %s2800
          // Predicated region
          $region33: #{tpu_custom_call.1} parent=31 // pred_check
            %p2802 = pneg %p2798
          $region34: #{tpu_custom_call.1} parent=31 // pred_check_branch
            %2804 = sbr.rel (%p2802) target = $region36
          $region35: #{tpu_custom_call.1} parent=31 // pred_region
            // Predicated region
            $region37: #{tpu_custom_call.1} parent=35 // pred_check
              _
            $region38: #{tpu_custom_call.1} parent=35 // pred_check_branch
              %2806 = sbr.rel (0) target = $region40
            $region39: #{tpu_custom_call.1} parent=35 // pred_region
              %s2807 = sshrl.u32 %s2795, 5
              // While loop
              $region41: #{tpu_custom_call.1} parent=39 // loop_pre_header
                _
              $region42: #{tpu_custom_call.1} parent=39 // loop_header
                %s2809 = sphi 0, %s2811
                %p2810 = scmp.ge.s32.totalorder %s2809, %s2807
                %s2814 = sphi 0, %s2947
                %s2815 = sphi %s2788, %s2950
                %s2816 = sphi %s2801, %s2951
              $region43: #{tpu_custom_call.1} parent=39 // loop_header_branch
                %2813 = sbr.rel (%p2810) target = $region47
              $region44: #{tpu_custom_call.1} parent=39 // loop_body
                %v2817 = vld [vmem:[%s2815] sm:$0xff]
                %2818 = vst [vmem:[%s2816] sm:$0xff] %v2817
                %v2819 = vld [vmem:[%s2815 + $0x10] sm:$0xff]
                %2820 = vst [vmem:[%s2816 + $0x10] sm:$0xff] %v2819
                %v2821 = vld [vmem:[%s2815 + $0x20] sm:$0xff]
                %2822 = vst [vmem:[%s2816 + $0x20] sm:$0xff] %v2821
                %v2823 = vld [vmem:[%s2815 + $0x30] sm:$0xff]
                %2824 = vst [vmem:[%s2816 + $0x30] sm:$0xff] %v2823
                %v2825 = vld [vmem:[%s2815 + $0x40] sm:$0xff]
                %2826 = vst [vmem:[%s2816 + $0x40] sm:$0xff] %v2825
                %v2827 = vld [vmem:[%s2815 + $0x50] sm:$0xff]
                %2828 = vst [vmem:[%s2816 + $0x50] sm:$0xff] %v2827
                %v2829 = vld [vmem:[%s2815 + $0x60] sm:$0xff]
                %2830 = vst [vmem:[%s2816 + $0x60] sm:$0xff] %v2829
                %v2831 = vld [vmem:[%s2815 + $0x70] sm:$0xff]
                %2832 = vst [vmem:[%s2816 + $0x70] sm:$0xff] %v2831
                %v2833 = vld [vmem:[%s2815 + $0x80] sm:$0xff]
                %2834 = vst [vmem:[%s2816 + $0x80] sm:$0xff] %v2833
                %v2835 = vld [vmem:[%s2815 + $0x90] sm:$0xff]
                %2836 = vst [vmem:[%s2816 + $0x90] sm:$0xff] %v2835
                %v2837 = vld [vmem:[%s2815 + $0xa0] sm:$0xff]
                %2838 = vst [vmem:[%s2816 + $0xa0] sm:$0xff] %v2837
                %v2839 = vld [vmem:[%s2815 + $0xb0] sm:$0xff]
                %2840 = vst [vmem:[%s2816 + $0xb0] sm:$0xff] %v2839
                %v2841 = vld [vmem:[%s2815 + $0xc0] sm:$0xff]
                %2842 = vst [vmem:[%s2816 + $0xc0] sm:$0xff] %v2841
                %v2843 = vld [vmem:[%s2815 + $0xd0] sm:$0xff]
                %2844 = vst [vmem:[%s2816 + $0xd0] sm:$0xff] %v2843
                %v2845 = vld [vmem:[%s2815 + $0xe0] sm:$0xff]
                %2846 = vst [vmem:[%s2816 + $0xe0] sm:$0xff] %v2845
                %v2847 = vld [vmem:[%s2815 + $0xf0] sm:$0xff]
                %2848 = vst [vmem:[%s2816 + $0xf0] sm:$0xff] %v2847
                %v2849 = vld [vmem:[%s2815 + $0x100] sm:$0xff]
                %2850 = vst [vmem:[%s2816 + $0x100] sm:$0xff] %v2849
                %v2851 = vld [vmem:[%s2815 + $0x110] sm:$0xff]
                %2852 = vst [vmem:[%s2816 + $0x110] sm:$0xff] %v2851
                %v2853 = vld [vmem:[%s2815 + $0x120] sm:$0xff]
                %2854 = vst [vmem:[%s2816 + $0x120] sm:$0xff] %v2853
                %v2855 = vld [vmem:[%s2815 + $0x130] sm:$0xff]
                %2856 = vst [vmem:[%s2816 + $0x130] sm:$0xff] %v2855
                %v2857 = vld [vmem:[%s2815 + $0x140] sm:$0xff]
                %2858 = vst [vmem:[%s2816 + $0x140] sm:$0xff] %v2857
                %v2859 = vld [vmem:[%s2815 + $0x150] sm:$0xff]
                %2860 = vst [vmem:[%s2816 + $0x150] sm:$0xff] %v2859
                %v2861 = vld [vmem:[%s2815 + $0x160] sm:$0xff]
                %2862 = vst [vmem:[%s2816 + $0x160] sm:$0xff] %v2861
                %v2863 = vld [vmem:[%s2815 + $0x170] sm:$0xff]
                %2864 = vst [vmem:[%s2816 + $0x170] sm:$0xff] %v2863
                %v2865 = vld [vmem:[%s2815 + $0x180] sm:$0xff]
                %2866 = vst [vmem:[%s2816 + $0x180] sm:$0xff] %v2865
                %v2867 = vld [vmem:[%s2815 + $0x190] sm:$0xff]
                %2868 = vst [vmem:[%s2816 + $0x190] sm:$0xff] %v2867
                %v2869 = vld [vmem:[%s2815 + $0x1a0] sm:$0xff]
                %2870 = vst [vmem:[%s2816 + $0x1a0] sm:$0xff] %v2869
                %v2871 = vld [vmem:[%s2815 + $0x1b0] sm:$0xff]
                %2872 = vst [vmem:[%s2816 + $0x1b0] sm:$0xff] %v2871
                %v2873 = vld [vmem:[%s2815 + $0x1c0] sm:$0xff]
                %2874 = vst [vmem:[%s2816 + $0x1c0] sm:$0xff] %v2873
                %v2875 = vld [vmem:[%s2815 + $0x1d0] sm:$0xff]
                %2876 = vst [vmem:[%s2816 + $0x1d0] sm:$0xff] %v2875
                %v2877 = vld [vmem:[%s2815 + $0x1e0] sm:$0xff]
                %2878 = vst [vmem:[%s2816 + $0x1e0] sm:$0xff] %v2877
                %v2879 = vld [vmem:[%s2815 + $0x1f0] sm:$0xff]
                %2880 = vst [vmem:[%s2816 + $0x1f0] sm:$0xff] %v2879
                %v2881 = vld [vmem:[%s2815 + $0x8] sm:$0xff]
                %2882 = vst [vmem:[%s2816 + $0x8] sm:$0xff] %v2881
                %v2883 = vld [vmem:[%s2815 + $0x18] sm:$0xff]
                %2884 = vst [vmem:[%s2816 + $0x18] sm:$0xff] %v2883
                %v2885 = vld [vmem:[%s2815 + $0x28] sm:$0xff]
                %2886 = vst [vmem:[%s2816 + $0x28] sm:$0xff] %v2885
                %v2887 = vld [vmem:[%s2815 + $0x38] sm:$0xff]
                %2888 = vst [vmem:[%s2816 + $0x38] sm:$0xff] %v2887
                %v2889 = vld [vmem:[%s2815 + $0x48] sm:$0xff]
                %2890 = vst [vmem:[%s2816 + $0x48] sm:$0xff] %v2889
                %v2891 = vld [vmem:[%s2815 + $0x58] sm:$0xff]
                %2892 = vst [vmem:[%s2816 + $0x58] sm:$0xff] %v2891
                %v2893 = vld [vmem:[%s2815 + $0x68] sm:$0xff]
                %2894 = vst [vmem:[%s2816 + $0x68] sm:$0xff] %v2893
                %v2895 = vld [vmem:[%s2815 + $0x78] sm:$0xff]
                %2896 = vst [vmem:[%s2816 + $0x78] sm:$0xff] %v2895
                %v2897 = vld [vmem:[%s2815 + $0x88] sm:$0xff]
                %2898 = vst [vmem:[%s2816 + $0x88] sm:$0xff] %v2897
                %v2899 = vld [vmem:[%s2815 + $0x98] sm:$0xff]
                %2900 = vst [vmem:[%s2816 + $0x98] sm:$0xff] %v2899
                %v2901 = vld [vmem:[%s2815 + $0xa8] sm:$0xff]
                %2902 = vst [vmem:[%s2816 + $0xa8] sm:$0xff] %v2901
                %v2903 = vld [vmem:[%s2815 + $0xb8] sm:$0xff]
                %2904 = vst [vmem:[%s2816 + $0xb8] sm:$0xff] %v2903
                %v2905 = vld [vmem:[%s2815 + $0xc8] sm:$0xff]
                %2906 = vst [vmem:[%s2816 + $0xc8] sm:$0xff] %v2905
                %v2907 = vld [vmem:[%s2815 + $0xd8] sm:$0xff]
                %2908 = vst [vmem:[%s2816 + $0xd8] sm:$0xff] %v2907
                %v2909 = vld [vmem:[%s2815 + $0xe8] sm:$0xff]
                %2910 = vst [vmem:[%s2816 + $0xe8] sm:$0xff] %v2909
                %v2911 = vld [vmem:[%s2815 + $0xf8] sm:$0xff]
                %2912 = vst [vmem:[%s2816 + $0xf8] sm:$0xff] %v2911
                %v2913 = vld [vmem:[%s2815 + $0x108] sm:$0xff]
                %2914 = vst [vmem:[%s2816 + $0x108] sm:$0xff] %v2913
                %v2915 = vld [vmem:[%s2815 + $0x118] sm:$0xff]
                %2916 = vst [vmem:[%s2816 + $0x118] sm:$0xff] %v2915
                %v2917 = vld [vmem:[%s2815 + $0x128] sm:$0xff]
                %2918 = vst [vmem:[%s2816 + $0x128] sm:$0xff] %v2917
                %v2919 = vld [vmem:[%s2815 + $0x138] sm:$0xff]
                %2920 = vst [vmem:[%s2816 + $0x138] sm:$0xff] %v2919
                %v2921 = vld [vmem:[%s2815 + $0x148] sm:$0xff]
                %2922 = vst [vmem:[%s2816 + $0x148] sm:$0xff] %v2921
                %v2923 = vld [vmem:[%s2815 + $0x158] sm:$0xff]
                %2924 = vst [vmem:[%s2816 + $0x158] sm:$0xff] %v2923
                %v2925 = vld [vmem:[%s2815 + $0x168] sm:$0xff]
                %2926 = vst [vmem:[%s2816 + $0x168] sm:$0xff] %v2925
                %v2927 = vld [vmem:[%s2815 + $0x178] sm:$0xff]
                %2928 = vst [vmem:[%s2816 + $0x178] sm:$0xff] %v2927
                %v2929 = vld [vmem:[%s2815 + $0x188] sm:$0xff]
                %2930 = vst [vmem:[%s2816 + $0x188] sm:$0xff] %v2929
                %v2931 = vld [vmem:[%s2815 + $0x198] sm:$0xff]
                %2932 = vst [vmem:[%s2816 + $0x198] sm:$0xff] %v2931
                %v2933 = vld [vmem:[%s2815 + $0x1a8] sm:$0xff]
                %2934 = vst [vmem:[%s2816 + $0x1a8] sm:$0xff] %v2933
                %v2935 = vld [vmem:[%s2815 + $0x1b8] sm:$0xff]
                %2936 = vst [vmem:[%s2816 + $0x1b8] sm:$0xff] %v2935
                %v2937 = vld [vmem:[%s2815 + $0x1c8] sm:$0xff]
                %2938 = vst [vmem:[%s2816 + $0x1c8] sm:$0xff] %v2937
                %v2939 = vld [vmem:[%s2815 + $0x1d8] sm:$0xff]
                %2940 = vst [vmem:[%s2816 + $0x1d8] sm:$0xff] %v2939
                %v2941 = vld [vmem:[%s2815 + $0x1e8] sm:$0xff]
                %2942 = vst [vmem:[%s2816 + $0x1e8] sm:$0xff] %v2941
                %v2943 = vld [vmem:[%s2815 + $0x1f8] sm:$0xff]
                %2944 = vst [vmem:[%s2816 + $0x1f8] sm:$0xff] %v2943
                %s2945 = sadd.s32 1, %s2814
                %p2946 = scmp.ge.s32.totalorder %s2945, %s2807
                %s2947 = scalar_select %p2946, 0, %s2945
                %s2948 = smul.u32 %s2947, 512
                %s2949 = smul.u32 %s2947, 512
                %s2950 = scalar_lea.vmem %s2788, %s2948 [#allocation2]
                %s2951 = scalar_lea.vmem %s2801, %s2949
              $region45: #{tpu_custom_call.1} parent=39 // loop_footer
                %s2811 = sadd.s32 %s2809, 1
              $region46: #{tpu_custom_call.1} parent=39 // loop_footer_branch
                %2808 = sbr.rel target = $region42
              $region47: #{tpu_custom_call.1} parent=39 // loop_exit
                _
              %s2952 = sshrl.u32 %s2795, 5
              %s2953 = sand.u32 %s2795, 31
              %s2954 = smul.u32 %s2952, 32
              %s2955 = smul.u32 16, %s2954
              %s2956 = scalar_lea.vmem %s2788, %s2955 [#allocation2]
              %s2957 = smul.u32 16, %s2954
              %s2958 = scalar_lea.vmem %s2801, %s2957
              // While loop
              $region48: #{tpu_custom_call.1} parent=39 // loop_pre_header
                _
              $region49: #{tpu_custom_call.1} parent=39 // loop_header
                %s2960 = sphi 0, %s2962
                %p2961 = scmp.ge.s32.totalorder %s2960, %s2953
                %s2965 = sphi 0, %s2974
                %s2966 = sphi %s2956, %s2977
                %s2967 = sphi %s2958, %s2978
              $region50: #{tpu_custom_call.1} parent=39 // loop_header_branch
                %2964 = sbr.rel (%p2961) target = $region54
              $region51: #{tpu_custom_call.1} parent=39 // loop_body
                %v2968 = vld [vmem:[%s2966] sm:$0xff]
                %2969 = vst [vmem:[%s2967] sm:$0xff] %v2968
                %v2970 = vld [vmem:[%s2966 + $0x8] sm:$0xff]
                %2971 = vst [vmem:[%s2967 + $0x8] sm:$0xff] %v2970
                %s2972 = sadd.s32 1, %s2965
                %p2973 = scmp.ge.s32.totalorder %s2972, %s2953
                %s2974 = scalar_select %p2973, 0, %s2972
                %s2975 = smul.u32 %s2974, 16
                %s2976 = smul.u32 %s2974, 16
                %s2977 = scalar_lea.vmem %s2956, %s2975 [#allocation2]
                %s2978 = scalar_lea.vmem %s2958, %s2976
              $region52: #{tpu_custom_call.1} parent=39 // loop_footer
                %s2962 = sadd.s32 %s2960, 1
              $region53: #{tpu_custom_call.1} parent=39 // loop_footer_branch
                %2959 = sbr.rel target = $region49
              $region54: #{tpu_custom_call.1} parent=39 // loop_exit
                _
            $region40: #{tpu_custom_call.1} parent=35 // pred_fallthru
              _
            // Predicated region
            $region55: #{tpu_custom_call.1} parent=35 // pred_check
              _
            $region56: #{tpu_custom_call.1} parent=35 // pred_check_branch
              %2980 = sbr.rel target = $region58
            $region57: #{tpu_custom_call.1} parent=35 // pred_region
              _
            $region58: #{tpu_custom_call.1} parent=35 // pred_fallthru
              _
          $region36: #{tpu_custom_call.1} parent=31 // pred_fallthru
            _
          %2981 = vnop
        $region32: #{tpu_custom_call.1} parent=27 // pred_fallthru
          _
      $region28: #{tpu_custom_call.1} parent=5 // pred_fallthru
        _
      %p2982 = scmp.le.s32.totalorder 2, %s8
      // Predicated region
      $region59: #{tpu_custom_call.1} parent=5 // pred_check
        %p2983 = pneg %p2982
      $region60: #{tpu_custom_call.1} parent=5 // pred_check_branch
        %2985 = sbr.rel (%p2983) target = $region62
      $region61: #{tpu_custom_call.1} parent=5 // pred_region
        %s2986 = ssub.s32 %s8, 2
        // Predicated region
        $region63: #{tpu_custom_call.1} parent=61 // pred_check
          %p2987 = pneg %p89
        $region64: #{tpu_custom_call.1} parent=61 // pred_check_branch
          %2989 = sbr.rel (%p2987) target = $region66
        $region65: #{tpu_custom_call.1} parent=61 // pred_region
          %s2990 = sand.u32 %s74, 1
          %s2991 = sand.u32 %s74, 1
          %s2992 = smul.addr %s2991, 4096
          %s2993 = scalar_lea.vmem [#allocation2], %s2992
        $region66: #{tpu_custom_call.1} parent=61 // pred_fallthru
          _
      $region62: #{tpu_custom_call.1} parent=5 // pred_fallthru
        _
    $region6: #{tpu_custom_call.1} parent=1 // loop_footer
      %s12 = sadd.s32 1, %s8
    $region7: #{tpu_custom_call.1} parent=1 // loop_footer_branch
      %7 = sbr.rel target = $region3
    $region8: #{tpu_custom_call.1} parent=1 // loop_exit
      _

</llo_original>
